<compile_context>
chip_gen: v6e
topology: v6e:2x2x1
jax: 0.10.0
libtpu: 0.0.40
codegen_flags: <defaults>
</compile_context>

<pallas_src>
import functools

import jax
import jax.numpy as jnp
from jax import lax
from jax.experimental import pallas as pl
from jax.experimental.pallas import tpu as pltpu

INPUT_SIZE = 57
HIDDEN1 = 64
HIDDEN2 = 64
NUM_CLASSES = 2


def _device_kind():
    try:
        return jax.devices()[0].device_kind.lower()
    except Exception:
        return ""


def _tensorcores_per_chip():
    kind = _device_kind()
    return 2 if ("v7" in kind or "7x" in kind) else 1


def _hidden_in_bf16():
    # v5e's VPU has no bf16 path: the h1/h2 recasts would add pack/unpack VALU
    # work there, so keep hidden activations in f32 on v5*. Native elsewhere.
    return "v5" not in _device_kind()


def mlp_kernel(x_ref, w1_ref, b1_ref, w2_ref, b2_ref, w3_ref, b3_ref, o_ref,
               *, chunk, hidden_bf16):
    """Fused fc1+ReLU, fc2+ReLU, fc3 over one batch tile.

    The batch tile is processed in row chunks (fully unrolled, static slice
    offsets) so per-chunk activations fit in the vreg file, while the HBM DMA
    still moves one large (tile, 57) block per grid step.  Output is written
    transposed, (NUM_CLASSES, tile), so stores are lane-dense.
    """
    tile = x_ref.shape[0]

    # Hoisted once per grid step (weights/biases are tiny).
    w1 = w1_ref[...]                                   # (57, 64) bf16
    if hidden_bf16:
        w2 = w2_ref[...]                               # (64, 64) bf16
        w3 = w3_ref[...]                               # (2, 64)  bf16 (out, in)
    else:
        w2 = w2_ref[...].astype(jnp.float32)
        w3 = w3_ref[...].astype(jnp.float32)
    b1 = b1_ref[...]                                   # (1, 64)  f32
    b2 = b2_ref[...]                                   # (1, 64)  f32
    b3 = b3_ref[...]                                   # (2, 1)   f32

    def process_rows(start, nrows):
        # f32 -> bf16 cast happens here, in VMEM/vregs (no extra HBM pass).
        x = x_ref[pl.ds(start, nrows), :].astype(jnp.bfloat16)
        h1 = jnp.maximum(
            jnp.dot(x, w1, preferred_element_type=jnp.float32) + b1, 0.0)
        if hidden_bf16:
            h1 = h1.astype(jnp.bfloat16)
        h2 = jnp.maximum(
            jnp.dot(h1, w2, preferred_element_type=jnp.float32) + b2, 0.0)
        if hidden_bf16:
            h2 = h2.astype(jnp.bfloat16)
        # (NUM_CLASSES, nrows) directly: contract the minor dims (A @ B^T form)
        # so the lane-dense transposed output needs no XLU transpose.
        out = lax.dot_general(
            w3, h2, dimension_numbers=(((1,), (1,)), ((), ())),
            preferred_element_type=jnp.float32) + b3
        o_ref[:, pl.ds(start, nrows)] = out.astype(o_ref.dtype)

    # Static Python loop == full unroll with compile-time slice offsets
    # (per-chunk live set at chunk=128 fits comfortably in the vreg file).
    n_full = tile // chunk
    for c in range(n_full):
        process_rows(c * chunk, chunk)
    rem = tile - n_full * chunk
    if rem > 0:
        process_rows(n_full * chunk, rem)


def _pick_tile(B, batch_tile, n_tc):
    # Output block is (NUM_CLASSES, tile): tile must be a multiple of 128
    # (lane dim) or equal the full batch; the x block needs a multiple of 8
    # (sublane) or the full batch.  Prefer one grid step per TensorCore
    # (v7x has 2), otherwise as few steps as possible.
    if B < 128 * n_tc:
        return B                       # single full-array block
    target = min(batch_tile, pl.cdiv(B, n_tc))
    return max(128, (target // 128) * 128)


def mlp_forward(x, params, *, batch_tile=2048, chunk=128):
    """x: (B, 57) float32. params: output of prepare_params().
    Returns (B, NUM_CLASSES) float32 logits."""
    if x.dtype != jnp.float32:
        x = x.astype(jnp.float32)
    B = x.shape[0]

    n_tc = _tensorcores_per_chip()
    hidden_bf16 = _hidden_in_bf16()

    tile = _pick_tile(B, batch_tile, n_tc)
    grid = (pl.cdiv(B, tile),)   # partial last block (if any) is masked by Pallas

    w1, w2, w3 = params["w1"], params["w2"], params["w3"]   # bf16 (cast once)
    b1, b2, b3 = params["b1"], params["b2"], params["b3"]   # f32

    full = lambda a: pl.BlockSpec(a.shape, lambda i: (0, 0))

    flops = 2 * B * (INPUT_SIZE * HIDDEN1 + HIDDEN1 * HIDDEN2
                     + HIDDEN2 * NUM_CLASSES)
    param_bytes = (2 * (INPUT_SIZE * HIDDEN1 + HIDDEN1 * HIDDEN2
                        + HIDDEN2 * NUM_CLASSES)
                   + 4 * (HIDDEN1 + HIDDEN2 + NUM_CLASSES))
    bytes_accessed = B * INPUT_SIZE * 4 + B * NUM_CLASSES * 4 + param_bytes
    cost = pl.CostEstimate(flops=flops, transcendentals=0,
                           bytes_accessed=bytes_accessed)

    kernel = functools.partial(mlp_kernel, chunk=chunk, hidden_bf16=hidden_bf16)

    out_t = pl.pallas_call(
        kernel,
        out_shape=jax.ShapeDtypeStruct((NUM_CLASSES, B), jnp.float32),
        grid_spec=pltpu.PrefetchScalarGridSpec(
            num_scalar_prefetch=0,
            grid=grid,
            in_specs=[
                pl.BlockSpec((tile, INPUT_SIZE), lambda i: (i, 0)),
                full(w1), full(b1),
                full(w2), full(b2),
                full(w3), full(b3),
            ],
            # Lane-dense output blocks: last dim is the (large) batch tile.
            out_specs=pl.BlockSpec((NUM_CLASSES, tile), lambda i: (0, i)),
        ),
        compiler_params=pltpu.CompilerParams(
            dimension_semantics=("parallel",),
        ),
        cost_estimate=cost,
    )(x, w1, b1, w2, b2, w3, b3)

    # Back to the caller-visible (B, NUM_CLASSES) layout (tiny transpose).
    return out_t.T


def init_params(key):
    """Deterministic synthetic params in PyTorch nn.Linear layout:
    weight (out_features, in_features), bias (out_features,)."""
    ks = jax.random.split(key, 6)

    def lin(kw, kb, fan_in, fan_out):
        bound = 1.0 / jnp.sqrt(fan_in)
        w = jax.random.uniform(kw, (fan_out, fan_in), jnp.float32, -bound, bound)
        b = jax.random.uniform(kb, (fan_out,), jnp.float32, -bound, bound)
        return w, b

    w1, b1 = lin(ks[0], ks[1], INPUT_SIZE, HIDDEN1)
    w2, b2 = lin(ks[2], ks[3], HIDDEN1, HIDDEN2)
    w3, b3 = lin(ks[4], ks[5], HIDDEN2, NUM_CLASSES)
    return {"fc1.weight": w1, "fc1.bias": b1,
            "fc2.weight": w2, "fc2.bias": b2,
            "fc3.weight": w3, "fc3.bias": b3}


def prepare_params(torch_params):
    """One-time conversion to kernel layout; casting here (not per forward
    call) removes the per-call XLA weight-cast ops.
      w1, w2: (in, out) bf16;  w3: (out, in) bf16 (for the A@B^T last layer)
      b1, b2: (1, out) f32;    b3: (out, 1) f32 (transposed-output bias)"""
    p = torch_params
    return {
        "w1": p["fc1.weight"].T.astype(jnp.bfloat16),
        "b1": p["fc1.bias"].reshape(1, HIDDEN1).astype(jnp.float32),
        "w2": p["fc2.weight"].T.astype(jnp.bfloat16),
        "b2": p["fc2.bias"].reshape(1, HIDDEN2).astype(jnp.float32),
        "w3": p["fc3.weight"].astype(jnp.bfloat16),
        "b3": p["fc3.bias"].reshape(NUM_CLASSES, 1).astype(jnp.float32),
    }


def reference_forward(x, p, hidden_bf16=True):
    """Pure-JAX reference emulating the kernel's numerics
    (bf16 matmul operands, f32 accumulation, optional bf16 hidden recasts)."""
    w2 = p["w2"] if hidden_bf16 else p["w2"].astype(jnp.float32)
    w3 = p["w3"] if hidden_bf16 else p["w3"].astype(jnp.float32)
    h1 = jnp.maximum(
        jnp.dot(x.astype(jnp.bfloat16), p["w1"],
                preferred_element_type=jnp.float32) + p["b1"], 0.0)
    if hidden_bf16:
        h1 = h1.astype(jnp.bfloat16)
    h2 = jnp.maximum(
        jnp.dot(h1, w2, preferred_element_type=jnp.float32) + p["b2"], 0.0)
    if hidden_bf16:
        h2 = h2.astype(jnp.bfloat16)
    out = lax.dot_general(h2, w3, dimension_numbers=(((1,), (1,)), ((), ())),
                          preferred_element_type=jnp.float32)     # (B, 2)
    return out + p["b3"].reshape(1, NUM_CLASSES)


if __name__ == "__main__":
    key = jax.random.PRNGKey(0)
    kx, kp = jax.random.split(key)

    params = prepare_params(init_params(kp))
    hidden_bf16 = _hidden_in_bf16()

    # B=2048: tuned path (single grid step on v5e/v6e, even 2-step grid on
    # v7x's two TensorCores).  B=19: small ragged batch exercising the
    # full-array-block path.
    for i, B in enumerate((2048, 19)):
        x = jax.random.normal(jax.random.fold_in(kx, i), (B, INPUT_SIZE),
                              dtype=jnp.float32)
        out = jax.block_until_ready(mlp_forward(x, params))
        ref = reference_forward(x, params, hidden_bf16)
        assert out.shape == (B, NUM_CLASSES)
        assert jnp.allclose(out, ref, atol=1e-2, rtol=1e-2), \
            f"mismatch vs JAX reference at B={B}"

    print("KERNEL_OK")
</pallas_src>

<mosaic_0001>
module attributes {stable_mosaic.version = 11 : i64} {
  func.func @mlp_kernel(%arg0: i32, %arg1: memref<2048x57xf32, #tpu.memory_space<vmem>>, %arg2: memref<57x64xbf16, #tpu.memory_space<vmem>>, %arg3: memref<1x64xf32, #tpu.memory_space<vmem>>, %arg4: memref<64x64xbf16, #tpu.memory_space<vmem>>, %arg5: memref<1x64xf32, #tpu.memory_space<vmem>>, %arg6: memref<2x64xbf16, #tpu.memory_space<vmem>>, %arg7: memref<2x1xf32, #tpu.memory_space<vmem>>, %arg8: memref<2x2048xf32, #tpu.memory_space<vmem>>) attributes {dimension_semantics = [#tpu.dimension_semantics<parallel>], iteration_bounds = array<i64: 1>, scalar_prefetch = 0 : i64, scratch_operands = 0 : i64, tpu.core_type = #tpu.core_type<tc>, window_params = [{transform_indices = @transform_0, window_bounds = array<i64: 2048, 57>}, {pipeline_mode = #tpu.pipeline_mode<synchronous>, transform_indices = @transform_1, window_bounds = array<i64: 57, 64>}, {pipeline_mode = #tpu.pipeline_mode<synchronous>, transform_indices = @transform_2, window_bounds = array<i64: 1, 64>}, {pipeline_mode = #tpu.pipeline_mode<synchronous>, transform_indices = @transform_3, window_bounds = array<i64: 64, 64>}, {pipeline_mode = #tpu.pipeline_mode<synchronous>, transform_indices = @transform_4, window_bounds = array<i64: 1, 64>}, {pipeline_mode = #tpu.pipeline_mode<synchronous>, transform_indices = @transform_5, window_bounds = array<i64: 2, 64>}, {pipeline_mode = #tpu.pipeline_mode<synchronous>, transform_indices = @transform_6, window_bounds = array<i64: 2, 1>}, {transform_indices = @transform_7, window_bounds = array<i64: 2, 2048>}]} {
    %c0 = arith.constant 0 : index
    %c0_0 = arith.constant 0 : index
    %0 = vector.load %arg2[%c0, %c0_0] : memref<57x64xbf16, #tpu.memory_space<vmem>>, vector<57x64xbf16>
    %c0_1 = arith.constant 0 : index
    %c0_2 = arith.constant 0 : index
    %1 = vector.load %arg4[%c0_1, %c0_2] : memref<64x64xbf16, #tpu.memory_space<vmem>>, vector<64x64xbf16>
    %c0_3 = arith.constant 0 : index
    %c0_4 = arith.constant 0 : index
    %2 = vector.load %arg6[%c0_3, %c0_4] : memref<2x64xbf16, #tpu.memory_space<vmem>>, vector<2x64xbf16>
    %c0_5 = arith.constant 0 : index
    %c0_6 = arith.constant 0 : index
    %3 = vector.load %arg3[%c0_5, %c0_6] : memref<1x64xf32, #tpu.memory_space<vmem>>, vector<1x64xf32>
    %c0_7 = arith.constant 0 : index
    %c0_8 = arith.constant 0 : index
    %4 = vector.load %arg5[%c0_7, %c0_8] : memref<1x64xf32, #tpu.memory_space<vmem>>, vector<1x64xf32>
    %c0_9 = arith.constant 0 : index
    %c0_10 = arith.constant 0 : index
    %5 = vector.load %arg7[%c0_9, %c0_10] : memref<2x1xf32, #tpu.memory_space<vmem>>, vector<2x1xf32>
    %c0_11 = arith.constant 0 : index
    %c0_12 = arith.constant 0 : index
    %6 = vector.load %arg1[%c0_11, %c0_12] : memref<2048x57xf32, #tpu.memory_space<vmem>>, vector<128x57xf32>
    %7 = arith.truncf %6 : vector<128x57xf32> to vector<128x57xbf16>
    %cst = arith.constant dense<0.000000e+00> : vector<128x64xf32>
    %8 = tpu.matmul %7, %0, %cst {dimension_numbers = #tpu.dot_dimension_numbers<[1], [0], [0], [1], [0, 0, 1, 1], [], []>} : vector<128x57xbf16>, vector<57x64xbf16>, vector<128x64xf32> -> vector<128x64xf32>
    %9 = vector.broadcast %3 : vector<1x64xf32> to vector<128x64xf32>
    %10 = arith.addf %8, %9 : vector<128x64xf32>
    %cst_13 = arith.constant 0.000000e+00 : f32
    %11 = vector.broadcast %cst_13 : f32 to vector<128x64xf32>
    %12 = arith.maximumf %10, %11 : vector<128x64xf32>
    %13 = arith.truncf %12 : vector<128x64xf32> to vector<128x64xbf16>
    %cst_14 = arith.constant dense<0.000000e+00> : vector<128x64xf32>
    %14 = tpu.matmul %13, %1, %cst_14 {dimension_numbers = #tpu.dot_dimension_numbers<[1], [0], [0], [1], [0, 0, 1, 1], [], []>} : vector<128x64xbf16>, vector<64x64xbf16>, vector<128x64xf32> -> vector<128x64xf32>
    %15 = vector.broadcast %4 : vector<1x64xf32> to vector<128x64xf32>
    %16 = arith.addf %14, %15 : vector<128x64xf32>
    %cst_15 = arith.constant 0.000000e+00 : f32
    %17 = vector.broadcast %cst_15 : f32 to vector<128x64xf32>
    %18 = arith.maximumf %16, %17 : vector<128x64xf32>
    %19 = arith.truncf %18 : vector<128x64xf32> to vector<128x64xbf16>
    %cst_16 = arith.constant dense<0.000000e+00> : vector<2x128xf32>
    %20 = tpu.matmul %2, %19, %cst_16 {dimension_numbers = #tpu.dot_dimension_numbers<[1], [1], [0], [0], [0, 0, 1, 0], [], []>} : vector<2x64xbf16>, vector<128x64xbf16>, vector<2x128xf32> -> vector<2x128xf32>
    %21 = vector.broadcast %5 : vector<2x1xf32> to vector<2x128xf32>
    %22 = arith.addf %20, %21 : vector<2x128xf32>
    %c0_17 = arith.constant 0 : index
    %c0_18 = arith.constant 0 : index
    %23 = vector.load %arg8[%c0_17, %c0_18] : memref<2x2048xf32, #tpu.memory_space<vmem>>, vector<2x128xf32>
    tpu.vector_store %arg8[%c0_17, %c0_18], %22 {strides = array<i32>} : memref<2x2048xf32, #tpu.memory_space<vmem>>, vector<2x128xf32>,
    %c128 = arith.constant 128 : index
    %c0_19 = arith.constant 0 : index
    %24 = vector.load %arg1[%c128, %c0_19] : memref<2048x57xf32, #tpu.memory_space<vmem>>, vector<128x57xf32>
    %25 = arith.truncf %24 : vector<128x57xf32> to vector<128x57xbf16>
    %cst_20 = arith.constant dense<0.000000e+00> : vector<128x64xf32>
    %26 = tpu.matmul %25, %0, %cst_20 {dimension_numbers = #tpu.dot_dimension_numbers<[1], [0], [0], [1], [0, 0, 1, 1], [], []>} : vector<128x57xbf16>, vector<57x64xbf16>, vector<128x64xf32> -> vector<128x64xf32>
    %27 = vector.broadcast %3 : vector<1x64xf32> to vector<128x64xf32>
    %28 = arith.addf %26, %27 : vector<128x64xf32>
    %cst_21 = arith.constant 0.000000e+00 : f32
    %29 = vector.broadcast %cst_21 : f32 to vector<128x64xf32>
    %30 = arith.maximumf %28, %29 : vector<128x64xf32>
    %31 = arith.truncf %30 : vector<128x64xf32> to vector<128x64xbf16>
    %cst_22 = arith.constant dense<0.000000e+00> : vector<128x64xf32>
    %32 = tpu.matmul %31, %1, %cst_22 {dimension_numbers = #tpu.dot_dimension_numbers<[1], [0], [0], [1], [0, 0, 1, 1], [], []>} : vector<128x64xbf16>, vector<64x64xbf16>, vector<128x64xf32> -> vector<128x64xf32>
    %33 = vector.broadcast %4 : vector<1x64xf32> to vector<128x64xf32>
    %34 = arith.addf %32, %33 : vector<128x64xf32>
    %cst_23 = arith.constant 0.000000e+00 : f32
    %35 = vector.broadcast %cst_23 : f32 to vector<128x64xf32>
    %36 = arith.maximumf %34, %35 : vector<128x64xf32>
    %37 = arith.truncf %36 : vector<128x64xf32> to vector<128x64xbf16>
    %cst_24 = arith.constant dense<0.000000e+00> : vector<2x128xf32>
    %38 = tpu.matmul %2, %37, %cst_24 {dimension_numbers = #tpu.dot_dimension_numbers<[1], [1], [0], [0], [0, 0, 1, 0], [], []>} : vector<2x64xbf16>, vector<128x64xbf16>, vector<2x128xf32> -> vector<2x128xf32>
    %39 = vector.broadcast %5 : vector<2x1xf32> to vector<2x128xf32>
    %40 = arith.addf %38, %39 : vector<2x128xf32>
    %c0_25 = arith.constant 0 : index
    %c128_26 = arith.constant 128 : index
    %41 = vector.load %arg8[%c0_25, %c128_26] : memref<2x2048xf32, #tpu.memory_space<vmem>>, vector<2x128xf32>
    tpu.vector_store %arg8[%c0_25, %c128_26], %40 {strides = array<i32>} : memref<2x2048xf32, #tpu.memory_space<vmem>>, vector<2x128xf32>,
    %c256 = arith.constant 256 : index
    %c0_27 = arith.constant 0 : index
    %42 = vector.load %arg1[%c256, %c0_27] : memref<2048x57xf32, #tpu.memory_space<vmem>>, vector<128x57xf32>
    %43 = arith.truncf %42 : vector<128x57xf32> to vector<128x57xbf16>
    %cst_28 = arith.constant dense<0.000000e+00> : vector<128x64xf32>
    %44 = tpu.matmul %43, %0, %cst_28 {dimension_numbers = #tpu.dot_dimension_numbers<[1], [0], [0], [1], [0, 0, 1, 1], [], []>} : vector<128x57xbf16>, vector<57x64xbf16>, vector<128x64xf32> -> vector<128x64xf32>
    %45 = vector.broadcast %3 : vector<1x64xf32> to vector<128x64xf32>
    %46 = arith.addf %44, %45 : vector<128x64xf32>
    %cst_29 = arith.constant 0.000000e+00 : f32
    %47 = vector.broadcast %cst_29 : f32 to vector<128x64xf32>
    %48 = arith.maximumf %46, %47 : vector<128x64xf32>
    %49 = arith.truncf %48 : vector<128x64xf32> to vector<128x64xbf16>
    %cst_30 = arith.constant dense<0.000000e+00> : vector<128x64xf32>
    %50 = tpu.matmul %49, %1, %cst_30 {dimension_numbers = #tpu.dot_dimension_numbers<[1], [0], [0], [1], [0, 0, 1, 1], [], []>} : vector<128x64xbf16>, vector<64x64xbf16>, vector<128x64xf32> -> vector<128x64xf32>
    %51 = vector.broadcast %4 : vector<1x64xf32> to vector<128x64xf32>
    %52 = arith.addf %50, %51 : vector<128x64xf32>
    %cst_31 = arith.constant 0.000000e+00 : f32
    %53 = vector.broadcast %cst_31 : f32 to vector<128x64xf32>
    %54 = arith.maximumf %52, %53 : vector<128x64xf32>
    %55 = arith.truncf %54 : vector<128x64xf32> to vector<128x64xbf16>
    %cst_32 = arith.constant dense<0.000000e+00> : vector<2x128xf32>
    %56 = tpu.matmul %2, %55, %cst_32 {dimension_numbers = #tpu.dot_dimension_numbers<[1], [1], [0], [0], [0, 0, 1, 0], [], []>} : vector<2x64xbf16>, vector<128x64xbf16>, vector<2x128xf32> -> vector<2x128xf32>
    %57 = vector.broadcast %5 : vector<2x1xf32> to vector<2x128xf32>
    %58 = arith.addf %56, %57 : vector<2x128xf32>
    %c0_33 = arith.constant 0 : index
    %c256_34 = arith.constant 256 : index
    %59 = vector.load %arg8[%c0_33, %c256_34] : memref<2x2048xf32, #tpu.memory_space<vmem>>, vector<2x128xf32>
    tpu.vector_store %arg8[%c0_33, %c256_34], %58 {strides = array<i32>} : memref<2x2048xf32, #tpu.memory_space<vmem>>, vector<2x128xf32>,
    %c384 = arith.constant 384 : index
    %c0_35 = arith.constant 0 : index
    %60 = vector.load %arg1[%c384, %c0_35] : memref<2048x57xf32, #tpu.memory_space<vmem>>, vector<128x57xf32>
    %61 = arith.truncf %60 : vector<128x57xf32> to vector<128x57xbf16>
    %cst_36 = arith.constant dense<0.000000e+00> : vector<128x64xf32>
    %62 = tpu.matmul %61, %0, %cst_36 {dimension_numbers = #tpu.dot_dimension_numbers<[1], [0], [0], [1], [0, 0, 1, 1], [], []>} : vector<128x57xbf16>, vector<57x64xbf16>, vector<128x64xf32> -> vector<128x64xf32>
    %63 = vector.broadcast %3 : vector<1x64xf32> to vector<128x64xf32>
    %64 = arith.addf %62, %63 : vector<128x64xf32>
    %cst_37 = arith.constant 0.000000e+00 : f32
    %65 = vector.broadcast %cst_37 : f32 to vector<128x64xf32>
    %66 = arith.maximumf %64, %65 : vector<128x64xf32>
    %67 = arith.truncf %66 : vector<128x64xf32> to vector<128x64xbf16>
    %cst_38 = arith.constant dense<0.000000e+00> : vector<128x64xf32>
    %68 = tpu.matmul %67, %1, %cst_38 {dimension_numbers = #tpu.dot_dimension_numbers<[1], [0], [0], [1], [0, 0, 1, 1], [], []>} : vector<128x64xbf16>, vector<64x64xbf16>, vector<128x64xf32> -> vector<128x64xf32>
    %69 = vector.broadcast %4 : vector<1x64xf32> to vector<128x64xf32>
    %70 = arith.addf %68, %69 : vector<128x64xf32>
    %cst_39 = arith.constant 0.000000e+00 : f32
    %71 = vector.broadcast %cst_39 : f32 to vector<128x64xf32>
    %72 = arith.maximumf %70, %71 : vector<128x64xf32>
    %73 = arith.truncf %72 : vector<128x64xf32> to vector<128x64xbf16>
    %cst_40 = arith.constant dense<0.000000e+00> : vector<2x128xf32>
    %74 = tpu.matmul %2, %73, %cst_40 {dimension_numbers = #tpu.dot_dimension_numbers<[1], [1], [0], [0], [0, 0, 1, 0], [], []>} : vector<2x64xbf16>, vector<128x64xbf16>, vector<2x128xf32> -> vector<2x128xf32>
    %75 = vector.broadcast %5 : vector<2x1xf32> to vector<2x128xf32>
    %76 = arith.addf %74, %75 : vector<2x128xf32>
    %c0_41 = arith.constant 0 : index
    %c384_42 = arith.constant 384 : index
    %77 = vector.load %arg8[%c0_41, %c384_42] : memref<2x2048xf32, #tpu.memory_space<vmem>>, vector<2x128xf32>
    tpu.vector_store %arg8[%c0_41, %c384_42], %76 {strides = array<i32>} : memref<2x2048xf32, #tpu.memory_space<vmem>>, vector<2x128xf32>,
    %c512 = arith.constant 512 : index
    %c0_43 = arith.constant 0 : index
    %78 = vector.load %arg1[%c512, %c0_43] : memref<2048x57xf32, #tpu.memory_space<vmem>>, vector<128x57xf32>
    %79 = arith.truncf %78 : vector<128x57xf32> to vector<128x57xbf16>
    %cst_44 = arith.constant dense<0.000000e+00> : vector<128x64xf32>
    %80 = tpu.matmul %79, %0, %cst_44 {dimension_numbers = #tpu.dot_dimension_numbers<[1], [0], [0], [1], [0, 0, 1, 1], [], []>} : vector<128x57xbf16>, vector<57x64xbf16>, vector<128x64xf32> -> vector<128x64xf32>
    %81 = vector.broadcast %3 : vector<1x64xf32> to vector<128x64xf32>
    %82 = arith.addf %80, %81 : vector<128x64xf32>
    %cst_45 = arith.constant 0.000000e+00 : f32
    %83 = vector.broadcast %cst_45 : f32 to vector<128x64xf32>
    %84 = arith.maximumf %82, %83 : vector<128x64xf32>
    %85 = arith.truncf %84 : vector<128x64xf32> to vector<128x64xbf16>
    %cst_46 = arith.constant dense<0.000000e+00> : vector<128x64xf32>
    %86 = tpu.matmul %85, %1, %cst_46 {dimension_numbers = #tpu.dot_dimension_numbers<[1], [0], [0], [1], [0, 0, 1, 1], [], []>} : vector<128x64xbf16>, vector<64x64xbf16>, vector<128x64xf32> -> vector<128x64xf32>
    %87 = vector.broadcast %4 : vector<1x64xf32> to vector<128x64xf32>
    %88 = arith.addf %86, %87 : vector<128x64xf32>
    %cst_47 = arith.constant 0.000000e+00 : f32
    %89 = vector.broadcast %cst_47 : f32 to vector<128x64xf32>
    %90 = arith.maximumf %88, %89 : vector<128x64xf32>
    %91 = arith.truncf %90 : vector<128x64xf32> to vector<128x64xbf16>
    %cst_48 = arith.constant dense<0.000000e+00> : vector<2x128xf32>
    %92 = tpu.matmul %2, %91, %cst_48 {dimension_numbers = #tpu.dot_dimension_numbers<[1], [1], [0], [0], [0, 0, 1, 0], [], []>} : vector<2x64xbf16>, vector<128x64xbf16>, vector<2x128xf32> -> vector<2x128xf32>
    %93 = vector.broadcast %5 : vector<2x1xf32> to vector<2x128xf32>
    %94 = arith.addf %92, %93 : vector<2x128xf32>
    %c0_49 = arith.constant 0 : index
    %c512_50 = arith.constant 512 : index
    %95 = vector.load %arg8[%c0_49, %c512_50] : memref<2x2048xf32, #tpu.memory_space<vmem>>, vector<2x128xf32>
    tpu.vector_store %arg8[%c0_49, %c512_50], %94 {strides = array<i32>} : memref<2x2048xf32, #tpu.memory_space<vmem>>, vector<2x128xf32>,
    %c640 = arith.constant 640 : index
    %c0_51 = arith.constant 0 : index
    %96 = vector.load %arg1[%c640, %c0_51] : memref<2048x57xf32, #tpu.memory_space<vmem>>, vector<128x57xf32>
    %97 = arith.truncf %96 : vector<128x57xf32> to vector<128x57xbf16>
    %cst_52 = arith.constant dense<0.000000e+00> : vector<128x64xf32>
    %98 = tpu.matmul %97, %0, %cst_52 {dimension_numbers = #tpu.dot_dimension_numbers<[1], [0], [0], [1], [0, 0, 1, 1], [], []>} : vector<128x57xbf16>, vector<57x64xbf16>, vector<128x64xf32> -> vector<128x64xf32>
    %99 = vector.broadcast %3 : vector<1x64xf32> to vector<128x64xf32>
    %100 = arith.addf %98, %99 : vector<128x64xf32>
    %cst_53 = arith.constant 0.000000e+00 : f32
    %101 = vector.broadcast %cst_53 : f32 to vector<128x64xf32>
    %102 = arith.maximumf %100, %101 : vector<128x64xf32>
    %103 = arith.truncf %102 : vector<128x64xf32> to vector<128x64xbf16>
    %cst_54 = arith.constant dense<0.000000e+00> : vector<128x64xf32>
    %104 = tpu.matmul %103, %1, %cst_54 {dimension_numbers = #tpu.dot_dimension_numbers<[1], [0], [0], [1], [0, 0, 1, 1], [], []>} : vector<128x64xbf16>, vector<64x64xbf16>, vector<128x64xf32> -> vector<128x64xf32>
    %105 = vector.broadcast %4 : vector<1x64xf32> to vector<128x64xf32>
    %106 = arith.addf %104, %105 : vector<128x64xf32>
    %cst_55 = arith.constant 0.000000e+00 : f32
    %107 = vector.broadcast %cst_55 : f32 to vector<128x64xf32>
    %108 = arith.maximumf %106, %107 : vector<128x64xf32>
    %109 = arith.truncf %108 : vector<128x64xf32> to vector<128x64xbf16>
    %cst_56 = arith.constant dense<0.000000e+00> : vector<2x128xf32>
    %110 = tpu.matmul %2, %109, %cst_56 {dimension_numbers = #tpu.dot_dimension_numbers<[1], [1], [0], [0], [0, 0, 1, 0], [], []>} : vector<2x64xbf16>, vector<128x64xbf16>, vector<2x128xf32> -> vector<2x128xf32>
    %111 = vector.broadcast %5 : vector<2x1xf32> to vector<2x128xf32>
    %112 = arith.addf %110, %111 : vector<2x128xf32>
    %c0_57 = arith.constant 0 : index
    %c640_58 = arith.constant 640 : index
    %113 = vector.load %arg8[%c0_57, %c640_58] : memref<2x2048xf32, #tpu.memory_space<vmem>>, vector<2x128xf32>
    tpu.vector_store %arg8[%c0_57, %c640_58], %112 {strides = array<i32>} : memref<2x2048xf32, #tpu.memory_space<vmem>>, vector<2x128xf32>,
    %c768 = arith.constant 768 : index
    %c0_59 = arith.constant 0 : index
    %114 = vector.load %arg1[%c768, %c0_59] : memref<2048x57xf32, #tpu.memory_space<vmem>>, vector<128x57xf32>
    %115 = arith.truncf %114 : vector<128x57xf32> to vector<128x57xbf16>
    %cst_60 = arith.constant dense<0.000000e+00> : vector<128x64xf32>
    %116 = tpu.matmul %115, %0, %cst_60 {dimension_numbers = #tpu.dot_dimension_numbers<[1], [0], [0], [1], [0, 0, 1, 1], [], []>} : vector<128x57xbf16>, vector<57x64xbf16>, vector<128x64xf32> -> vector<128x64xf32>
    %117 = vector.broadcast %3 : vector<1x64xf32> to vector<128x64xf32>
    %118 = arith.addf %116, %117 : vector<128x64xf32>
    %cst_61 = arith.constant 0.000000e+00 : f32
    %119 = vector.broadcast %cst_61 : f32 to vector<128x64xf32>
    %120 = arith.maximumf %118, %119 : vector<128x64xf32>
    %121 = arith.truncf %120 : vector<128x64xf32> to vector<128x64xbf16>
    %cst_62 = arith.constant dense<0.000000e+00> : vector<128x64xf32>
    %122 = tpu.matmul %121, %1, %cst_62 {dimension_numbers = #tpu.dot_dimension_numbers<[1], [0], [0], [1], [0, 0, 1, 1], [], []>} : vector<128x64xbf16>, vector<64x64xbf16>, vector<128x64xf32> -> vector<128x64xf32>
    %123 = vector.broadcast %4 : vector<1x64xf32> to vector<128x64xf32>
    %124 = arith.addf %122, %123 : vector<128x64xf32>
    %cst_63 = arith.constant 0.000000e+00 : f32
    %125 = vector.broadcast %cst_63 : f32 to vector<128x64xf32>
    %126 = arith.maximumf %124, %125 : vector<128x64xf32>
    %127 = arith.truncf %126 : vector<128x64xf32> to vector<128x64xbf16>
    %cst_64 = arith.constant dense<0.000000e+00> : vector<2x128xf32>
    %128 = tpu.matmul %2, %127, %cst_64 {dimension_numbers = #tpu.dot_dimension_numbers<[1], [1], [0], [0], [0, 0, 1, 0], [], []>} : vector<2x64xbf16>, vector<128x64xbf16>, vector<2x128xf32> -> vector<2x128xf32>
    %129 = vector.broadcast %5 : vector<2x1xf32> to vector<2x128xf32>
    %130 = arith.addf %128, %129 : vector<2x128xf32>
    %c0_65 = arith.constant 0 : index
    %c768_66 = arith.constant 768 : index
    %131 = vector.load %arg8[%c0_65, %c768_66] : memref<2x2048xf32, #tpu.memory_space<vmem>>, vector<2x128xf32>
    tpu.vector_store %arg8[%c0_65, %c768_66], %130 {strides = array<i32>} : memref<2x2048xf32, #tpu.memory_space<vmem>>, vector<2x128xf32>,
    %c896 = arith.constant 896 : index
    %c0_67 = arith.constant 0 : index
    %132 = vector.load %arg1[%c896, %c0_67] : memref<2048x57xf32, #tpu.memory_space<vmem>>, vector<128x57xf32>
    %133 = arith.truncf %132 : vector<128x57xf32> to vector<128x57xbf16>
    %cst_68 = arith.constant dense<0.000000e+00> : vector<128x64xf32>
    %134 = tpu.matmul %133, %0, %cst_68 {dimension_numbers = #tpu.dot_dimension_numbers<[1], [0], [0], [1], [0, 0, 1, 1], [], []>} : vector<128x57xbf16>, vector<57x64xbf16>, vector<128x64xf32> -> vector<128x64xf32>
    %135 = vector.broadcast %3 : vector<1x64xf32> to vector<128x64xf32>
    %136 = arith.addf %134, %135 : vector<128x64xf32>
    %cst_69 = arith.constant 0.000000e+00 : f32
    %137 = vector.broadcast %cst_69 : f32 to vector<128x64xf32>
    %138 = arith.maximumf %136, %137 : vector<128x64xf32>
    %139 = arith.truncf %138 : vector<128x64xf32> to vector<128x64xbf16>
    %cst_70 = arith.constant dense<0.000000e+00> : vector<128x64xf32>
    %140 = tpu.matmul %139, %1, %cst_70 {dimension_numbers = #tpu.dot_dimension_numbers<[1], [0], [0], [1], [0, 0, 1, 1], [], []>} : vector<128x64xbf16>, vector<64x64xbf16>, vector<128x64xf32> -> vector<128x64xf32>
    %141 = vector.broadcast %4 : vector<1x64xf32> to vector<128x64xf32>
    %142 = arith.addf %140, %141 : vector<128x64xf32>
    %cst_71 = arith.constant 0.000000e+00 : f32
    %143 = vector.broadcast %cst_71 : f32 to vector<128x64xf32>
    %144 = arith.maximumf %142, %143 : vector<128x64xf32>
    %145 = arith.truncf %144 : vector<128x64xf32> to vector<128x64xbf16>
    %cst_72 = arith.constant dense<0.000000e+00> : vector<2x128xf32>
    %146 = tpu.matmul %2, %145, %cst_72 {dimension_numbers = #tpu.dot_dimension_numbers<[1], [1], [0], [0], [0, 0, 1, 0], [], []>} : vector<2x64xbf16>, vector<128x64xbf16>, vector<2x128xf32> -> vector<2x128xf32>
    %147 = vector.broadcast %5 : vector<2x1xf32> to vector<2x128xf32>
    %148 = arith.addf %146, %147 : vector<2x128xf32>
    %c0_73 = arith.constant 0 : index
    %c896_74 = arith.constant 896 : index
    %149 = vector.load %arg8[%c0_73, %c896_74] : memref<2x2048xf32, #tpu.memory_space<vmem>>, vector<2x128xf32>
    tpu.vector_store %arg8[%c0_73, %c896_74], %148 {strides = array<i32>} : memref<2x2048xf32, #tpu.memory_space<vmem>>, vector<2x128xf32>,
    %c1024 = arith.constant 1024 : index
    %c0_75 = arith.constant 0 : index
    %150 = vector.load %arg1[%c1024, %c0_75] : memref<2048x57xf32, #tpu.memory_space<vmem>>, vector<128x57xf32>
    %151 = arith.truncf %150 : vector<128x57xf32> to vector<128x57xbf16>
    %cst_76 = arith.constant dense<0.000000e+00> : vector<128x64xf32>
    %152 = tpu.matmul %151, %0, %cst_76 {dimension_numbers = #tpu.dot_dimension_numbers<[1], [0], [0], [1], [0, 0, 1, 1], [], []>} : vector<128x57xbf16>, vector<57x64xbf16>, vector<128x64xf32> -> vector<128x64xf32>
    %153 = vector.broadcast %3 : vector<1x64xf32> to vector<128x64xf32>
    %154 = arith.addf %152, %153 : vector<128x64xf32>
    %cst_77 = arith.constant 0.000000e+00 : f32
    %155 = vector.broadcast %cst_77 : f32 to vector<128x64xf32>
    %156 = arith.maximumf %154, %155 : vector<128x64xf32>
    %157 = arith.truncf %156 : vector<128x64xf32> to vector<128x64xbf16>
    %cst_78 = arith.constant dense<0.000000e+00> : vector<128x64xf32>
    %158 = tpu.matmul %157, %1, %cst_78 {dimension_numbers = #tpu.dot_dimension_numbers<[1], [0], [0], [1], [0, 0, 1, 1], [], []>} : vector<128x64xbf16>, vector<64x64xbf16>, vector<128x64xf32> -> vector<128x64xf32>
    %159 = vector.broadcast %4 : vector<1x64xf32> to vector<128x64xf32>
    %160 = arith.addf %158, %159 : vector<128x64xf32>
    %cst_79 = arith.constant 0.000000e+00 : f32
    %161 = vector.broadcast %cst_79 : f32 to vector<128x64xf32>
    %162 = arith.maximumf %160, %161 : vector<128x64xf32>
    %163 = arith.truncf %162 : vector<128x64xf32> to vector<128x64xbf16>
    %cst_80 = arith.constant dense<0.000000e+00> : vector<2x128xf32>
    %164 = tpu.matmul %2, %163, %cst_80 {dimension_numbers = #tpu.dot_dimension_numbers<[1], [1], [0], [0], [0, 0, 1, 0], [], []>} : vector<2x64xbf16>, vector<128x64xbf16>, vector<2x128xf32> -> vector<2x128xf32>
    %165 = vector.broadcast %5 : vector<2x1xf32> to vector<2x128xf32>
    %166 = arith.addf %164, %165 : vector<2x128xf32>
    %c0_81 = arith.constant 0 : index
    %c1024_82 = arith.constant 1024 : index
    %167 = vector.load %arg8[%c0_81, %c1024_82] : memref<2x2048xf32, #tpu.memory_space<vmem>>, vector<2x128xf32>
    tpu.vector_store %arg8[%c0_81, %c1024_82], %166 {strides = array<i32>} : memref<2x2048xf32, #tpu.memory_space<vmem>>, vector<2x128xf32>,
    %c1152 = arith.constant 1152 : index
    %c0_83 = arith.constant 0 : index
    %168 = vector.load %arg1[%c1152, %c0_83] : memref<2048x57xf32, #tpu.memory_space<vmem>>, vector<128x57xf32>
    %169 = arith.truncf %168 : vector<128x57xf32> to vector<128x57xbf16>
    %cst_84 = arith.constant dense<0.000000e+00> : vector<128x64xf32>
    %170 = tpu.matmul %169, %0, %cst_84 {dimension_numbers = #tpu.dot_dimension_numbers<[1], [0], [0], [1], [0, 0, 1, 1], [], []>} : vector<128x57xbf16>, vector<57x64xbf16>, vector<128x64xf32> -> vector<128x64xf32>
    %171 = vector.broadcast %3 : vector<1x64xf32> to vector<128x64xf32>
    %172 = arith.addf %170, %171 : vector<128x64xf32>
    %cst_85 = arith.constant 0.000000e+00 : f32
    %173 = vector.broadcast %cst_85 : f32 to vector<128x64xf32>
    %174 = arith.maximumf %172, %173 : vector<128x64xf32>
    %175 = arith.truncf %174 : vector<128x64xf32> to vector<128x64xbf16>
    %cst_86 = arith.constant dense<0.000000e+00> : vector<128x64xf32>
    %176 = tpu.matmul %175, %1, %cst_86 {dimension_numbers = #tpu.dot_dimension_numbers<[1], [0], [0], [1], [0, 0, 1, 1], [], []>} : vector<128x64xbf16>, vector<64x64xbf16>, vector<128x64xf32> -> vector<128x64xf32>
    %177 = vector.broadcast %4 : vector<1x64xf32> to vector<128x64xf32>
    %178 = arith.addf %176, %177 : vector<128x64xf32>
    %cst_87 = arith.constant 0.000000e+00 : f32
    %179 = vector.broadcast %cst_87 : f32 to vector<128x64xf32>
    %180 = arith.maximumf %178, %179 : vector<128x64xf32>
    %181 = arith.truncf %180 : vector<128x64xf32> to vector<128x64xbf16>
    %cst_88 = arith.constant dense<0.000000e+00> : vector<2x128xf32>
    %182 = tpu.matmul %2, %181, %cst_88 {dimension_numbers = #tpu.dot_dimension_numbers<[1], [1], [0], [0], [0, 0, 1, 0], [], []>} : vector<2x64xbf16>, vector<128x64xbf16>, vector<2x128xf32> -> vector<2x128xf32>
    %183 = vector.broadcast %5 : vector<2x1xf32> to vector<2x128xf32>
    %184 = arith.addf %182, %183 : vector<2x128xf32>
    %c0_89 = arith.constant 0 : index
    %c1152_90 = arith.constant 1152 : index
    %185 = vector.load %arg8[%c0_89, %c1152_90] : memref<2x2048xf32, #tpu.memory_space<vmem>>, vector<2x128xf32>
    tpu.vector_store %arg8[%c0_89, %c1152_90], %184 {strides = array<i32>} : memref<2x2048xf32, #tpu.memory_space<vmem>>, vector<2x128xf32>,
    %c1280 = arith.constant 1280 : index
    %c0_91 = arith.constant 0 : index
    %186 = vector.load %arg1[%c1280, %c0_91] : memref<2048x57xf32, #tpu.memory_space<vmem>>, vector<128x57xf32>
    %187 = arith.truncf %186 : vector<128x57xf32> to vector<128x57xbf16>
    %cst_92 = arith.constant dense<0.000000e+00> : vector<128x64xf32>
    %188 = tpu.matmul %187, %0, %cst_92 {dimension_numbers = #tpu.dot_dimension_numbers<[1], [0], [0], [1], [0, 0, 1, 1], [], []>} : vector<128x57xbf16>, vector<57x64xbf16>, vector<128x64xf32> -> vector<128x64xf32>
    %189 = vector.broadcast %3 : vector<1x64xf32> to vector<128x64xf32>
    %190 = arith.addf %188, %189 : vector<128x64xf32>
    %cst_93 = arith.constant 0.000000e+00 : f32
    %191 = vector.broadcast %cst_93 : f32 to vector<128x64xf32>
    %192 = arith.maximumf %190, %191 : vector<128x64xf32>
    %193 = arith.truncf %192 : vector<128x64xf32> to vector<128x64xbf16>
    %cst_94 = arith.constant dense<0.000000e+00> : vector<128x64xf32>
    %194 = tpu.matmul %193, %1, %cst_94 {dimension_numbers = #tpu.dot_dimension_numbers<[1], [0], [0], [1], [0, 0, 1, 1], [], []>} : vector<128x64xbf16>, vector<64x64xbf16>, vector<128x64xf32> -> vector<128x64xf32>
    %195 = vector.broadcast %4 : vector<1x64xf32> to vector<128x64xf32>
    %196 = arith.addf %194, %195 : vector<128x64xf32>
    %cst_95 = arith.constant 0.000000e+00 : f32
    %197 = vector.broadcast %cst_95 : f32 to vector<128x64xf32>
    %198 = arith.maximumf %196, %197 : vector<128x64xf32>
    %199 = arith.truncf %198 : vector<128x64xf32> to vector<128x64xbf16>
    %cst_96 = arith.constant dense<0.000000e+00> : vector<2x128xf32>
    %200 = tpu.matmul %2, %199, %cst_96 {dimension_numbers = #tpu.dot_dimension_numbers<[1], [1], [0], [0], [0, 0, 1, 0], [], []>} : vector<2x64xbf16>, vector<128x64xbf16>, vector<2x128xf32> -> vector<2x128xf32>
    %201 = vector.broadcast %5 : vector<2x1xf32> to vector<2x128xf32>
    %202 = arith.addf %200, %201 : vector<2x128xf32>
    %c0_97 = arith.constant 0 : index
    %c1280_98 = arith.constant 1280 : index
    %203 = vector.load %arg8[%c0_97, %c1280_98] : memref<2x2048xf32, #tpu.memory_space<vmem>>, vector<2x128xf32>
    tpu.vector_store %arg8[%c0_97, %c1280_98], %202 {strides = array<i32>} : memref<2x2048xf32, #tpu.memory_space<vmem>>, vector<2x128xf32>,
    %c1408 = arith.constant 1408 : index
    %c0_99 = arith.constant 0 : index
    %204 = vector.load %arg1[%c1408, %c0_99] : memref<2048x57xf32, #tpu.memory_space<vmem>>, vector<128x57xf32>
    %205 = arith.truncf %204 : vector<128x57xf32> to vector<128x57xbf16>
    %cst_100 = arith.constant dense<0.000000e+00> : vector<128x64xf32>
    %206 = tpu.matmul %205, %0, %cst_100 {dimension_numbers = #tpu.dot_dimension_numbers<[1], [0], [0], [1], [0, 0, 1, 1], [], []>} : vector<128x57xbf16>, vector<57x64xbf16>, vector<128x64xf32> -> vector<128x64xf32>
    %207 = vector.broadcast %3 : vector<1x64xf32> to vector<128x64xf32>
    %208 = arith.addf %206, %207 : vector<128x64xf32>
    %cst_101 = arith.constant 0.000000e+00 : f32
    %209 = vector.broadcast %cst_101 : f32 to vector<128x64xf32>
    %210 = arith.maximumf %208, %209 : vector<128x64xf32>
    %211 = arith.truncf %210 : vector<128x64xf32> to vector<128x64xbf16>
    %cst_102 = arith.constant dense<0.000000e+00> : vector<128x64xf32>
    %212 = tpu.matmul %211, %1, %cst_102 {dimension_numbers = #tpu.dot_dimension_numbers<[1], [0], [0], [1], [0, 0, 1, 1], [], []>} : vector<128x64xbf16>, vector<64x64xbf16>, vector<128x64xf32> -> vector<128x64xf32>
    %213 = vector.broadcast %4 : vector<1x64xf32> to vector<128x64xf32>
    %214 = arith.addf %212, %213 : vector<128x64xf32>
    %cst_103 = arith.constant 0.000000e+00 : f32
    %215 = vector.broadcast %cst_103 : f32 to vector<128x64xf32>
    %216 = arith.maximumf %214, %215 : vector<128x64xf32>
    %217 = arith.truncf %216 : vector<128x64xf32> to vector<128x64xbf16>
    %cst_104 = arith.constant dense<0.000000e+00> : vector<2x128xf32>
    %218 = tpu.matmul %2, %217, %cst_104 {dimension_numbers = #tpu.dot_dimension_numbers<[1], [1], [0], [0], [0, 0, 1, 0], [], []>} : vector<2x64xbf16>, vector<128x64xbf16>, vector<2x128xf32> -> vector<2x128xf32>
    %219 = vector.broadcast %5 : vector<2x1xf32> to vector<2x128xf32>
    %220 = arith.addf %218, %219 : vector<2x128xf32>
    %c0_105 = arith.constant 0 : index
    %c1408_106 = arith.constant 1408 : index
    %221 = vector.load %arg8[%c0_105, %c1408_106] : memref<2x2048xf32, #tpu.memory_space<vmem>>, vector<2x128xf32>
    tpu.vector_store %arg8[%c0_105, %c1408_106], %220 {strides = array<i32>} : memref<2x2048xf32, #tpu.memory_space<vmem>>, vector<2x128xf32>,
    %c1536 = arith.constant 1536 : index
    %c0_107 = arith.constant 0 : index
    %222 = vector.load %arg1[%c1536, %c0_107] : memref<2048x57xf32, #tpu.memory_space<vmem>>, vector<128x57xf32>
    %223 = arith.truncf %222 : vector<128x57xf32> to vector<128x57xbf16>
    %cst_108 = arith.constant dense<0.000000e+00> : vector<128x64xf32>
    %224 = tpu.matmul %223, %0, %cst_108 {dimension_numbers = #tpu.dot_dimension_numbers<[1], [0], [0], [1], [0, 0, 1, 1], [], []>} : vector<128x57xbf16>, vector<57x64xbf16>, vector<128x64xf32> -> vector<128x64xf32>
    %225 = vector.broadcast %3 : vector<1x64xf32> to vector<128x64xf32>
    %226 = arith.addf %224, %225 : vector<128x64xf32>
    %cst_109 = arith.constant 0.000000e+00 : f32
    %227 = vector.broadcast %cst_109 : f32 to vector<128x64xf32>
    %228 = arith.maximumf %226, %227 : vector<128x64xf32>
    %229 = arith.truncf %228 : vector<128x64xf32> to vector<128x64xbf16>
    %cst_110 = arith.constant dense<0.000000e+00> : vector<128x64xf32>
    %230 = tpu.matmul %229, %1, %cst_110 {dimension_numbers = #tpu.dot_dimension_numbers<[1], [0], [0], [1], [0, 0, 1, 1], [], []>} : vector<128x64xbf16>, vector<64x64xbf16>, vector<128x64xf32> -> vector<128x64xf32>
    %231 = vector.broadcast %4 : vector<1x64xf32> to vector<128x64xf32>
    %232 = arith.addf %230, %231 : vector<128x64xf32>
    %cst_111 = arith.constant 0.000000e+00 : f32
    %233 = vector.broadcast %cst_111 : f32 to vector<128x64xf32>
    %234 = arith.maximumf %232, %233 : vector<128x64xf32>
    %235 = arith.truncf %234 : vector<128x64xf32> to vector<128x64xbf16>
    %cst_112 = arith.constant dense<0.000000e+00> : vector<2x128xf32>
    %236 = tpu.matmul %2, %235, %cst_112 {dimension_numbers = #tpu.dot_dimension_numbers<[1], [1], [0], [0], [0, 0, 1, 0], [], []>} : vector<2x64xbf16>, vector<128x64xbf16>, vector<2x128xf32> -> vector<2x128xf32>
    %237 = vector.broadcast %5 : vector<2x1xf32> to vector<2x128xf32>
    %238 = arith.addf %236, %237 : vector<2x128xf32>
    %c0_113 = arith.constant 0 : index
    %c1536_114 = arith.constant 1536 : index
    %239 = vector.load %arg8[%c0_113, %c1536_114] : memref<2x2048xf32, #tpu.memory_space<vmem>>, vector<2x128xf32>
    tpu.vector_store %arg8[%c0_113, %c1536_114], %238 {strides = array<i32>} : memref<2x2048xf32, #tpu.memory_space<vmem>>, vector<2x128xf32>,
    %c1664 = arith.constant 1664 : index
    %c0_115 = arith.constant 0 : index
    %240 = vector.load %arg1[%c1664, %c0_115] : memref<2048x57xf32, #tpu.memory_space<vmem>>, vector<128x57xf32>
    %241 = arith.truncf %240 : vector<128x57xf32> to vector<128x57xbf16>
    %cst_116 = arith.constant dense<0.000000e+00> : vector<128x64xf32>
    %242 = tpu.matmul %241, %0, %cst_116 {dimension_numbers = #tpu.dot_dimension_numbers<[1], [0], [0], [1], [0, 0, 1, 1], [], []>} : vector<128x57xbf16>, vector<57x64xbf16>, vector<128x64xf32> -> vector<128x64xf32>
    %243 = vector.broadcast %3 : vector<1x64xf32> to vector<128x64xf32>
    %244 = arith.addf %242, %243 : vector<128x64xf32>
    %cst_117 = arith.constant 0.000000e+00 : f32
    %245 = vector.broadcast %cst_117 : f32 to vector<128x64xf32>
    %246 = arith.maximumf %244, %245 : vector<128x64xf32>
    %247 = arith.truncf %246 : vector<128x64xf32> to vector<128x64xbf16>
    %cst_118 = arith.constant dense<0.000000e+00> : vector<128x64xf32>
    %248 = tpu.matmul %247, %1, %cst_118 {dimension_numbers = #tpu.dot_dimension_numbers<[1], [0], [0], [1], [0, 0, 1, 1], [], []>} : vector<128x64xbf16>, vector<64x64xbf16>, vector<128x64xf32> -> vector<128x64xf32>
    %249 = vector.broadcast %4 : vector<1x64xf32> to vector<128x64xf32>
    %250 = arith.addf %248, %249 : vector<128x64xf32>
    %cst_119 = arith.constant 0.000000e+00 : f32
    %251 = vector.broadcast %cst_119 : f32 to vector<128x64xf32>
    %252 = arith.maximumf %250, %251 : vector<128x64xf32>
    %253 = arith.truncf %252 : vector<128x64xf32> to vector<128x64xbf16>
    %cst_120 = arith.constant dense<0.000000e+00> : vector<2x128xf32>
    %254 = tpu.matmul %2, %253, %cst_120 {dimension_numbers = #tpu.dot_dimension_numbers<[1], [1], [0], [0], [0, 0, 1, 0], [], []>} : vector<2x64xbf16>, vector<128x64xbf16>, vector<2x128xf32> -> vector<2x128xf32>
    %255 = vector.broadcast %5 : vector<2x1xf32> to vector<2x128xf32>
    %256 = arith.addf %254, %255 : vector<2x128xf32>
    %c0_121 = arith.constant 0 : index
    %c1664_122 = arith.constant 1664 : index
    %257 = vector.load %arg8[%c0_121, %c1664_122] : memref<2x2048xf32, #tpu.memory_space<vmem>>, vector<2x128xf32>
    tpu.vector_store %arg8[%c0_121, %c1664_122], %256 {strides = array<i32>} : memref<2x2048xf32, #tpu.memory_space<vmem>>, vector<2x128xf32>,
    %c1792 = arith.constant 1792 : index
    %c0_123 = arith.constant 0 : index
    %258 = vector.load %arg1[%c1792, %c0_123] : memref<2048x57xf32, #tpu.memory_space<vmem>>, vector<128x57xf32>
    %259 = arith.truncf %258 : vector<128x57xf32> to vector<128x57xbf16>
    %cst_124 = arith.constant dense<0.000000e+00> : vector<128x64xf32>
    %260 = tpu.matmul %259, %0, %cst_124 {dimension_numbers = #tpu.dot_dimension_numbers<[1], [0], [0], [1], [0, 0, 1, 1], [], []>} : vector<128x57xbf16>, vector<57x64xbf16>, vector<128x64xf32> -> vector<128x64xf32>
    %261 = vector.broadcast %3 : vector<1x64xf32> to vector<128x64xf32>
    %262 = arith.addf %260, %261 : vector<128x64xf32>
    %cst_125 = arith.constant 0.000000e+00 : f32
    %263 = vector.broadcast %cst_125 : f32 to vector<128x64xf32>
    %264 = arith.maximumf %262, %263 : vector<128x64xf32>
    %265 = arith.truncf %264 : vector<128x64xf32> to vector<128x64xbf16>
    %cst_126 = arith.constant dense<0.000000e+00> : vector<128x64xf32>
    %266 = tpu.matmul %265, %1, %cst_126 {dimension_numbers = #tpu.dot_dimension_numbers<[1], [0], [0], [1], [0, 0, 1, 1], [], []>} : vector<128x64xbf16>, vector<64x64xbf16>, vector<128x64xf32> -> vector<128x64xf32>
    %267 = vector.broadcast %4 : vector<1x64xf32> to vector<128x64xf32>
    %268 = arith.addf %266, %267 : vector<128x64xf32>
    %cst_127 = arith.constant 0.000000e+00 : f32
    %269 = vector.broadcast %cst_127 : f32 to vector<128x64xf32>
    %270 = arith.maximumf %268, %269 : vector<128x64xf32>
    %271 = arith.truncf %270 : vector<128x64xf32> to vector<128x64xbf16>
    %cst_128 = arith.constant dense<0.000000e+00> : vector<2x128xf32>
    %272 = tpu.matmul %2, %271, %cst_128 {dimension_numbers = #tpu.dot_dimension_numbers<[1], [1], [0], [0], [0, 0, 1, 0], [], []>} : vector<2x64xbf16>, vector<128x64xbf16>, vector<2x128xf32> -> vector<2x128xf32>
    %273 = vector.broadcast %5 : vector<2x1xf32> to vector<2x128xf32>
    %274 = arith.addf %272, %273 : vector<2x128xf32>
    %c0_129 = arith.constant 0 : index
    %c1792_130 = arith.constant 1792 : index
    %275 = vector.load %arg8[%c0_129, %c1792_130] : memref<2x2048xf32, #tpu.memory_space<vmem>>, vector<2x128xf32>
    tpu.vector_store %arg8[%c0_129, %c1792_130], %274 {strides = array<i32>} : memref<2x2048xf32, #tpu.memory_space<vmem>>, vector<2x128xf32>,
    %c1920 = arith.constant 1920 : index
    %c0_131 = arith.constant 0 : index
    %276 = vector.load %arg1[%c1920, %c0_131] : memref<2048x57xf32, #tpu.memory_space<vmem>>, vector<128x57xf32>
    %277 = arith.truncf %276 : vector<128x57xf32> to vector<128x57xbf16>
    %cst_132 = arith.constant dense<0.000000e+00> : vector<128x64xf32>
    %278 = tpu.matmul %277, %0, %cst_132 {dimension_numbers = #tpu.dot_dimension_numbers<[1], [0], [0], [1], [0, 0, 1, 1], [], []>} : vector<128x57xbf16>, vector<57x64xbf16>, vector<128x64xf32> -> vector<128x64xf32>
    %279 = vector.broadcast %3 : vector<1x64xf32> to vector<128x64xf32>
    %280 = arith.addf %278, %279 : vector<128x64xf32>
    %cst_133 = arith.constant 0.000000e+00 : f32
    %281 = vector.broadcast %cst_133 : f32 to vector<128x64xf32>
    %282 = arith.maximumf %280, %281 : vector<128x64xf32>
    %283 = arith.truncf %282 : vector<128x64xf32> to vector<128x64xbf16>
    %cst_134 = arith.constant dense<0.000000e+00> : vector<128x64xf32>
    %284 = tpu.matmul %283, %1, %cst_134 {dimension_numbers = #tpu.dot_dimension_numbers<[1], [0], [0], [1], [0, 0, 1, 1], [], []>} : vector<128x64xbf16>, vector<64x64xbf16>, vector<128x64xf32> -> vector<128x64xf32>
    %285 = vector.broadcast %4 : vector<1x64xf32> to vector<128x64xf32>
    %286 = arith.addf %284, %285 : vector<128x64xf32>
    %cst_135 = arith.constant 0.000000e+00 : f32
    %287 = vector.broadcast %cst_135 : f32 to vector<128x64xf32>
    %288 = arith.maximumf %286, %287 : vector<128x64xf32>
    %289 = arith.truncf %288 : vector<128x64xf32> to vector<128x64xbf16>
    %cst_136 = arith.constant dense<0.000000e+00> : vector<2x128xf32>
    %290 = tpu.matmul %2, %289, %cst_136 {dimension_numbers = #tpu.dot_dimension_numbers<[1], [1], [0], [0], [0, 0, 1, 0], [], []>} : vector<2x64xbf16>, vector<128x64xbf16>, vector<2x128xf32> -> vector<2x128xf32>
    %291 = vector.broadcast %5 : vector<2x1xf32> to vector<2x128xf32>
    %292 = arith.addf %290, %291 : vector<2x128xf32>
    %c0_137 = arith.constant 0 : index
    %c1920_138 = arith.constant 1920 : index
    %293 = vector.load %arg8[%c0_137, %c1920_138] : memref<2x2048xf32, #tpu.memory_space<vmem>>, vector<2x128xf32>
    tpu.vector_store %arg8[%c0_137, %c1920_138], %292 {strides = array<i32>} : memref<2x2048xf32, #tpu.memory_space<vmem>>, vector<2x128xf32>,
    return
  }
  func.func @transform_0(%arg0: i32) -> (i32, i32) {
    %c0_i32 = arith.constant 0 : i32
    %c0_i32_0 = arith.constant 0 : i32
    return %arg0, %c0_i32 : i32, i32
  }
  func.func @transform_1(%arg0: i32) -> (i32, i32) {
    %c0_i32 = arith.constant 0 : i32
    %c0_i32_0 = arith.constant 0 : i32
    %c0_i32_1 = arith.constant 0 : i32
    return %c0_i32, %c0_i32_0 : i32, i32
  }
  func.func @transform_2(%arg0: i32) -> (i32, i32) {
    %c0_i32 = arith.constant 0 : i32
    %c0_i32_0 = arith.constant 0 : i32
    %c0_i32_1 = arith.constant 0 : i32
    return %c0_i32, %c0_i32_0 : i32, i32
  }
  func.func @transform_3(%arg0: i32) -> (i32, i32) {
    %c0_i32 = arith.constant 0 : i32
    %c0_i32_0 = arith.constant 0 : i32
    %c0_i32_1 = arith.constant 0 : i32
    return %c0_i32, %c0_i32_0 : i32, i32
  }
  func.func @transform_4(%arg0: i32) -> (i32, i32) {
    %c0_i32 = arith.constant 0 : i32
    %c0_i32_0 = arith.constant 0 : i32
    %c0_i32_1 = arith.constant 0 : i32
    return %c0_i32, %c0_i32_0 : i32, i32
  }
  func.func @transform_5(%arg0: i32) -> (i32, i32) {
    %c0_i32 = arith.constant 0 : i32
    %c0_i32_0 = arith.constant 0 : i32
    %c0_i32_1 = arith.constant 0 : i32
    return %c0_i32, %c0_i32_0 : i32, i32
  }
  func.func @transform_6(%arg0: i32) -> (i32, i32) {
    %c0_i32 = arith.constant 0 : i32
    %c0_i32_0 = arith.constant 0 : i32
    %c0_i32_1 = arith.constant 0 : i32
    return %c0_i32, %c0_i32_0 : i32, i32
  }
  func.func @transform_7(%arg0: i32) -> (i32, i32) {
    %c0_i32 = arith.constant 0 : i32
    %c0_i32_0 = arith.constant 0 : i32
    return %c0_i32, %arg0 : i32, i32
  }
}

</mosaic_0001>

<llo_original>
// kernel: tpu_custom_call.1
$region0: #{tpu_custom_call.1}
  #allocation0 [shape = 'u32[]', space=smem, size = 0x4, offset = 0x4, fixed_abs, tag = 'smem constant byte address 0x4 - core index']
  #allocation1 [shape = 'u32[144,128]{1,0:T(1,128)}', space=vmem, size = 0x12000, scoped, tag = 'internal scratch']
  %s0 = inlined_call_operand.vmem [shape: f32[2048,57], index: 0, kind: input, shape index: {}]
  %s1 = inlined_call_operand.vmem [shape: bf16[57,64], index: 1, kind: input, shape index: {}]
  %s2 = inlined_call_operand.vmem [shape: f32[1,64], index: 2, kind: input, shape index: {}]
  %s3 = inlined_call_operand.vmem [shape: bf16[64,64], index: 3, kind: input, shape index: {}]
  %s4 = inlined_call_operand.vmem [shape: f32[1,64], index: 4, kind: input, shape index: {}]
  %s5 = inlined_call_operand.vmem [shape: bf16[2,64], index: 5, kind: input, shape index: {}]
  %s6 = inlined_call_operand.vmem [shape: f32[2,1], index: 6, kind: input, shape index: {}]
  %s7 = inlined_call_operand.hbm [shape: f32[2,2048], index: 7, kind: output, shape index: {}]
  %s8 = sld [smem:[#allocation0]]
  $region38: #{tpu_custom_call.1} parent=0
    _
  %s10 = ssub.s32 1, %s8
  %s11 = scalar_select 0, %s10, %s8
  $region1: #{tpu_custom_call.1} parent=0
    #allocation2 [shape = 'u8[16384]{0}', space=vmem, size = 0x4000, scoped, tag = 'output window, operand 0, single buffered']
    #allocation3 [shape = 's32[1]{0}', space=sflag, size = 0x4, scoped, tag = 'scoped memory for tpu_custom_call.1']
    %12 = vsyncpa [#allocation3], 0
    // Predicated region
    $region2: #{tpu_custom_call.1} parent=1 // pred_check
      _
    $region3: #{tpu_custom_call.1} parent=1 // pred_check_branch
      %14 = sbr.rel (0) target = $region5
    $region4: #{tpu_custom_call.1} parent=1 // pred_region
      _
    $region5: #{tpu_custom_call.1} parent=1 // pred_fallthru
      _
    // Predicated region
    $region6: #{tpu_custom_call.1} parent=1 // pred_check
      _
    $region7: #{tpu_custom_call.1} parent=1 // pred_check_branch
      %16 = sbr.rel (0) target = $region9
    $region8: #{tpu_custom_call.1} parent=1 // pred_region
      _
    $region9: #{tpu_custom_call.1} parent=1 // pred_fallthru
      _
    // Predicated region
    $region10: #{tpu_custom_call.1} parent=1 // pred_check
      _
    $region11: #{tpu_custom_call.1} parent=1 // pred_check_branch
      %18 = sbr.rel (0) target = $region13
    $region12: #{tpu_custom_call.1} parent=1 // pred_region
      _
    $region13: #{tpu_custom_call.1} parent=1 // pred_fallthru
      _
    // Predicated region
    $region14: #{tpu_custom_call.1} parent=1 // pred_check
      _
    $region15: #{tpu_custom_call.1} parent=1 // pred_check_branch
      %20 = sbr.rel (0) target = $region17
    $region16: #{tpu_custom_call.1} parent=1 // pred_region
      _
    $region17: #{tpu_custom_call.1} parent=1 // pred_fallthru
      _
    // Predicated region
    $region18: #{tpu_custom_call.1} parent=1 // pred_check
      _
    $region19: #{tpu_custom_call.1} parent=1 // pred_check_branch
      %22 = sbr.rel (0) target = $region21
    $region20: #{tpu_custom_call.1} parent=1 // pred_region
      _
    $region21: #{tpu_custom_call.1} parent=1 // pred_fallthru
      _
    // Predicated region
    $region22: #{tpu_custom_call.1} parent=1 // pred_check
      _
    $region23: #{tpu_custom_call.1} parent=1 // pred_check_branch
      %24 = sbr.rel (0) target = $region25
    $region24: #{tpu_custom_call.1} parent=1 // pred_region
      _
    $region25: #{tpu_custom_call.1} parent=1 // pred_fallthru
      _
    // Predicated region
    $region26: #{tpu_custom_call.1} parent=1 // pred_check
      _
    $region27: #{tpu_custom_call.1} parent=1 // pred_check_branch
      %26 = sbr.rel (0) target = $region29
    $region28: #{tpu_custom_call.1} parent=1 // pred_region
      _
    $region29: #{tpu_custom_call.1} parent=1 // pred_fallthru
      _
    %v28 = vld [vmem:[%s1] sm:$0xf]
    %v29 = vld [vmem:[%s1 + $0x4] sm:$0xf]
    %v30 = vld [vmem:[%s1 + $0x8] sm:$0xf]
    %v31 = vld [vmem:[%s1 + $0xc] sm:$0xf]
    %v32 = vld [vmem:[%s1 + $0x10] sm:$0xf]
    %v33 = vld [vmem:[%s1 + $0x14] sm:$0xf]
    %v34 = vld [vmem:[%s1 + $0x18] sm:$0xf]
    %v35 = vld [vmem:[%s1 + $0x1c] sm:$0x1]
    %v36 = vld [vmem:[%s3] sm:$0xf]
    %v37 = vld [vmem:[%s3 + $0x4] sm:$0xf]
    %v38 = vld [vmem:[%s3 + $0x8] sm:$0xf]
    %v39 = vld [vmem:[%s3 + $0xc] sm:$0xf]
    %v40 = vld [vmem:[%s3 + $0x10] sm:$0xf]
    %v41 = vld [vmem:[%s3 + $0x14] sm:$0xf]
    %v42 = vld [vmem:[%s3 + $0x18] sm:$0xf]
    %v43 = vld [vmem:[%s3 + $0x1c] sm:$0xf]
    %v44 = vld [vmem:[%s5] sm:$0x1]
    %v45 = vld [vmem:[%s2] sm:$0x1]
    %v46 = vld [vmem:[%s4] sm:$0x1]
    %v47 = vld [vmem:[%s6] sm:$0x3]
    %v48 = vld [vmem:[%s0] sm:$0xff]
    %v49 = vld [vmem:[%s0 + $0x8] sm:$0xff]
    %v50 = vld [vmem:[%s0 + $0x10] sm:$0xff]
    %v51 = vld [vmem:[%s0 + $0x18] sm:$0xff]
    %v52 = vld [vmem:[%s0 + $0x20] sm:$0xff]
    %v53 = vld [vmem:[%s0 + $0x28] sm:$0xff]
    %v54 = vld [vmem:[%s0 + $0x30] sm:$0xff]
    %v55 = vld [vmem:[%s0 + $0x38] sm:$0xff]
    %v56 = vld [vmem:[%s0 + $0x40] sm:$0xff]
    %v57 = vld [vmem:[%s0 + $0x48] sm:$0xff]
    %v58 = vld [vmem:[%s0 + $0x50] sm:$0xff]
    %v59 = vld [vmem:[%s0 + $0x58] sm:$0xff]
    %v60 = vld [vmem:[%s0 + $0x60] sm:$0xff]
    %v61 = vld [vmem:[%s0 + $0x68] sm:$0xff]
    %v62 = vld [vmem:[%s0 + $0x70] sm:$0xff]
    %v63 = vld [vmem:[%s0 + $0x78] sm:$0xff]
    %v64 = vpack.c.bf16 %v49, %v48
    %v65 = vpack.c.bf16 %v51, %v50
    %v66 = vpack.c.bf16 %v53, %v52
    %v67 = vpack.c.bf16 %v55, %v54
    %v68 = vpack.c.bf16 %v57, %v56
    %v69 = vpack.c.bf16 %v59, %v58
    %v70 = vpack.c.bf16 %v61, %v60
    %v71 = vpack.c.bf16 %v63, %v62
    %v73 = vlaneseq
    %v74 = vshrl.u32 %v73, 7
    %v75 = vsub.s32 0, %v74
    %v76 = vrot.slane %v45, %v75
    %v86 = vunpack.c.l.b16 %v28
    %v87 = vunpack.c.l.b16 %v29
    %v88 = vunpack.c.l.b16 %v30
    %v89 = vunpack.c.l.b16 %v31
    %v90 = vunpack.c.l.b16 %v32
    %v91 = vunpack.c.l.b16 %v33
    %v92 = vunpack.c.l.b16 %v34
    %v93 = vunpack.c.l.b16 %v35
    %v94 = vpack.c.b16 %v87, %v86
    %v95 = vpack.c.b16 %v89, %v88
    %v96 = vpack.c.b16 %v91, %v90
    %v97 = vpack.c.b16 %v93, %v92
    %vm101 = vcmask 465920
    %v103 = vsel %vm101, %v64, 0
    %v106 = vsel %vm101, %v65, 0
    %v109 = vsel %vm101, %v66, 0
    %v112 = vsel %vm101, %v67, 0
    %v115 = vsel %vm101, %v68, 0
    %v118 = vsel %vm101, %v69, 0
    %v121 = vsel %vm101, %v70, 0
    %v124 = vsel %vm101, %v71, 0
    %vm126 = vcmask 1043456
    %vm127 = vcmask 1044480
    %v128 = vsel %vm126, 4294967295, 65535
    %v129 = vsel %vm127, %v128, 0
    %v131 = vand.u32 %v97, %v129
    %133 = vmatprep.subr.bf16.mxu0 0
    %134 = vmatpush1.bf16.msra.mxu0 0
    %135 = vmatprep.subr.bf16.mxu0 0
    %136 = vmatpush1.bf16.msra.mxu0 0
    %137 = vmatprep.subr.bf16.mxu0 0
    %138 = vmatpush1.bf16.msra.mxu0 0
    %139 = vmatprep.subr.bf16.mxu0 0
    %140 = vmatpush1.bf16.msra.mxu0 0
    %141 = vmatprep.subr.bf16.mxu0 0
    %142 = vmatpush1.bf16.msra.mxu0 %v131
    %143 = vmatprep.subr.bf16.mxu0 0
    %144 = vmatpush1.bf16.msra.mxu0 %v96
    %145 = vmatprep.subr.bf16.mxu0 0
    %146 = vmatpush1.bf16.msra.mxu0 %v95
    %147 = vmatprep.subr.bf16.mxu0 0
    %148 = vmatpush1.bf16.msra.mxu0 %v94
    %149 = vmatprep.subr.bf16.mxu0 0
    %150 = vmatpush2.bf16.msra.mxu0 0
    %151 = vmatprep.subr.bf16.mxu0 0
    %152 = vmatpush2.bf16.msra.mxu0 0
    %153 = vmatprep.subr.bf16.mxu0 0
    %154 = vmatpush2.bf16.msra.mxu0 0
    %155 = vmatprep.subr.bf16.mxu0 0
    %156 = vmatpush2.bf16.msra.mxu0 0
    %157 = vmatprep.subr.bf16.mxu0 0
    %158 = vmatpush2.bf16.msra.mxu0 0
    %159 = vmatprep.subr.bf16.mxu0 0
    %160 = vmatpush2.bf16.msra.mxu0 0
    %161 = vmatprep.subr.bf16.mxu0 0
    %162 = vmatpush2.bf16.msra.mxu0 0
    %163 = vmatprep.subr.bf16.mxu0 0
    %164 = vmatpush2.bf16.msra.mxu0 0
    %165 = vmatprep.mubr.bf16.mxu0 0
    %166 = vmatmul.mubr.bf16.gmra.mxu0 %v103
    %v167 = vpop.f32.mrf.mxu0
    %v168 = vadd.f32 %v76, %v167
    %v169 = vpop.f32.mrf.mxu0
    %v170 = vpop.f32.mrf.mxu0
    %v171 = vadd.f32 %v76, %v170
    %v172 = vpop.f32.mrf.mxu0
    %173 = vmatprep.mubr.bf16.mxu0 0
    %174 = vmatmul.mubr.bf16.gmra.mxu0 %v106
    %v175 = vpop.f32.mrf.mxu0
    %v176 = vadd.f32 %v76, %v175
    %v177 = vpop.f32.mrf.mxu0
    %v178 = vpop.f32.mrf.mxu0
    %v179 = vadd.f32 %v76, %v178
    %v180 = vpop.f32.mrf.mxu0
    %181 = vmatprep.mubr.bf16.mxu0 0
    %182 = vmatmul.mubr.bf16.gmra.mxu0 %v109
    %v183 = vpop.f32.mrf.mxu0
    %v184 = vadd.f32 %v76, %v183
    %v185 = vpop.f32.mrf.mxu0
    %v186 = vpop.f32.mrf.mxu0
    %v187 = vadd.f32 %v76, %v186
    %v188 = vpop.f32.mrf.mxu0
    %189 = vmatprep.mubr.bf16.mxu0 0
    %190 = vmatmul.mubr.bf16.gmra.mxu0 %v112
    %v191 = vpop.f32.mrf.mxu0
    %v192 = vadd.f32 %v76, %v191
    %v193 = vpop.f32.mrf.mxu0
    %v194 = vpop.f32.mrf.mxu0
    %v195 = vadd.f32 %v76, %v194
    %v196 = vpop.f32.mrf.mxu0
    %197 = vmatprep.mubr.bf16.mxu0 0
    %198 = vmatmul.mubr.bf16.gmra.mxu0 %v115
    %v199 = vpop.f32.mrf.mxu0
    %v200 = vadd.f32 %v76, %v199
    %v201 = vpop.f32.mrf.mxu0
    %v202 = vpop.f32.mrf.mxu0
    %v203 = vadd.f32 %v76, %v202
    %v204 = vpop.f32.mrf.mxu0
    %205 = vmatprep.mubr.bf16.mxu0 0
    %206 = vmatmul.mubr.bf16.gmra.mxu0 %v118
    %v207 = vpop.f32.mrf.mxu0
    %v208 = vadd.f32 %v76, %v207
    %v209 = vpop.f32.mrf.mxu0
    %v210 = vpop.f32.mrf.mxu0
    %v211 = vadd.f32 %v76, %v210
    %v212 = vpop.f32.mrf.mxu0
    %213 = vmatprep.mubr.bf16.mxu0 0
    %214 = vmatmul.mubr.bf16.gmra.mxu0 %v121
    %v215 = vpop.f32.mrf.mxu0
    %v216 = vadd.f32 %v76, %v215
    %v217 = vpop.f32.mrf.mxu0
    %v218 = vpop.f32.mrf.mxu0
    %v219 = vadd.f32 %v76, %v218
    %v220 = vpop.f32.mrf.mxu0
    %221 = vmatprep.mubr.bf16.mxu0 0
    %222 = vmatmul.mubr.bf16.gmra.mxu0 %v124
    %v223 = vpop.f32.mrf.mxu0
    %v224 = vadd.f32 %v76, %v223
    %v225 = vpop.f32.mrf.mxu0
    %v226 = vpop.f32.mrf.mxu0
    %v227 = vadd.f32 %v76, %v226
    %v228 = vpop.f32.mrf.mxu0
    %229 = vdwg.mxu0
    %v230 = vmax.f32 %v168, 0.0
    %v231 = vmax.f32 %v171, 0.0
    %v232 = vmax.f32 %v176, 0.0
    %v233 = vmax.f32 %v179, 0.0
    %v234 = vmax.f32 %v184, 0.0
    %v235 = vmax.f32 %v187, 0.0
    %v236 = vmax.f32 %v192, 0.0
    %v237 = vmax.f32 %v195, 0.0
    %v238 = vmax.f32 %v200, 0.0
    %v239 = vmax.f32 %v203, 0.0
    %v240 = vmax.f32 %v208, 0.0
    %v241 = vmax.f32 %v211, 0.0
    %v242 = vmax.f32 %v216, 0.0
    %v243 = vmax.f32 %v219, 0.0
    %v244 = vmax.f32 %v224, 0.0
    %v245 = vmax.f32 %v227, 0.0
    %v246 = vpack.c.bf16 %v231, %v230
    %v247 = vpack.c.bf16 %v233, %v232
    %v248 = vpack.c.bf16 %v235, %v234
    %v249 = vpack.c.bf16 %v237, %v236
    %v250 = vpack.c.bf16 %v239, %v238
    %v251 = vpack.c.bf16 %v241, %v240
    %v252 = vpack.c.bf16 %v243, %v242
    %v253 = vpack.c.bf16 %v245, %v244
    %v255 = vlaneseq
    %v256 = vshrl.u32 %v255, 7
    %v257 = vsub.s32 0, %v256
    %v258 = vrot.slane %v46, %v257
    %v268 = vunpack.c.l.b16 %v36
    %v269 = vunpack.c.l.b16 %v37
    %v270 = vunpack.c.l.b16 %v38
    %v271 = vunpack.c.l.b16 %v39
    %v272 = vunpack.c.l.b16 %v40
    %v273 = vunpack.c.l.b16 %v41
    %v274 = vunpack.c.l.b16 %v42
    %v275 = vunpack.c.l.b16 %v43
    %v276 = vpack.c.b16 %v269, %v268
    %v277 = vpack.c.b16 %v271, %v270
    %v278 = vpack.c.b16 %v273, %v272
    %v279 = vpack.c.b16 %v275, %v274
    %vm284 = vcmask 523264
    %v286 = vsel %vm284, %v246, 0
    %v289 = vsel %vm284, %v247, 0
    %v292 = vsel %vm284, %v248, 0
    %v295 = vsel %vm284, %v249, 0
    %v298 = vsel %vm284, %v250, 0
    %v301 = vsel %vm284, %v251, 0
    %v304 = vsel %vm284, %v252, 0
    %v307 = vsel %vm284, %v253, 0
    %309 = vmatprep.subr.bf16.mxu0 0
    %310 = vmatpush1.bf16.msra.mxu0 0
    %311 = vmatprep.subr.bf16.mxu0 0
    %312 = vmatpush1.bf16.msra.mxu0 0
    %313 = vmatprep.subr.bf16.mxu0 0
    %314 = vmatpush1.bf16.msra.mxu0 0
    %315 = vmatprep.subr.bf16.mxu0 0
    %316 = vmatpush1.bf16.msra.mxu0 0
    %317 = vmatprep.subr.bf16.mxu0 0
    %318 = vmatpush1.bf16.msra.mxu0 %v279
    %319 = vmatprep.subr.bf16.mxu0 0
    %320 = vmatpush1.bf16.msra.mxu0 %v278
    %321 = vmatprep.subr.bf16.mxu0 0
    %322 = vmatpush1.bf16.msra.mxu0 %v277
    %323 = vmatprep.subr.bf16.mxu0 0
    %324 = vmatpush1.bf16.msra.mxu0 %v276
    %325 = vmatprep.subr.bf16.mxu0 0
    %326 = vmatpush2.bf16.msra.mxu0 0
    %327 = vmatprep.subr.bf16.mxu0 0
    %328 = vmatpush2.bf16.msra.mxu0 0
    %329 = vmatprep.subr.bf16.mxu0 0
    %330 = vmatpush2.bf16.msra.mxu0 0
    %331 = vmatprep.subr.bf16.mxu0 0
    %332 = vmatpush2.bf16.msra.mxu0 0
    %333 = vmatprep.subr.bf16.mxu0 0
    %334 = vmatpush2.bf16.msra.mxu0 0
    %335 = vmatprep.subr.bf16.mxu0 0
    %336 = vmatpush2.bf16.msra.mxu0 0
    %337 = vmatprep.subr.bf16.mxu0 0
    %338 = vmatpush2.bf16.msra.mxu0 0
    %339 = vmatprep.subr.bf16.mxu0 0
    %340 = vmatpush2.bf16.msra.mxu0 0
    %341 = vmatprep.mubr.bf16.mxu0 0
    %342 = vmatmul.mubr.bf16.gmra.mxu0 %v286
    %v343 = vpop.f32.mrf.mxu0
    %v344 = vadd.f32 %v258, %v343
    %v345 = vpop.f32.mrf.mxu0
    %v346 = vpop.f32.mrf.mxu0
    %v347 = vadd.f32 %v258, %v346
    %v348 = vpop.f32.mrf.mxu0
    %349 = vmatprep.mubr.bf16.mxu0 0
    %350 = vmatmul.mubr.bf16.gmra.mxu0 %v289
    %v351 = vpop.f32.mrf.mxu0
    %v352 = vadd.f32 %v258, %v351
    %v353 = vpop.f32.mrf.mxu0
    %v354 = vpop.f32.mrf.mxu0
    %v355 = vadd.f32 %v258, %v354
    %v356 = vpop.f32.mrf.mxu0
    %357 = vmatprep.mubr.bf16.mxu0 0
    %358 = vmatmul.mubr.bf16.gmra.mxu0 %v292
    %v359 = vpop.f32.mrf.mxu0
    %v360 = vadd.f32 %v258, %v359
    %v361 = vpop.f32.mrf.mxu0
    %v362 = vpop.f32.mrf.mxu0
    %v363 = vadd.f32 %v258, %v362
    %v364 = vpop.f32.mrf.mxu0
    %365 = vmatprep.mubr.bf16.mxu0 0
    %366 = vmatmul.mubr.bf16.gmra.mxu0 %v295
    %v367 = vpop.f32.mrf.mxu0
    %v368 = vadd.f32 %v258, %v367
    %v369 = vpop.f32.mrf.mxu0
    %v370 = vpop.f32.mrf.mxu0
    %v371 = vadd.f32 %v258, %v370
    %v372 = vpop.f32.mrf.mxu0
    %373 = vmatprep.mubr.bf16.mxu0 0
    %374 = vmatmul.mubr.bf16.gmra.mxu0 %v298
    %v375 = vpop.f32.mrf.mxu0
    %v376 = vadd.f32 %v258, %v375
    %v377 = vpop.f32.mrf.mxu0
    %v378 = vpop.f32.mrf.mxu0
    %v379 = vadd.f32 %v258, %v378
    %v380 = vpop.f32.mrf.mxu0
    %381 = vmatprep.mubr.bf16.mxu0 0
    %382 = vmatmul.mubr.bf16.gmra.mxu0 %v301
    %v383 = vpop.f32.mrf.mxu0
    %v384 = vadd.f32 %v258, %v383
    %v385 = vpop.f32.mrf.mxu0
    %v386 = vpop.f32.mrf.mxu0
    %v387 = vadd.f32 %v258, %v386
    %v388 = vpop.f32.mrf.mxu0
    %389 = vmatprep.mubr.bf16.mxu0 0
    %390 = vmatmul.mubr.bf16.gmra.mxu0 %v304
    %v391 = vpop.f32.mrf.mxu0
    %v392 = vadd.f32 %v258, %v391
    %v393 = vpop.f32.mrf.mxu0
    %v394 = vpop.f32.mrf.mxu0
    %v395 = vadd.f32 %v258, %v394
    %v396 = vpop.f32.mrf.mxu0
    %397 = vmatprep.mubr.bf16.mxu0 0
    %398 = vmatmul.mubr.bf16.gmra.mxu0 %v307
    %v399 = vpop.f32.mrf.mxu0
    %v400 = vadd.f32 %v258, %v399
    %v401 = vpop.f32.mrf.mxu0
    %v402 = vpop.f32.mrf.mxu0
    %v403 = vadd.f32 %v258, %v402
    %v404 = vpop.f32.mrf.mxu0
    %405 = vdwg.mxu0
    %v406 = vmax.f32 %v344, 0.0
    %v407 = vmax.f32 %v347, 0.0
    %v408 = vmax.f32 %v352, 0.0
    %v409 = vmax.f32 %v355, 0.0
    %v410 = vmax.f32 %v360, 0.0
    %v411 = vmax.f32 %v363, 0.0
    %v412 = vmax.f32 %v368, 0.0
    %v413 = vmax.f32 %v371, 0.0
    %v414 = vmax.f32 %v376, 0.0
    %v415 = vmax.f32 %v379, 0.0
    %v416 = vmax.f32 %v384, 0.0
    %v417 = vmax.f32 %v387, 0.0
    %v418 = vmax.f32 %v392, 0.0
    %v419 = vmax.f32 %v395, 0.0
    %v420 = vmax.f32 %v400, 0.0
    %v421 = vmax.f32 %v403, 0.0
    %v422 = vpack.c.bf16 %v407, %v406
    %v423 = vpack.c.bf16 %v409, %v408
    %v424 = vpack.c.bf16 %v411, %v410
    %v425 = vpack.c.bf16 %v413, %v412
    %v426 = vpack.c.bf16 %v415, %v414
    %v427 = vpack.c.bf16 %v417, %v416
    %v428 = vpack.c.bf16 %v419, %v418
    %v429 = vpack.c.bf16 %v421, %v420
    %431 = vset.pattern.permute.xlu0 0
    %432 = vperm.xlu0 %431, %v47
    %v433 = vpop.permute.xlu0 %432
    %v436 = vsel %vm284, %v44, 0
    %v439 = vsel %vm284, %v422, 0
    %v442 = vsel %vm284, %v423, 0
    %v445 = vsel %vm284, %v424, 0
    %v448 = vsel %vm284, %v425, 0
    %v451 = vsel %vm284, %v426, 0
    %v454 = vsel %vm284, %v427, 0
    %v457 = vsel %vm284, %v428, 0
    %v460 = vsel %vm284, %v429, 0
    %462 = vmatprep.subr.bf16.mxu0 0
    %463 = vmatpush1.bf16.xpose.msra.mxu0 %v460
    %464 = vmatprep.subr.bf16.mxu0 0
    %465 = vmatpush1.bf16.xpose.msra.mxu0 %v457
    %466 = vmatprep.subr.bf16.mxu0 0
    %467 = vmatpush1.bf16.xpose.msra.mxu0 %v454
    %468 = vmatprep.subr.bf16.mxu0 0
    %469 = vmatpush1.bf16.xpose.msra.mxu0 %v451
    %470 = vmatprep.subr.bf16.mxu0 0
    %471 = vmatpush1.bf16.xpose.msra.mxu0 %v448
    %472 = vmatprep.subr.bf16.mxu0 0
    %473 = vmatpush1.bf16.xpose.msra.mxu0 %v445
    %474 = vmatprep.subr.bf16.mxu0 0
    %475 = vmatpush1.bf16.xpose.msra.mxu0 %v442
    %476 = vmatprep.subr.bf16.mxu0 0
    %477 = vmatpush1.bf16.xpose.msra.mxu0 %v439
    %478 = vmatprep.subr.bf16.mxu0 0
    %479 = vmatpush2.bf16.xpose.msra.mxu0 0
    %480 = vmatprep.subr.bf16.mxu0 0
    %481 = vmatpush2.bf16.xpose.msra.mxu0 0
    %482 = vmatprep.subr.bf16.mxu0 0
    %483 = vmatpush2.bf16.xpose.msra.mxu0 0
    %484 = vmatprep.subr.bf16.mxu0 0
    %485 = vmatpush2.bf16.xpose.msra.mxu0 0
    %486 = vmatprep.subr.bf16.mxu0 0
    %487 = vmatpush2.bf16.xpose.msra.mxu0 0
    %488 = vmatprep.subr.bf16.mxu0 0
    %489 = vmatpush2.bf16.xpose.msra.mxu0 0
    %490 = vmatprep.subr.bf16.mxu0 0
    %491 = vmatpush2.bf16.xpose.msra.mxu0 0
    %492 = vmatprep.subr.bf16.mxu0 0
    %493 = vmatpush2.bf16.xpose.msra.mxu0 0
    %494 = vmatprep.mubr.bf16.mxu0 0
    %495 = vmatmul.mubr.bf16.gmra.mxu0 %v436
    %v496 = vpop.f32.mrf.mxu0
    %v497 = vadd.f32 %v433, %v496
    %v498 = vpop.f32.mrf.mxu0
    %v499 = vpop.f32.mrf.mxu0
    %v500 = vpop.f32.mrf.mxu0
    %501 = vdwg.mxu0
    %502 = vst [vmem:[#allocation2] sm:$0x3] %v497
    %v503 = vld [vmem:[%s0 + $0x80] sm:$0xff]
    %v504 = vld [vmem:[%s0 + $0x88] sm:$0xff]
    %v505 = vld [vmem:[%s0 + $0x90] sm:$0xff]
    %v506 = vld [vmem:[%s0 + $0x98] sm:$0xff]
    %v507 = vld [vmem:[%s0 + $0xa0] sm:$0xff]
    %v508 = vld [vmem:[%s0 + $0xa8] sm:$0xff]
    %v509 = vld [vmem:[%s0 + $0xb0] sm:$0xff]
    %v510 = vld [vmem:[%s0 + $0xb8] sm:$0xff]
    %v511 = vld [vmem:[%s0 + $0xc0] sm:$0xff]
    %v512 = vld [vmem:[%s0 + $0xc8] sm:$0xff]
    %v513 = vld [vmem:[%s0 + $0xd0] sm:$0xff]
    %v514 = vld [vmem:[%s0 + $0xd8] sm:$0xff]
    %v515 = vld [vmem:[%s0 + $0xe0] sm:$0xff]
    %v516 = vld [vmem:[%s0 + $0xe8] sm:$0xff]
    %v517 = vld [vmem:[%s0 + $0xf0] sm:$0xff]
    %v518 = vld [vmem:[%s0 + $0xf8] sm:$0xff]
    %v519 = vpack.c.bf16 %v504, %v503
    %v520 = vpack.c.bf16 %v506, %v505
    %v521 = vpack.c.bf16 %v508, %v507
    %v522 = vpack.c.bf16 %v510, %v509
    %v523 = vpack.c.bf16 %v512, %v511
    %v524 = vpack.c.bf16 %v514, %v513
    %v525 = vpack.c.bf16 %v516, %v515
    %v526 = vpack.c.bf16 %v518, %v517
    %v528 = vsel %vm101, %v519, 0
    %v531 = vsel %vm101, %v520, 0
    %v534 = vsel %vm101, %v521, 0
    %v537 = vsel %vm101, %v522, 0
    %v540 = vsel %vm101, %v523, 0
    %v543 = vsel %vm101, %v524, 0
    %v546 = vsel %vm101, %v525, 0
    %v549 = vsel %vm101, %v526, 0
    %551 = vmatprep.subr.bf16.mxu0 0
    %552 = vmatpush1.bf16.msra.mxu0 0
    %553 = vmatprep.subr.bf16.mxu0 0
    %554 = vmatpush1.bf16.msra.mxu0 0
    %555 = vmatprep.subr.bf16.mxu0 0
    %556 = vmatpush1.bf16.msra.mxu0 0
    %557 = vmatprep.subr.bf16.mxu0 0
    %558 = vmatpush1.bf16.msra.mxu0 0
    %559 = vmatprep.subr.bf16.mxu0 0
    %560 = vmatpush1.bf16.msra.mxu0 %v131
    %561 = vmatprep.subr.bf16.mxu0 0
    %562 = vmatpush1.bf16.msra.mxu0 %v96
    %563 = vmatprep.subr.bf16.mxu0 0
    %564 = vmatpush1.bf16.msra.mxu0 %v95
    %565 = vmatprep.subr.bf16.mxu0 0
    %566 = vmatpush1.bf16.msra.mxu0 %v94
    %567 = vmatprep.subr.bf16.mxu0 0
    %568 = vmatpush2.bf16.msra.mxu0 0
    %569 = vmatprep.subr.bf16.mxu0 0
    %570 = vmatpush2.bf16.msra.mxu0 0
    %571 = vmatprep.subr.bf16.mxu0 0
    %572 = vmatpush2.bf16.msra.mxu0 0
    %573 = vmatprep.subr.bf16.mxu0 0
    %574 = vmatpush2.bf16.msra.mxu0 0
    %575 = vmatprep.subr.bf16.mxu0 0
    %576 = vmatpush2.bf16.msra.mxu0 0
    %577 = vmatprep.subr.bf16.mxu0 0
    %578 = vmatpush2.bf16.msra.mxu0 0
    %579 = vmatprep.subr.bf16.mxu0 0
    %580 = vmatpush2.bf16.msra.mxu0 0
    %581 = vmatprep.subr.bf16.mxu0 0
    %582 = vmatpush2.bf16.msra.mxu0 0
    %583 = vmatprep.mubr.bf16.mxu0 0
    %584 = vmatmul.mubr.bf16.gmra.mxu0 %v528
    %v585 = vpop.f32.mrf.mxu0
    %v586 = vadd.f32 %v76, %v585
    %v587 = vpop.f32.mrf.mxu0
    %v588 = vpop.f32.mrf.mxu0
    %v589 = vadd.f32 %v76, %v588
    %v590 = vpop.f32.mrf.mxu0
    %591 = vmatprep.mubr.bf16.mxu0 0
    %592 = vmatmul.mubr.bf16.gmra.mxu0 %v531
    %v593 = vpop.f32.mrf.mxu0
    %v594 = vadd.f32 %v76, %v593
    %v595 = vpop.f32.mrf.mxu0
    %v596 = vpop.f32.mrf.mxu0
    %v597 = vadd.f32 %v76, %v596
    %v598 = vpop.f32.mrf.mxu0
    %599 = vmatprep.mubr.bf16.mxu0 0
    %600 = vmatmul.mubr.bf16.gmra.mxu0 %v534
    %v601 = vpop.f32.mrf.mxu0
    %v602 = vadd.f32 %v76, %v601
    %v603 = vpop.f32.mrf.mxu0
    %v604 = vpop.f32.mrf.mxu0
    %v605 = vadd.f32 %v76, %v604
    %v606 = vpop.f32.mrf.mxu0
    %607 = vmatprep.mubr.bf16.mxu0 0
    %608 = vmatmul.mubr.bf16.gmra.mxu0 %v537
    %v609 = vpop.f32.mrf.mxu0
    %v610 = vadd.f32 %v76, %v609
    %v611 = vpop.f32.mrf.mxu0
    %v612 = vpop.f32.mrf.mxu0
    %v613 = vadd.f32 %v76, %v612
    %v614 = vpop.f32.mrf.mxu0
    %615 = vmatprep.mubr.bf16.mxu0 0
    %616 = vmatmul.mubr.bf16.gmra.mxu0 %v540
    %v617 = vpop.f32.mrf.mxu0
    %v618 = vadd.f32 %v76, %v617
    %v619 = vpop.f32.mrf.mxu0
    %v620 = vpop.f32.mrf.mxu0
    %v621 = vadd.f32 %v76, %v620
    %v622 = vpop.f32.mrf.mxu0
    %623 = vmatprep.mubr.bf16.mxu0 0
    %624 = vmatmul.mubr.bf16.gmra.mxu0 %v543
    %v625 = vpop.f32.mrf.mxu0
    %v626 = vadd.f32 %v76, %v625
    %v627 = vpop.f32.mrf.mxu0
    %v628 = vpop.f32.mrf.mxu0
    %v629 = vadd.f32 %v76, %v628
    %v630 = vpop.f32.mrf.mxu0
    %631 = vmatprep.mubr.bf16.mxu0 0
    %632 = vmatmul.mubr.bf16.gmra.mxu0 %v546
    %v633 = vpop.f32.mrf.mxu0
    %v634 = vadd.f32 %v76, %v633
    %v635 = vpop.f32.mrf.mxu0
    %v636 = vpop.f32.mrf.mxu0
    %v637 = vadd.f32 %v76, %v636
    %v638 = vpop.f32.mrf.mxu0
    %639 = vmatprep.mubr.bf16.mxu0 0
    %640 = vmatmul.mubr.bf16.gmra.mxu0 %v549
    %v641 = vpop.f32.mrf.mxu0
    %v642 = vadd.f32 %v76, %v641
    %v643 = vpop.f32.mrf.mxu0
    %v644 = vpop.f32.mrf.mxu0
    %v645 = vadd.f32 %v76, %v644
    %v646 = vpop.f32.mrf.mxu0
    %647 = vdwg.mxu0
    %v648 = vmax.f32 %v586, 0.0
    %v649 = vmax.f32 %v589, 0.0
    %v650 = vmax.f32 %v594, 0.0
    %v651 = vmax.f32 %v597, 0.0
    %v652 = vmax.f32 %v602, 0.0
    %v653 = vmax.f32 %v605, 0.0
    %v654 = vmax.f32 %v610, 0.0
    %v655 = vmax.f32 %v613, 0.0
    %v656 = vmax.f32 %v618, 0.0
    %v657 = vmax.f32 %v621, 0.0
    %v658 = vmax.f32 %v626, 0.0
    %v659 = vmax.f32 %v629, 0.0
    %v660 = vmax.f32 %v634, 0.0
    %v661 = vmax.f32 %v637, 0.0
    %v662 = vmax.f32 %v642, 0.0
    %v663 = vmax.f32 %v645, 0.0
    %v664 = vpack.c.bf16 %v649, %v648
    %v665 = vpack.c.bf16 %v651, %v650
    %v666 = vpack.c.bf16 %v653, %v652
    %v667 = vpack.c.bf16 %v655, %v654
    %v668 = vpack.c.bf16 %v657, %v656
    %v669 = vpack.c.bf16 %v659, %v658
    %v670 = vpack.c.bf16 %v661, %v660
    %v671 = vpack.c.bf16 %v663, %v662
    %v673 = vsel %vm284, %v664, 0
    %v676 = vsel %vm284, %v665, 0
    %v679 = vsel %vm284, %v666, 0
    %v682 = vsel %vm284, %v667, 0
    %v685 = vsel %vm284, %v668, 0
    %v688 = vsel %vm284, %v669, 0
    %v691 = vsel %vm284, %v670, 0
    %v694 = vsel %vm284, %v671, 0
    %696 = vmatprep.subr.bf16.mxu0 0
    %697 = vmatpush1.bf16.msra.mxu0 0
    %698 = vmatprep.subr.bf16.mxu0 0
    %699 = vmatpush1.bf16.msra.mxu0 0
    %700 = vmatprep.subr.bf16.mxu0 0
    %701 = vmatpush1.bf16.msra.mxu0 0
    %702 = vmatprep.subr.bf16.mxu0 0
    %703 = vmatpush1.bf16.msra.mxu0 0
    %704 = vmatprep.subr.bf16.mxu0 0
    %705 = vmatpush1.bf16.msra.mxu0 %v279
    %706 = vmatprep.subr.bf16.mxu0 0
    %707 = vmatpush1.bf16.msra.mxu0 %v278
    %708 = vmatprep.subr.bf16.mxu0 0
    %709 = vmatpush1.bf16.msra.mxu0 %v277
    %710 = vmatprep.subr.bf16.mxu0 0
    %711 = vmatpush1.bf16.msra.mxu0 %v276
    %712 = vmatprep.subr.bf16.mxu0 0
    %713 = vmatpush2.bf16.msra.mxu0 0
    %714 = vmatprep.subr.bf16.mxu0 0
    %715 = vmatpush2.bf16.msra.mxu0 0
    %716 = vmatprep.subr.bf16.mxu0 0
    %717 = vmatpush2.bf16.msra.mxu0 0
    %718 = vmatprep.subr.bf16.mxu0 0
    %719 = vmatpush2.bf16.msra.mxu0 0
    %720 = vmatprep.subr.bf16.mxu0 0
    %721 = vmatpush2.bf16.msra.mxu0 0
    %722 = vmatprep.subr.bf16.mxu0 0
    %723 = vmatpush2.bf16.msra.mxu0 0
    %724 = vmatprep.subr.bf16.mxu0 0
    %725 = vmatpush2.bf16.msra.mxu0 0
    %726 = vmatprep.subr.bf16.mxu0 0
    %727 = vmatpush2.bf16.msra.mxu0 0
    %728 = vmatprep.mubr.bf16.mxu0 0
    %729 = vmatmul.mubr.bf16.gmra.mxu0 %v673
    %v730 = vpop.f32.mrf.mxu0
    %v731 = vadd.f32 %v258, %v730
    %v732 = vpop.f32.mrf.mxu0
    %v733 = vpop.f32.mrf.mxu0
    %v734 = vadd.f32 %v258, %v733
    %v735 = vpop.f32.mrf.mxu0
    %736 = vmatprep.mubr.bf16.mxu0 0
    %737 = vmatmul.mubr.bf16.gmra.mxu0 %v676
    %v738 = vpop.f32.mrf.mxu0
    %v739 = vadd.f32 %v258, %v738
    %v740 = vpop.f32.mrf.mxu0
    %v741 = vpop.f32.mrf.mxu0
    %v742 = vadd.f32 %v258, %v741
    %v743 = vpop.f32.mrf.mxu0
    %744 = vmatprep.mubr.bf16.mxu0 0
    %745 = vmatmul.mubr.bf16.gmra.mxu0 %v679
    %v746 = vpop.f32.mrf.mxu0
    %v747 = vadd.f32 %v258, %v746
    %v748 = vpop.f32.mrf.mxu0
    %v749 = vpop.f32.mrf.mxu0
    %v750 = vadd.f32 %v258, %v749
    %v751 = vpop.f32.mrf.mxu0
    %752 = vmatprep.mubr.bf16.mxu0 0
    %753 = vmatmul.mubr.bf16.gmra.mxu0 %v682
    %v754 = vpop.f32.mrf.mxu0
    %v755 = vadd.f32 %v258, %v754
    %v756 = vpop.f32.mrf.mxu0
    %v757 = vpop.f32.mrf.mxu0
    %v758 = vadd.f32 %v258, %v757
    %v759 = vpop.f32.mrf.mxu0
    %760 = vmatprep.mubr.bf16.mxu0 0
    %761 = vmatmul.mubr.bf16.gmra.mxu0 %v685
    %v762 = vpop.f32.mrf.mxu0
    %v763 = vadd.f32 %v258, %v762
    %v764 = vpop.f32.mrf.mxu0
    %v765 = vpop.f32.mrf.mxu0
    %v766 = vadd.f32 %v258, %v765
    %v767 = vpop.f32.mrf.mxu0
    %768 = vmatprep.mubr.bf16.mxu0 0
    %769 = vmatmul.mubr.bf16.gmra.mxu0 %v688
    %v770 = vpop.f32.mrf.mxu0
    %v771 = vadd.f32 %v258, %v770
    %v772 = vpop.f32.mrf.mxu0
    %v773 = vpop.f32.mrf.mxu0
    %v774 = vadd.f32 %v258, %v773
    %v775 = vpop.f32.mrf.mxu0
    %776 = vmatprep.mubr.bf16.mxu0 0
    %777 = vmatmul.mubr.bf16.gmra.mxu0 %v691
    %v778 = vpop.f32.mrf.mxu0
    %v779 = vadd.f32 %v258, %v778
    %v780 = vpop.f32.mrf.mxu0
    %v781 = vpop.f32.mrf.mxu0
    %v782 = vadd.f32 %v258, %v781
    %v783 = vpop.f32.mrf.mxu0
    %784 = vmatprep.mubr.bf16.mxu0 0
    %785 = vmatmul.mubr.bf16.gmra.mxu0 %v694
    %v786 = vpop.f32.mrf.mxu0
    %v787 = vadd.f32 %v258, %v786
    %v788 = vpop.f32.mrf.mxu0
    %v789 = vpop.f32.mrf.mxu0
    %v790 = vadd.f32 %v258, %v789
    %v791 = vpop.f32.mrf.mxu0
    %792 = vdwg.mxu0
    %v793 = vmax.f32 %v731, 0.0
    %v794 = vmax.f32 %v734, 0.0
    %v795 = vmax.f32 %v739, 0.0
    %v796 = vmax.f32 %v742, 0.0
    %v797 = vmax.f32 %v747, 0.0
    %v798 = vmax.f32 %v750, 0.0
    %v799 = vmax.f32 %v755, 0.0
    %v800 = vmax.f32 %v758, 0.0
    %v801 = vmax.f32 %v763, 0.0
    %v802 = vmax.f32 %v766, 0.0
    %v803 = vmax.f32 %v771, 0.0
    %v804 = vmax.f32 %v774, 0.0
    %v805 = vmax.f32 %v779, 0.0
    %v806 = vmax.f32 %v782, 0.0
    %v807 = vmax.f32 %v787, 0.0
    %v808 = vmax.f32 %v790, 0.0
    %v809 = vpack.c.bf16 %v794, %v793
    %v810 = vpack.c.bf16 %v796, %v795
    %v811 = vpack.c.bf16 %v798, %v797
    %v812 = vpack.c.bf16 %v800, %v799
    %v813 = vpack.c.bf16 %v802, %v801
    %v814 = vpack.c.bf16 %v804, %v803
    %v815 = vpack.c.bf16 %v806, %v805
    %v816 = vpack.c.bf16 %v808, %v807
    %v818 = vsel %vm284, %v809, 0
    %v821 = vsel %vm284, %v810, 0
    %v824 = vsel %vm284, %v811, 0
    %v827 = vsel %vm284, %v812, 0
    %v830 = vsel %vm284, %v813, 0
    %v833 = vsel %vm284, %v814, 0
    %v836 = vsel %vm284, %v815, 0
    %v839 = vsel %vm284, %v816, 0
    %841 = vmatprep.subr.bf16.mxu0 0
    %842 = vmatpush1.bf16.xpose.msra.mxu0 %v839
    %843 = vmatprep.subr.bf16.mxu0 0
    %844 = vmatpush1.bf16.xpose.msra.mxu0 %v836
    %845 = vmatprep.subr.bf16.mxu0 0
    %846 = vmatpush1.bf16.xpose.msra.mxu0 %v833
    %847 = vmatprep.subr.bf16.mxu0 0
    %848 = vmatpush1.bf16.xpose.msra.mxu0 %v830
    %849 = vmatprep.subr.bf16.mxu0 0
    %850 = vmatpush1.bf16.xpose.msra.mxu0 %v827
    %851 = vmatprep.subr.bf16.mxu0 0
    %852 = vmatpush1.bf16.xpose.msra.mxu0 %v824
    %853 = vmatprep.subr.bf16.mxu0 0
    %854 = vmatpush1.bf16.xpose.msra.mxu0 %v821
    %855 = vmatprep.subr.bf16.mxu0 0
    %856 = vmatpush1.bf16.xpose.msra.mxu0 %v818
    %857 = vmatprep.subr.bf16.mxu0 0
    %858 = vmatpush2.bf16.xpose.msra.mxu0 0
    %859 = vmatprep.subr.bf16.mxu0 0
    %860 = vmatpush2.bf16.xpose.msra.mxu0 0
    %861 = vmatprep.subr.bf16.mxu0 0
    %862 = vmatpush2.bf16.xpose.msra.mxu0 0
    %863 = vmatprep.subr.bf16.mxu0 0
    %864 = vmatpush2.bf16.xpose.msra.mxu0 0
    %865 = vmatprep.subr.bf16.mxu0 0
    %866 = vmatpush2.bf16.xpose.msra.mxu0 0
    %867 = vmatprep.subr.bf16.mxu0 0
    %868 = vmatpush2.bf16.xpose.msra.mxu0 0
    %869 = vmatprep.subr.bf16.mxu0 0
    %870 = vmatpush2.bf16.xpose.msra.mxu0 0
    %871 = vmatprep.subr.bf16.mxu0 0
    %872 = vmatpush2.bf16.xpose.msra.mxu0 0
    %873 = vmatprep.mubr.bf16.mxu0 0
    %874 = vmatmul.mubr.bf16.gmra.mxu0 %v436
    %v875 = vpop.f32.mrf.mxu0
    %v876 = vadd.f32 %v433, %v875
    %v877 = vpop.f32.mrf.mxu0
    %v878 = vpop.f32.mrf.mxu0
    %v879 = vpop.f32.mrf.mxu0
    %880 = vdwg.mxu0
    %881 = vst [vmem:[#allocation2 + $0x2] sm:$0x3] %v876
    %v882 = vld [vmem:[%s0 + $0x100] sm:$0xff]
    %v883 = vld [vmem:[%s0 + $0x108] sm:$0xff]
    %v884 = vld [vmem:[%s0 + $0x110] sm:$0xff]
    %v885 = vld [vmem:[%s0 + $0x118] sm:$0xff]
    %v886 = vld [vmem:[%s0 + $0x120] sm:$0xff]
    %v887 = vld [vmem:[%s0 + $0x128] sm:$0xff]
    %v888 = vld [vmem:[%s0 + $0x130] sm:$0xff]
    %v889 = vld [vmem:[%s0 + $0x138] sm:$0xff]
    %v890 = vld [vmem:[%s0 + $0x140] sm:$0xff]
    %v891 = vld [vmem:[%s0 + $0x148] sm:$0xff]
    %v892 = vld [vmem:[%s0 + $0x150] sm:$0xff]
    %v893 = vld [vmem:[%s0 + $0x158] sm:$0xff]
    %v894 = vld [vmem:[%s0 + $0x160] sm:$0xff]
    %v895 = vld [vmem:[%s0 + $0x168] sm:$0xff]
    %v896 = vld [vmem:[%s0 + $0x170] sm:$0xff]
    %v897 = vld [vmem:[%s0 + $0x178] sm:$0xff]
    %v898 = vpack.c.bf16 %v883, %v882
    %v899 = vpack.c.bf16 %v885, %v884
    %v900 = vpack.c.bf16 %v887, %v886
    %v901 = vpack.c.bf16 %v889, %v888
    %v902 = vpack.c.bf16 %v891, %v890
    %v903 = vpack.c.bf16 %v893, %v892
    %v904 = vpack.c.bf16 %v895, %v894
    %v905 = vpack.c.bf16 %v897, %v896
    %v907 = vsel %vm101, %v898, 0
    %v910 = vsel %vm101, %v899, 0
    %v913 = vsel %vm101, %v900, 0
    %v916 = vsel %vm101, %v901, 0
    %v919 = vsel %vm101, %v902, 0
    %v922 = vsel %vm101, %v903, 0
    %v925 = vsel %vm101, %v904, 0
    %v928 = vsel %vm101, %v905, 0
    %930 = vmatprep.subr.bf16.mxu0 0
    %931 = vmatpush1.bf16.msra.mxu0 0
    %932 = vmatprep.subr.bf16.mxu0 0
    %933 = vmatpush1.bf16.msra.mxu0 0
    %934 = vmatprep.subr.bf16.mxu0 0
    %935 = vmatpush1.bf16.msra.mxu0 0
    %936 = vmatprep.subr.bf16.mxu0 0
    %937 = vmatpush1.bf16.msra.mxu0 0
    %938 = vmatprep.subr.bf16.mxu0 0
    %939 = vmatpush1.bf16.msra.mxu0 %v131
    %940 = vmatprep.subr.bf16.mxu0 0
    %941 = vmatpush1.bf16.msra.mxu0 %v96
    %942 = vmatprep.subr.bf16.mxu0 0
    %943 = vmatpush1.bf16.msra.mxu0 %v95
    %944 = vmatprep.subr.bf16.mxu0 0
    %945 = vmatpush1.bf16.msra.mxu0 %v94
    %946 = vmatprep.subr.bf16.mxu0 0
    %947 = vmatpush2.bf16.msra.mxu0 0
    %948 = vmatprep.subr.bf16.mxu0 0
    %949 = vmatpush2.bf16.msra.mxu0 0
    %950 = vmatprep.subr.bf16.mxu0 0
    %951 = vmatpush2.bf16.msra.mxu0 0
    %952 = vmatprep.subr.bf16.mxu0 0
    %953 = vmatpush2.bf16.msra.mxu0 0
    %954 = vmatprep.subr.bf16.mxu0 0
    %955 = vmatpush2.bf16.msra.mxu0 0
    %956 = vmatprep.subr.bf16.mxu0 0
    %957 = vmatpush2.bf16.msra.mxu0 0
    %958 = vmatprep.subr.bf16.mxu0 0
    %959 = vmatpush2.bf16.msra.mxu0 0
    %960 = vmatprep.subr.bf16.mxu0 0
    %961 = vmatpush2.bf16.msra.mxu0 0
    %962 = vmatprep.mubr.bf16.mxu0 0
    %963 = vmatmul.mubr.bf16.gmra.mxu0 %v907
    %v964 = vpop.f32.mrf.mxu0
    %v965 = vadd.f32 %v76, %v964
    %v966 = vpop.f32.mrf.mxu0
    %v967 = vpop.f32.mrf.mxu0
    %v968 = vadd.f32 %v76, %v967
    %v969 = vpop.f32.mrf.mxu0
    %970 = vmatprep.mubr.bf16.mxu0 0
    %971 = vmatmul.mubr.bf16.gmra.mxu0 %v910
    %v972 = vpop.f32.mrf.mxu0
    %v973 = vadd.f32 %v76, %v972
    %v974 = vpop.f32.mrf.mxu0
    %v975 = vpop.f32.mrf.mxu0
    %v976 = vadd.f32 %v76, %v975
    %v977 = vpop.f32.mrf.mxu0
    %978 = vmatprep.mubr.bf16.mxu0 0
    %979 = vmatmul.mubr.bf16.gmra.mxu0 %v913
    %v980 = vpop.f32.mrf.mxu0
    %v981 = vadd.f32 %v76, %v980
    %v982 = vpop.f32.mrf.mxu0
    %v983 = vpop.f32.mrf.mxu0
    %v984 = vadd.f32 %v76, %v983
    %v985 = vpop.f32.mrf.mxu0
    %986 = vmatprep.mubr.bf16.mxu0 0
    %987 = vmatmul.mubr.bf16.gmra.mxu0 %v916
    %v988 = vpop.f32.mrf.mxu0
    %v989 = vadd.f32 %v76, %v988
    %v990 = vpop.f32.mrf.mxu0
    %v991 = vpop.f32.mrf.mxu0
    %v992 = vadd.f32 %v76, %v991
    %v993 = vpop.f32.mrf.mxu0
    %994 = vmatprep.mubr.bf16.mxu0 0
    %995 = vmatmul.mubr.bf16.gmra.mxu0 %v919
    %v996 = vpop.f32.mrf.mxu0
    %v997 = vadd.f32 %v76, %v996
    %v998 = vpop.f32.mrf.mxu0
    %v999 = vpop.f32.mrf.mxu0
    %v1000 = vadd.f32 %v76, %v999
    %v1001 = vpop.f32.mrf.mxu0
    %1002 = vmatprep.mubr.bf16.mxu0 0
    %1003 = vmatmul.mubr.bf16.gmra.mxu0 %v922
    %v1004 = vpop.f32.mrf.mxu0
    %v1005 = vadd.f32 %v76, %v1004
    %v1006 = vpop.f32.mrf.mxu0
    %v1007 = vpop.f32.mrf.mxu0
    %v1008 = vadd.f32 %v76, %v1007
    %v1009 = vpop.f32.mrf.mxu0
    %1010 = vmatprep.mubr.bf16.mxu0 0
    %1011 = vmatmul.mubr.bf16.gmra.mxu0 %v925
    %v1012 = vpop.f32.mrf.mxu0
    %v1013 = vadd.f32 %v76, %v1012
    %v1014 = vpop.f32.mrf.mxu0
    %v1015 = vpop.f32.mrf.mxu0
    %v1016 = vadd.f32 %v76, %v1015
    %v1017 = vpop.f32.mrf.mxu0
    %1018 = vmatprep.mubr.bf16.mxu0 0
    %1019 = vmatmul.mubr.bf16.gmra.mxu0 %v928
    %v1020 = vpop.f32.mrf.mxu0
    %v1021 = vadd.f32 %v76, %v1020
    %v1022 = vpop.f32.mrf.mxu0
    %v1023 = vpop.f32.mrf.mxu0
    %v1024 = vadd.f32 %v76, %v1023
    %v1025 = vpop.f32.mrf.mxu0
    %1026 = vdwg.mxu0
    %v1027 = vmax.f32 %v965, 0.0
    %v1028 = vmax.f32 %v968, 0.0
    %v1029 = vmax.f32 %v973, 0.0
    %v1030 = vmax.f32 %v976, 0.0
    %v1031 = vmax.f32 %v981, 0.0
    %v1032 = vmax.f32 %v984, 0.0
    %v1033 = vmax.f32 %v989, 0.0
    %v1034 = vmax.f32 %v992, 0.0
    %v1035 = vmax.f32 %v997, 0.0
    %v1036 = vmax.f32 %v1000, 0.0
    %v1037 = vmax.f32 %v1005, 0.0
    %v1038 = vmax.f32 %v1008, 0.0
    %v1039 = vmax.f32 %v1013, 0.0
    %v1040 = vmax.f32 %v1016, 0.0
    %v1041 = vmax.f32 %v1021, 0.0
    %v1042 = vmax.f32 %v1024, 0.0
    %v1043 = vpack.c.bf16 %v1028, %v1027
    %v1044 = vpack.c.bf16 %v1030, %v1029
    %v1045 = vpack.c.bf16 %v1032, %v1031
    %v1046 = vpack.c.bf16 %v1034, %v1033
    %v1047 = vpack.c.bf16 %v1036, %v1035
    %v1048 = vpack.c.bf16 %v1038, %v1037
    %v1049 = vpack.c.bf16 %v1040, %v1039
    %v1050 = vpack.c.bf16 %v1042, %v1041
    %v1052 = vsel %vm284, %v1043, 0
    %v1055 = vsel %vm284, %v1044, 0
    %v1058 = vsel %vm284, %v1045, 0
    %v1061 = vsel %vm284, %v1046, 0
    %v1064 = vsel %vm284, %v1047, 0
    %v1067 = vsel %vm284, %v1048, 0
    %v1070 = vsel %vm284, %v1049, 0
    %v1073 = vsel %vm284, %v1050, 0
    %1075 = vmatprep.subr.bf16.mxu0 0
    %1076 = vmatpush1.bf16.msra.mxu0 0
    %1077 = vmatprep.subr.bf16.mxu0 0
    %1078 = vmatpush1.bf16.msra.mxu0 0
    %1079 = vmatprep.subr.bf16.mxu0 0
    %1080 = vmatpush1.bf16.msra.mxu0 0
    %1081 = vmatprep.subr.bf16.mxu0 0
    %1082 = vmatpush1.bf16.msra.mxu0 0
    %1083 = vmatprep.subr.bf16.mxu0 0
    %1084 = vmatpush1.bf16.msra.mxu0 %v279
    %1085 = vmatprep.subr.bf16.mxu0 0
    %1086 = vmatpush1.bf16.msra.mxu0 %v278
    %1087 = vmatprep.subr.bf16.mxu0 0
    %1088 = vmatpush1.bf16.msra.mxu0 %v277
    %1089 = vmatprep.subr.bf16.mxu0 0
    %1090 = vmatpush1.bf16.msra.mxu0 %v276
    %1091 = vmatprep.subr.bf16.mxu0 0
    %1092 = vmatpush2.bf16.msra.mxu0 0
    %1093 = vmatprep.subr.bf16.mxu0 0
    %1094 = vmatpush2.bf16.msra.mxu0 0
    %1095 = vmatprep.subr.bf16.mxu0 0
    %1096 = vmatpush2.bf16.msra.mxu0 0
    %1097 = vmatprep.subr.bf16.mxu0 0
    %1098 = vmatpush2.bf16.msra.mxu0 0
    %1099 = vmatprep.subr.bf16.mxu0 0
    %1100 = vmatpush2.bf16.msra.mxu0 0
    %1101 = vmatprep.subr.bf16.mxu0 0
    %1102 = vmatpush2.bf16.msra.mxu0 0
    %1103 = vmatprep.subr.bf16.mxu0 0
    %1104 = vmatpush2.bf16.msra.mxu0 0
    %1105 = vmatprep.subr.bf16.mxu0 0
    %1106 = vmatpush2.bf16.msra.mxu0 0
    %1107 = vmatprep.mubr.bf16.mxu0 0
    %1108 = vmatmul.mubr.bf16.gmra.mxu0 %v1052
    %v1109 = vpop.f32.mrf.mxu0
    %v1110 = vadd.f32 %v258, %v1109
    %v1111 = vpop.f32.mrf.mxu0
    %v1112 = vpop.f32.mrf.mxu0
    %v1113 = vadd.f32 %v258, %v1112
    %v1114 = vpop.f32.mrf.mxu0
    %1115 = vmatprep.mubr.bf16.mxu0 0
    %1116 = vmatmul.mubr.bf16.gmra.mxu0 %v1055
    %v1117 = vpop.f32.mrf.mxu0
    %v1118 = vadd.f32 %v258, %v1117
    %v1119 = vpop.f32.mrf.mxu0
    %v1120 = vpop.f32.mrf.mxu0
    %v1121 = vadd.f32 %v258, %v1120
    %v1122 = vpop.f32.mrf.mxu0
    %1123 = vmatprep.mubr.bf16.mxu0 0
    %1124 = vmatmul.mubr.bf16.gmra.mxu0 %v1058
    %v1125 = vpop.f32.mrf.mxu0
    %v1126 = vadd.f32 %v258, %v1125
    %v1127 = vpop.f32.mrf.mxu0
    %v1128 = vpop.f32.mrf.mxu0
    %v1129 = vadd.f32 %v258, %v1128
    %v1130 = vpop.f32.mrf.mxu0
    %1131 = vmatprep.mubr.bf16.mxu0 0
    %1132 = vmatmul.mubr.bf16.gmra.mxu0 %v1061
    %v1133 = vpop.f32.mrf.mxu0
    %v1134 = vadd.f32 %v258, %v1133
    %v1135 = vpop.f32.mrf.mxu0
    %v1136 = vpop.f32.mrf.mxu0
    %v1137 = vadd.f32 %v258, %v1136
    %v1138 = vpop.f32.mrf.mxu0
    %1139 = vmatprep.mubr.bf16.mxu0 0
    %1140 = vmatmul.mubr.bf16.gmra.mxu0 %v1064
    %v1141 = vpop.f32.mrf.mxu0
    %v1142 = vadd.f32 %v258, %v1141
    %v1143 = vpop.f32.mrf.mxu0
    %v1144 = vpop.f32.mrf.mxu0
    %v1145 = vadd.f32 %v258, %v1144
    %v1146 = vpop.f32.mrf.mxu0
    %1147 = vmatprep.mubr.bf16.mxu0 0
    %1148 = vmatmul.mubr.bf16.gmra.mxu0 %v1067
    %v1149 = vpop.f32.mrf.mxu0
    %v1150 = vadd.f32 %v258, %v1149
    %v1151 = vpop.f32.mrf.mxu0
    %v1152 = vpop.f32.mrf.mxu0
    %v1153 = vadd.f32 %v258, %v1152
    %v1154 = vpop.f32.mrf.mxu0
    %1155 = vmatprep.mubr.bf16.mxu0 0
    %1156 = vmatmul.mubr.bf16.gmra.mxu0 %v1070
    %v1157 = vpop.f32.mrf.mxu0
    %v1158 = vadd.f32 %v258, %v1157
    %v1159 = vpop.f32.mrf.mxu0
    %v1160 = vpop.f32.mrf.mxu0
    %v1161 = vadd.f32 %v258, %v1160
    %v1162 = vpop.f32.mrf.mxu0
    %1163 = vmatprep.mubr.bf16.mxu0 0
    %1164 = vmatmul.mubr.bf16.gmra.mxu0 %v1073
    %v1165 = vpop.f32.mrf.mxu0
    %v1166 = vadd.f32 %v258, %v1165
    %v1167 = vpop.f32.mrf.mxu0
    %v1168 = vpop.f32.mrf.mxu0
    %v1169 = vadd.f32 %v258, %v1168
    %v1170 = vpop.f32.mrf.mxu0
    %1171 = vdwg.mxu0
    %v1172 = vmax.f32 %v1110, 0.0
    %v1173 = vmax.f32 %v1113, 0.0
    %v1174 = vmax.f32 %v1118, 0.0
    %v1175 = vmax.f32 %v1121, 0.0
    %v1176 = vmax.f32 %v1126, 0.0
    %v1177 = vmax.f32 %v1129, 0.0
    %v1178 = vmax.f32 %v1134, 0.0
    %v1179 = vmax.f32 %v1137, 0.0
    %v1180 = vmax.f32 %v1142, 0.0
    %v1181 = vmax.f32 %v1145, 0.0
    %v1182 = vmax.f32 %v1150, 0.0
    %v1183 = vmax.f32 %v1153, 0.0
    %v1184 = vmax.f32 %v1158, 0.0
    %v1185 = vmax.f32 %v1161, 0.0
    %v1186 = vmax.f32 %v1166, 0.0
    %v1187 = vmax.f32 %v1169, 0.0
    %v1188 = vpack.c.bf16 %v1173, %v1172
    %v1189 = vpack.c.bf16 %v1175, %v1174
    %v1190 = vpack.c.bf16 %v1177, %v1176
    %v1191 = vpack.c.bf16 %v1179, %v1178
    %v1192 = vpack.c.bf16 %v1181, %v1180
    %v1193 = vpack.c.bf16 %v1183, %v1182
    %v1194 = vpack.c.bf16 %v1185, %v1184
    %v1195 = vpack.c.bf16 %v1187, %v1186
    %v1197 = vsel %vm284, %v1188, 0
    %v1200 = vsel %vm284, %v1189, 0
    %v1203 = vsel %vm284, %v1190, 0
    %v1206 = vsel %vm284, %v1191, 0
    %v1209 = vsel %vm284, %v1192, 0
    %v1212 = vsel %vm284, %v1193, 0
    %v1215 = vsel %vm284, %v1194, 0
    %v1218 = vsel %vm284, %v1195, 0
    %1220 = vmatprep.subr.bf16.mxu0 0
    %1221 = vmatpush1.bf16.xpose.msra.mxu0 %v1218
    %1222 = vmatprep.subr.bf16.mxu0 0
    %1223 = vmatpush1.bf16.xpose.msra.mxu0 %v1215
    %1224 = vmatprep.subr.bf16.mxu0 0
    %1225 = vmatpush1.bf16.xpose.msra.mxu0 %v1212
    %1226 = vmatprep.subr.bf16.mxu0 0
    %1227 = vmatpush1.bf16.xpose.msra.mxu0 %v1209
    %1228 = vmatprep.subr.bf16.mxu0 0
    %1229 = vmatpush1.bf16.xpose.msra.mxu0 %v1206
    %1230 = vmatprep.subr.bf16.mxu0 0
    %1231 = vmatpush1.bf16.xpose.msra.mxu0 %v1203
    %1232 = vmatprep.subr.bf16.mxu0 0
    %1233 = vmatpush1.bf16.xpose.msra.mxu0 %v1200
    %1234 = vmatprep.subr.bf16.mxu0 0
    %1235 = vmatpush1.bf16.xpose.msra.mxu0 %v1197
    %1236 = vmatprep.subr.bf16.mxu0 0
    %1237 = vmatpush2.bf16.xpose.msra.mxu0 0
    %1238 = vmatprep.subr.bf16.mxu0 0
    %1239 = vmatpush2.bf16.xpose.msra.mxu0 0
    %1240 = vmatprep.subr.bf16.mxu0 0
    %1241 = vmatpush2.bf16.xpose.msra.mxu0 0
    %1242 = vmatprep.subr.bf16.mxu0 0
    %1243 = vmatpush2.bf16.xpose.msra.mxu0 0
    %1244 = vmatprep.subr.bf16.mxu0 0
    %1245 = vmatpush2.bf16.xpose.msra.mxu0 0
    %1246 = vmatprep.subr.bf16.mxu0 0
    %1247 = vmatpush2.bf16.xpose.msra.mxu0 0
    %1248 = vmatprep.subr.bf16.mxu0 0
    %1249 = vmatpush2.bf16.xpose.msra.mxu0 0
    %1250 = vmatprep.subr.bf16.mxu0 0
    %1251 = vmatpush2.bf16.xpose.msra.mxu0 0
    %1252 = vmatprep.mubr.bf16.mxu0 0
    %1253 = vmatmul.mubr.bf16.gmra.mxu0 %v436
    %v1254 = vpop.f32.mrf.mxu0
    %v1255 = vadd.f32 %v433, %v1254
    %v1256 = vpop.f32.mrf.mxu0
    %v1257 = vpop.f32.mrf.mxu0
    %v1258 = vpop.f32.mrf.mxu0
    %1259 = vdwg.mxu0
    %1260 = vst [vmem:[#allocation2 + $0x4] sm:$0x3] %v1255
    %v1261 = vld [vmem:[%s0 + $0x180] sm:$0xff]
    %v1262 = vld [vmem:[%s0 + $0x188] sm:$0xff]
    %v1263 = vld [vmem:[%s0 + $0x190] sm:$0xff]
    %v1264 = vld [vmem:[%s0 + $0x198] sm:$0xff]
    %v1265 = vld [vmem:[%s0 + $0x1a0] sm:$0xff]
    %v1266 = vld [vmem:[%s0 + $0x1a8] sm:$0xff]
    %v1267 = vld [vmem:[%s0 + $0x1b0] sm:$0xff]
    %v1268 = vld [vmem:[%s0 + $0x1b8] sm:$0xff]
    %v1269 = vld [vmem:[%s0 + $0x1c0] sm:$0xff]
    %v1270 = vld [vmem:[%s0 + $0x1c8] sm:$0xff]
    %v1271 = vld [vmem:[%s0 + $0x1d0] sm:$0xff]
    %v1272 = vld [vmem:[%s0 + $0x1d8] sm:$0xff]
    %v1273 = vld [vmem:[%s0 + $0x1e0] sm:$0xff]
    %v1274 = vld [vmem:[%s0 + $0x1e8] sm:$0xff]
    %v1275 = vld [vmem:[%s0 + $0x1f0] sm:$0xff]
    %v1276 = vld [vmem:[%s0 + $0x1f8] sm:$0xff]
    %v1277 = vpack.c.bf16 %v1262, %v1261
    %v1278 = vpack.c.bf16 %v1264, %v1263
    %v1279 = vpack.c.bf16 %v1266, %v1265
    %v1280 = vpack.c.bf16 %v1268, %v1267
    %v1281 = vpack.c.bf16 %v1270, %v1269
    %v1282 = vpack.c.bf16 %v1272, %v1271
    %v1283 = vpack.c.bf16 %v1274, %v1273
    %v1284 = vpack.c.bf16 %v1276, %v1275
    %v1286 = vsel %vm101, %v1277, 0
    %v1289 = vsel %vm101, %v1278, 0
    %v1292 = vsel %vm101, %v1279, 0
    %v1295 = vsel %vm101, %v1280, 0
    %v1298 = vsel %vm101, %v1281, 0
    %v1301 = vsel %vm101, %v1282, 0
    %v1304 = vsel %vm101, %v1283, 0
    %v1307 = vsel %vm101, %v1284, 0
    %1309 = vmatprep.subr.bf16.mxu0 0
    %1310 = vmatpush1.bf16.msra.mxu0 0
    %1311 = vmatprep.subr.bf16.mxu0 0
    %1312 = vmatpush1.bf16.msra.mxu0 0
    %1313 = vmatprep.subr.bf16.mxu0 0
    %1314 = vmatpush1.bf16.msra.mxu0 0
    %1315 = vmatprep.subr.bf16.mxu0 0
    %1316 = vmatpush1.bf16.msra.mxu0 0
    %1317 = vmatprep.subr.bf16.mxu0 0
    %1318 = vmatpush1.bf16.msra.mxu0 %v131
    %1319 = vmatprep.subr.bf16.mxu0 0
    %1320 = vmatpush1.bf16.msra.mxu0 %v96
    %1321 = vmatprep.subr.bf16.mxu0 0
    %1322 = vmatpush1.bf16.msra.mxu0 %v95
    %1323 = vmatprep.subr.bf16.mxu0 0
    %1324 = vmatpush1.bf16.msra.mxu0 %v94
    %1325 = vmatprep.subr.bf16.mxu0 0
    %1326 = vmatpush2.bf16.msra.mxu0 0
    %1327 = vmatprep.subr.bf16.mxu0 0
    %1328 = vmatpush2.bf16.msra.mxu0 0
    %1329 = vmatprep.subr.bf16.mxu0 0
    %1330 = vmatpush2.bf16.msra.mxu0 0
    %1331 = vmatprep.subr.bf16.mxu0 0
    %1332 = vmatpush2.bf16.msra.mxu0 0
    %1333 = vmatprep.subr.bf16.mxu0 0
    %1334 = vmatpush2.bf16.msra.mxu0 0
    %1335 = vmatprep.subr.bf16.mxu0 0
    %1336 = vmatpush2.bf16.msra.mxu0 0
    %1337 = vmatprep.subr.bf16.mxu0 0
    %1338 = vmatpush2.bf16.msra.mxu0 0
    %1339 = vmatprep.subr.bf16.mxu0 0
    %1340 = vmatpush2.bf16.msra.mxu0 0
    %1341 = vmatprep.mubr.bf16.mxu0 0
    %1342 = vmatmul.mubr.bf16.gmra.mxu0 %v1286
    %v1343 = vpop.f32.mrf.mxu0
    %v1344 = vadd.f32 %v76, %v1343
    %v1345 = vpop.f32.mrf.mxu0
    %v1346 = vpop.f32.mrf.mxu0
    %v1347 = vadd.f32 %v76, %v1346
    %v1348 = vpop.f32.mrf.mxu0
    %1349 = vmatprep.mubr.bf16.mxu0 0
    %1350 = vmatmul.mubr.bf16.gmra.mxu0 %v1289
    %v1351 = vpop.f32.mrf.mxu0
    %v1352 = vadd.f32 %v76, %v1351
    %v1353 = vpop.f32.mrf.mxu0
    %v1354 = vpop.f32.mrf.mxu0
    %v1355 = vadd.f32 %v76, %v1354
    %v1356 = vpop.f32.mrf.mxu0
    %1357 = vmatprep.mubr.bf16.mxu0 0
    %1358 = vmatmul.mubr.bf16.gmra.mxu0 %v1292
    %v1359 = vpop.f32.mrf.mxu0
    %v1360 = vadd.f32 %v76, %v1359
    %v1361 = vpop.f32.mrf.mxu0
    %v1362 = vpop.f32.mrf.mxu0
    %v1363 = vadd.f32 %v76, %v1362
    %v1364 = vpop.f32.mrf.mxu0
    %1365 = vmatprep.mubr.bf16.mxu0 0
    %1366 = vmatmul.mubr.bf16.gmra.mxu0 %v1295
    %v1367 = vpop.f32.mrf.mxu0
    %v1368 = vadd.f32 %v76, %v1367
    %v1369 = vpop.f32.mrf.mxu0
    %v1370 = vpop.f32.mrf.mxu0
    %v1371 = vadd.f32 %v76, %v1370
    %v1372 = vpop.f32.mrf.mxu0
    %1373 = vmatprep.mubr.bf16.mxu0 0
    %1374 = vmatmul.mubr.bf16.gmra.mxu0 %v1298
    %v1375 = vpop.f32.mrf.mxu0
    %v1376 = vadd.f32 %v76, %v1375
    %v1377 = vpop.f32.mrf.mxu0
    %v1378 = vpop.f32.mrf.mxu0
    %v1379 = vadd.f32 %v76, %v1378
    %v1380 = vpop.f32.mrf.mxu0
    %1381 = vmatprep.mubr.bf16.mxu0 0
    %1382 = vmatmul.mubr.bf16.gmra.mxu0 %v1301
    %v1383 = vpop.f32.mrf.mxu0
    %v1384 = vadd.f32 %v76, %v1383
    %v1385 = vpop.f32.mrf.mxu0
    %v1386 = vpop.f32.mrf.mxu0
    %v1387 = vadd.f32 %v76, %v1386
    %v1388 = vpop.f32.mrf.mxu0
    %1389 = vmatprep.mubr.bf16.mxu0 0
    %1390 = vmatmul.mubr.bf16.gmra.mxu0 %v1304
    %v1391 = vpop.f32.mrf.mxu0
    %v1392 = vadd.f32 %v76, %v1391
    %v1393 = vpop.f32.mrf.mxu0
    %v1394 = vpop.f32.mrf.mxu0
    %v1395 = vadd.f32 %v76, %v1394
    %v1396 = vpop.f32.mrf.mxu0
    %1397 = vmatprep.mubr.bf16.mxu0 0
    %1398 = vmatmul.mubr.bf16.gmra.mxu0 %v1307
    %v1399 = vpop.f32.mrf.mxu0
    %v1400 = vadd.f32 %v76, %v1399
    %v1401 = vpop.f32.mrf.mxu0
    %v1402 = vpop.f32.mrf.mxu0
    %v1403 = vadd.f32 %v76, %v1402
    %v1404 = vpop.f32.mrf.mxu0
    %1405 = vdwg.mxu0
    %v1406 = vmax.f32 %v1344, 0.0
    %v1407 = vmax.f32 %v1347, 0.0
    %v1408 = vmax.f32 %v1352, 0.0
    %v1409 = vmax.f32 %v1355, 0.0
    %v1410 = vmax.f32 %v1360, 0.0
    %v1411 = vmax.f32 %v1363, 0.0
    %v1412 = vmax.f32 %v1368, 0.0
    %v1413 = vmax.f32 %v1371, 0.0
    %v1414 = vmax.f32 %v1376, 0.0
    %v1415 = vmax.f32 %v1379, 0.0
    %v1416 = vmax.f32 %v1384, 0.0
    %v1417 = vmax.f32 %v1387, 0.0
    %v1418 = vmax.f32 %v1392, 0.0
    %v1419 = vmax.f32 %v1395, 0.0
    %v1420 = vmax.f32 %v1400, 0.0
    %v1421 = vmax.f32 %v1403, 0.0
    %v1422 = vpack.c.bf16 %v1407, %v1406
    %v1423 = vpack.c.bf16 %v1409, %v1408
    %v1424 = vpack.c.bf16 %v1411, %v1410
    %v1425 = vpack.c.bf16 %v1413, %v1412
    %v1426 = vpack.c.bf16 %v1415, %v1414
    %v1427 = vpack.c.bf16 %v1417, %v1416
    %v1428 = vpack.c.bf16 %v1419, %v1418
    %v1429 = vpack.c.bf16 %v1421, %v1420
    %v1431 = vsel %vm284, %v1422, 0
    %v1434 = vsel %vm284, %v1423, 0
    %v1437 = vsel %vm284, %v1424, 0
    %v1440 = vsel %vm284, %v1425, 0
    %v1443 = vsel %vm284, %v1426, 0
    %v1446 = vsel %vm284, %v1427, 0
    %v1449 = vsel %vm284, %v1428, 0
    %v1452 = vsel %vm284, %v1429, 0
    %1454 = vmatprep.subr.bf16.mxu0 0
    %1455 = vmatpush1.bf16.msra.mxu0 0
    %1456 = vmatprep.subr.bf16.mxu0 0
    %1457 = vmatpush1.bf16.msra.mxu0 0
    %1458 = vmatprep.subr.bf16.mxu0 0
    %1459 = vmatpush1.bf16.msra.mxu0 0
    %1460 = vmatprep.subr.bf16.mxu0 0
    %1461 = vmatpush1.bf16.msra.mxu0 0
    %1462 = vmatprep.subr.bf16.mxu0 0
    %1463 = vmatpush1.bf16.msra.mxu0 %v279
    %1464 = vmatprep.subr.bf16.mxu0 0
    %1465 = vmatpush1.bf16.msra.mxu0 %v278
    %1466 = vmatprep.subr.bf16.mxu0 0
    %1467 = vmatpush1.bf16.msra.mxu0 %v277
    %1468 = vmatprep.subr.bf16.mxu0 0
    %1469 = vmatpush1.bf16.msra.mxu0 %v276
    %1470 = vmatprep.subr.bf16.mxu0 0
    %1471 = vmatpush2.bf16.msra.mxu0 0
    %1472 = vmatprep.subr.bf16.mxu0 0
    %1473 = vmatpush2.bf16.msra.mxu0 0
    %1474 = vmatprep.subr.bf16.mxu0 0
    %1475 = vmatpush2.bf16.msra.mxu0 0
    %1476 = vmatprep.subr.bf16.mxu0 0
    %1477 = vmatpush2.bf16.msra.mxu0 0
    %1478 = vmatprep.subr.bf16.mxu0 0
    %1479 = vmatpush2.bf16.msra.mxu0 0
    %1480 = vmatprep.subr.bf16.mxu0 0
    %1481 = vmatpush2.bf16.msra.mxu0 0
    %1482 = vmatprep.subr.bf16.mxu0 0
    %1483 = vmatpush2.bf16.msra.mxu0 0
    %1484 = vmatprep.subr.bf16.mxu0 0
    %1485 = vmatpush2.bf16.msra.mxu0 0
    %1486 = vmatprep.mubr.bf16.mxu0 0
    %1487 = vmatmul.mubr.bf16.gmra.mxu0 %v1431
    %v1488 = vpop.f32.mrf.mxu0
    %v1489 = vadd.f32 %v258, %v1488
    %v1490 = vpop.f32.mrf.mxu0
    %v1491 = vpop.f32.mrf.mxu0
    %v1492 = vadd.f32 %v258, %v1491
    %v1493 = vpop.f32.mrf.mxu0
    %1494 = vmatprep.mubr.bf16.mxu0 0
    %1495 = vmatmul.mubr.bf16.gmra.mxu0 %v1434
    %v1496 = vpop.f32.mrf.mxu0
    %v1497 = vadd.f32 %v258, %v1496
    %v1498 = vpop.f32.mrf.mxu0
    %v1499 = vpop.f32.mrf.mxu0
    %v1500 = vadd.f32 %v258, %v1499
    %v1501 = vpop.f32.mrf.mxu0
    %1502 = vmatprep.mubr.bf16.mxu0 0
    %1503 = vmatmul.mubr.bf16.gmra.mxu0 %v1437
    %v1504 = vpop.f32.mrf.mxu0
    %v1505 = vadd.f32 %v258, %v1504
    %v1506 = vpop.f32.mrf.mxu0
    %v1507 = vpop.f32.mrf.mxu0
    %v1508 = vadd.f32 %v258, %v1507
    %v1509 = vpop.f32.mrf.mxu0
    %1510 = vmatprep.mubr.bf16.mxu0 0
    %1511 = vmatmul.mubr.bf16.gmra.mxu0 %v1440
    %v1512 = vpop.f32.mrf.mxu0
    %v1513 = vadd.f32 %v258, %v1512
    %v1514 = vpop.f32.mrf.mxu0
    %v1515 = vpop.f32.mrf.mxu0
    %v1516 = vadd.f32 %v258, %v1515
    %v1517 = vpop.f32.mrf.mxu0
    %1518 = vmatprep.mubr.bf16.mxu0 0
    %1519 = vmatmul.mubr.bf16.gmra.mxu0 %v1443
    %v1520 = vpop.f32.mrf.mxu0
    %v1521 = vadd.f32 %v258, %v1520
    %v1522 = vpop.f32.mrf.mxu0
    %v1523 = vpop.f32.mrf.mxu0
    %v1524 = vadd.f32 %v258, %v1523
    %v1525 = vpop.f32.mrf.mxu0
    %1526 = vmatprep.mubr.bf16.mxu0 0
    %1527 = vmatmul.mubr.bf16.gmra.mxu0 %v1446
    %v1528 = vpop.f32.mrf.mxu0
    %v1529 = vadd.f32 %v258, %v1528
    %v1530 = vpop.f32.mrf.mxu0
    %v1531 = vpop.f32.mrf.mxu0
    %v1532 = vadd.f32 %v258, %v1531
    %v1533 = vpop.f32.mrf.mxu0
    %1534 = vmatprep.mubr.bf16.mxu0 0
    %1535 = vmatmul.mubr.bf16.gmra.mxu0 %v1449
    %v1536 = vpop.f32.mrf.mxu0
    %v1537 = vadd.f32 %v258, %v1536
    %v1538 = vpop.f32.mrf.mxu0
    %v1539 = vpop.f32.mrf.mxu0
    %v1540 = vadd.f32 %v258, %v1539
    %v1541 = vpop.f32.mrf.mxu0
    %1542 = vmatprep.mubr.bf16.mxu0 0
    %1543 = vmatmul.mubr.bf16.gmra.mxu0 %v1452
    %v1544 = vpop.f32.mrf.mxu0
    %v1545 = vadd.f32 %v258, %v1544
    %v1546 = vpop.f32.mrf.mxu0
    %v1547 = vpop.f32.mrf.mxu0
    %v1548 = vadd.f32 %v258, %v1547
    %v1549 = vpop.f32.mrf.mxu0
    %1550 = vdwg.mxu0
    %v1551 = vmax.f32 %v1489, 0.0
    %v1552 = vmax.f32 %v1492, 0.0
    %v1553 = vmax.f32 %v1497, 0.0
    %v1554 = vmax.f32 %v1500, 0.0
    %v1555 = vmax.f32 %v1505, 0.0
    %v1556 = vmax.f32 %v1508, 0.0
    %v1557 = vmax.f32 %v1513, 0.0
    %v1558 = vmax.f32 %v1516, 0.0
    %v1559 = vmax.f32 %v1521, 0.0
    %v1560 = vmax.f32 %v1524, 0.0
    %v1561 = vmax.f32 %v1529, 0.0
    %v1562 = vmax.f32 %v1532, 0.0
    %v1563 = vmax.f32 %v1537, 0.0
    %v1564 = vmax.f32 %v1540, 0.0
    %v1565 = vmax.f32 %v1545, 0.0
    %v1566 = vmax.f32 %v1548, 0.0
    %v1567 = vpack.c.bf16 %v1552, %v1551
    %v1568 = vpack.c.bf16 %v1554, %v1553
    %v1569 = vpack.c.bf16 %v1556, %v1555
    %v1570 = vpack.c.bf16 %v1558, %v1557
    %v1571 = vpack.c.bf16 %v1560, %v1559
    %v1572 = vpack.c.bf16 %v1562, %v1561
    %v1573 = vpack.c.bf16 %v1564, %v1563
    %v1574 = vpack.c.bf16 %v1566, %v1565
    %v1576 = vsel %vm284, %v1567, 0
    %v1579 = vsel %vm284, %v1568, 0
    %v1582 = vsel %vm284, %v1569, 0
    %v1585 = vsel %vm284, %v1570, 0
    %v1588 = vsel %vm284, %v1571, 0
    %v1591 = vsel %vm284, %v1572, 0
    %v1594 = vsel %vm284, %v1573, 0
    %v1597 = vsel %vm284, %v1574, 0
    %1599 = vmatprep.subr.bf16.mxu0 0
    %1600 = vmatpush1.bf16.xpose.msra.mxu0 %v1597
    %1601 = vmatprep.subr.bf16.mxu0 0
    %1602 = vmatpush1.bf16.xpose.msra.mxu0 %v1594
    %1603 = vmatprep.subr.bf16.mxu0 0
    %1604 = vmatpush1.bf16.xpose.msra.mxu0 %v1591
    %1605 = vmatprep.subr.bf16.mxu0 0
    %1606 = vmatpush1.bf16.xpose.msra.mxu0 %v1588
    %1607 = vmatprep.subr.bf16.mxu0 0
    %1608 = vmatpush1.bf16.xpose.msra.mxu0 %v1585
    %1609 = vmatprep.subr.bf16.mxu0 0
    %1610 = vmatpush1.bf16.xpose.msra.mxu0 %v1582
    %1611 = vmatprep.subr.bf16.mxu0 0
    %1612 = vmatpush1.bf16.xpose.msra.mxu0 %v1579
    %1613 = vmatprep.subr.bf16.mxu0 0
    %1614 = vmatpush1.bf16.xpose.msra.mxu0 %v1576
    %1615 = vmatprep.subr.bf16.mxu0 0
    %1616 = vmatpush2.bf16.xpose.msra.mxu0 0
    %1617 = vmatprep.subr.bf16.mxu0 0
    %1618 = vmatpush2.bf16.xpose.msra.mxu0 0
    %1619 = vmatprep.subr.bf16.mxu0 0
    %1620 = vmatpush2.bf16.xpose.msra.mxu0 0
    %1621 = vmatprep.subr.bf16.mxu0 0
    %1622 = vmatpush2.bf16.xpose.msra.mxu0 0
    %1623 = vmatprep.subr.bf16.mxu0 0
    %1624 = vmatpush2.bf16.xpose.msra.mxu0 0
    %1625 = vmatprep.subr.bf16.mxu0 0
    %1626 = vmatpush2.bf16.xpose.msra.mxu0 0
    %1627 = vmatprep.subr.bf16.mxu0 0
    %1628 = vmatpush2.bf16.xpose.msra.mxu0 0
    %1629 = vmatprep.subr.bf16.mxu0 0
    %1630 = vmatpush2.bf16.xpose.msra.mxu0 0
    %1631 = vmatprep.mubr.bf16.mxu0 0
    %1632 = vmatmul.mubr.bf16.gmra.mxu0 %v436
    %v1633 = vpop.f32.mrf.mxu0
    %v1634 = vadd.f32 %v433, %v1633
    %v1635 = vpop.f32.mrf.mxu0
    %v1636 = vpop.f32.mrf.mxu0
    %v1637 = vpop.f32.mrf.mxu0
    %1638 = vdwg.mxu0
    %1639 = vst [vmem:[#allocation2 + $0x6] sm:$0x3] %v1634
    %v1640 = vld [vmem:[%s0 + $0x200] sm:$0xff]
    %v1641 = vld [vmem:[%s0 + $0x208] sm:$0xff]
    %v1642 = vld [vmem:[%s0 + $0x210] sm:$0xff]
    %v1643 = vld [vmem:[%s0 + $0x218] sm:$0xff]
    %v1644 = vld [vmem:[%s0 + $0x220] sm:$0xff]
    %v1645 = vld [vmem:[%s0 + $0x228] sm:$0xff]
    %v1646 = vld [vmem:[%s0 + $0x230] sm:$0xff]
    %v1647 = vld [vmem:[%s0 + $0x238] sm:$0xff]
    %v1648 = vld [vmem:[%s0 + $0x240] sm:$0xff]
    %v1649 = vld [vmem:[%s0 + $0x248] sm:$0xff]
    %v1650 = vld [vmem:[%s0 + $0x250] sm:$0xff]
    %v1651 = vld [vmem:[%s0 + $0x258] sm:$0xff]
    %v1652 = vld [vmem:[%s0 + $0x260] sm:$0xff]
    %v1653 = vld [vmem:[%s0 + $0x268] sm:$0xff]
    %v1654 = vld [vmem:[%s0 + $0x270] sm:$0xff]
    %v1655 = vld [vmem:[%s0 + $0x278] sm:$0xff]
    %v1656 = vpack.c.bf16 %v1641, %v1640
    %v1657 = vpack.c.bf16 %v1643, %v1642
    %v1658 = vpack.c.bf16 %v1645, %v1644
    %v1659 = vpack.c.bf16 %v1647, %v1646
    %v1660 = vpack.c.bf16 %v1649, %v1648
    %v1661 = vpack.c.bf16 %v1651, %v1650
    %v1662 = vpack.c.bf16 %v1653, %v1652
    %v1663 = vpack.c.bf16 %v1655, %v1654
    %v1665 = vsel %vm101, %v1656, 0
    %v1668 = vsel %vm101, %v1657, 0
    %v1671 = vsel %vm101, %v1658, 0
    %v1674 = vsel %vm101, %v1659, 0
    %v1677 = vsel %vm101, %v1660, 0
    %v1680 = vsel %vm101, %v1661, 0
    %v1683 = vsel %vm101, %v1662, 0
    %v1686 = vsel %vm101, %v1663, 0
    %1688 = vmatprep.subr.bf16.mxu0 0
    %1689 = vmatpush1.bf16.msra.mxu0 0
    %1690 = vmatprep.subr.bf16.mxu0 0
    %1691 = vmatpush1.bf16.msra.mxu0 0
    %1692 = vmatprep.subr.bf16.mxu0 0
    %1693 = vmatpush1.bf16.msra.mxu0 0
    %1694 = vmatprep.subr.bf16.mxu0 0
    %1695 = vmatpush1.bf16.msra.mxu0 0
    %1696 = vmatprep.subr.bf16.mxu0 0
    %1697 = vmatpush1.bf16.msra.mxu0 %v131
    %1698 = vmatprep.subr.bf16.mxu0 0
    %1699 = vmatpush1.bf16.msra.mxu0 %v96
    %1700 = vmatprep.subr.bf16.mxu0 0
    %1701 = vmatpush1.bf16.msra.mxu0 %v95
    %1702 = vmatprep.subr.bf16.mxu0 0
    %1703 = vmatpush1.bf16.msra.mxu0 %v94
    %1704 = vmatprep.subr.bf16.mxu0 0
    %1705 = vmatpush2.bf16.msra.mxu0 0
    %1706 = vmatprep.subr.bf16.mxu0 0
    %1707 = vmatpush2.bf16.msra.mxu0 0
    %1708 = vmatprep.subr.bf16.mxu0 0
    %1709 = vmatpush2.bf16.msra.mxu0 0
    %1710 = vmatprep.subr.bf16.mxu0 0
    %1711 = vmatpush2.bf16.msra.mxu0 0
    %1712 = vmatprep.subr.bf16.mxu0 0
    %1713 = vmatpush2.bf16.msra.mxu0 0
    %1714 = vmatprep.subr.bf16.mxu0 0
    %1715 = vmatpush2.bf16.msra.mxu0 0
    %1716 = vmatprep.subr.bf16.mxu0 0
    %1717 = vmatpush2.bf16.msra.mxu0 0
    %1718 = vmatprep.subr.bf16.mxu0 0
    %1719 = vmatpush2.bf16.msra.mxu0 0
    %1720 = vmatprep.mubr.bf16.mxu0 0
    %1721 = vmatmul.mubr.bf16.gmra.mxu0 %v1665
    %v1722 = vpop.f32.mrf.mxu0
    %v1723 = vadd.f32 %v76, %v1722
    %v1724 = vpop.f32.mrf.mxu0
    %v1725 = vpop.f32.mrf.mxu0
    %v1726 = vadd.f32 %v76, %v1725
    %v1727 = vpop.f32.mrf.mxu0
    %1728 = vmatprep.mubr.bf16.mxu0 0
    %1729 = vmatmul.mubr.bf16.gmra.mxu0 %v1668
    %v1730 = vpop.f32.mrf.mxu0
    %v1731 = vadd.f32 %v76, %v1730
    %v1732 = vpop.f32.mrf.mxu0
    %v1733 = vpop.f32.mrf.mxu0
    %v1734 = vadd.f32 %v76, %v1733
    %v1735 = vpop.f32.mrf.mxu0
    %1736 = vmatprep.mubr.bf16.mxu0 0
    %1737 = vmatmul.mubr.bf16.gmra.mxu0 %v1671
    %v1738 = vpop.f32.mrf.mxu0
    %v1739 = vadd.f32 %v76, %v1738
    %v1740 = vpop.f32.mrf.mxu0
    %v1741 = vpop.f32.mrf.mxu0
    %v1742 = vadd.f32 %v76, %v1741
    %v1743 = vpop.f32.mrf.mxu0
    %1744 = vmatprep.mubr.bf16.mxu0 0
    %1745 = vmatmul.mubr.bf16.gmra.mxu0 %v1674
    %v1746 = vpop.f32.mrf.mxu0
    %v1747 = vadd.f32 %v76, %v1746
    %v1748 = vpop.f32.mrf.mxu0
    %v1749 = vpop.f32.mrf.mxu0
    %v1750 = vadd.f32 %v76, %v1749
    %v1751 = vpop.f32.mrf.mxu0
    %1752 = vmatprep.mubr.bf16.mxu0 0
    %1753 = vmatmul.mubr.bf16.gmra.mxu0 %v1677
    %v1754 = vpop.f32.mrf.mxu0
    %v1755 = vadd.f32 %v76, %v1754
    %v1756 = vpop.f32.mrf.mxu0
    %v1757 = vpop.f32.mrf.mxu0
    %v1758 = vadd.f32 %v76, %v1757
    %v1759 = vpop.f32.mrf.mxu0
    %1760 = vmatprep.mubr.bf16.mxu0 0
    %1761 = vmatmul.mubr.bf16.gmra.mxu0 %v1680
    %v1762 = vpop.f32.mrf.mxu0
    %v1763 = vadd.f32 %v76, %v1762
    %v1764 = vpop.f32.mrf.mxu0
    %v1765 = vpop.f32.mrf.mxu0
    %v1766 = vadd.f32 %v76, %v1765
    %v1767 = vpop.f32.mrf.mxu0
    %1768 = vmatprep.mubr.bf16.mxu0 0
    %1769 = vmatmul.mubr.bf16.gmra.mxu0 %v1683
    %v1770 = vpop.f32.mrf.mxu0
    %v1771 = vadd.f32 %v76, %v1770
    %v1772 = vpop.f32.mrf.mxu0
    %v1773 = vpop.f32.mrf.mxu0
    %v1774 = vadd.f32 %v76, %v1773
    %v1775 = vpop.f32.mrf.mxu0
    %1776 = vmatprep.mubr.bf16.mxu0 0
    %1777 = vmatmul.mubr.bf16.gmra.mxu0 %v1686
    %v1778 = vpop.f32.mrf.mxu0
    %v1779 = vadd.f32 %v76, %v1778
    %v1780 = vpop.f32.mrf.mxu0
    %v1781 = vpop.f32.mrf.mxu0
    %v1782 = vadd.f32 %v76, %v1781
    %v1783 = vpop.f32.mrf.mxu0
    %1784 = vdwg.mxu0
    %v1785 = vmax.f32 %v1723, 0.0
    %v1786 = vmax.f32 %v1726, 0.0
    %v1787 = vmax.f32 %v1731, 0.0
    %v1788 = vmax.f32 %v1734, 0.0
    %v1789 = vmax.f32 %v1739, 0.0
    %v1790 = vmax.f32 %v1742, 0.0
    %v1791 = vmax.f32 %v1747, 0.0
    %v1792 = vmax.f32 %v1750, 0.0
    %v1793 = vmax.f32 %v1755, 0.0
    %v1794 = vmax.f32 %v1758, 0.0
    %v1795 = vmax.f32 %v1763, 0.0
    %v1796 = vmax.f32 %v1766, 0.0
    %v1797 = vmax.f32 %v1771, 0.0
    %v1798 = vmax.f32 %v1774, 0.0
    %v1799 = vmax.f32 %v1779, 0.0
    %v1800 = vmax.f32 %v1782, 0.0
    %v1801 = vpack.c.bf16 %v1786, %v1785
    %v1802 = vpack.c.bf16 %v1788, %v1787
    %v1803 = vpack.c.bf16 %v1790, %v1789
    %v1804 = vpack.c.bf16 %v1792, %v1791
    %v1805 = vpack.c.bf16 %v1794, %v1793
    %v1806 = vpack.c.bf16 %v1796, %v1795
    %v1807 = vpack.c.bf16 %v1798, %v1797
    %v1808 = vpack.c.bf16 %v1800, %v1799
    %v1810 = vsel %vm284, %v1801, 0
    %v1813 = vsel %vm284, %v1802, 0
    %v1816 = vsel %vm284, %v1803, 0
    %v1819 = vsel %vm284, %v1804, 0
    %v1822 = vsel %vm284, %v1805, 0
    %v1825 = vsel %vm284, %v1806, 0
    %v1828 = vsel %vm284, %v1807, 0
    %v1831 = vsel %vm284, %v1808, 0
    %1833 = vmatprep.subr.bf16.mxu0 0
    %1834 = vmatpush1.bf16.msra.mxu0 0
    %1835 = vmatprep.subr.bf16.mxu0 0
    %1836 = vmatpush1.bf16.msra.mxu0 0
    %1837 = vmatprep.subr.bf16.mxu0 0
    %1838 = vmatpush1.bf16.msra.mxu0 0
    %1839 = vmatprep.subr.bf16.mxu0 0
    %1840 = vmatpush1.bf16.msra.mxu0 0
    %1841 = vmatprep.subr.bf16.mxu0 0
    %1842 = vmatpush1.bf16.msra.mxu0 %v279
    %1843 = vmatprep.subr.bf16.mxu0 0
    %1844 = vmatpush1.bf16.msra.mxu0 %v278
    %1845 = vmatprep.subr.bf16.mxu0 0
    %1846 = vmatpush1.bf16.msra.mxu0 %v277
    %1847 = vmatprep.subr.bf16.mxu0 0
    %1848 = vmatpush1.bf16.msra.mxu0 %v276
    %1849 = vmatprep.subr.bf16.mxu0 0
    %1850 = vmatpush2.bf16.msra.mxu0 0
    %1851 = vmatprep.subr.bf16.mxu0 0
    %1852 = vmatpush2.bf16.msra.mxu0 0
    %1853 = vmatprep.subr.bf16.mxu0 0
    %1854 = vmatpush2.bf16.msra.mxu0 0
    %1855 = vmatprep.subr.bf16.mxu0 0
    %1856 = vmatpush2.bf16.msra.mxu0 0
    %1857 = vmatprep.subr.bf16.mxu0 0
    %1858 = vmatpush2.bf16.msra.mxu0 0
    %1859 = vmatprep.subr.bf16.mxu0 0
    %1860 = vmatpush2.bf16.msra.mxu0 0
    %1861 = vmatprep.subr.bf16.mxu0 0
    %1862 = vmatpush2.bf16.msra.mxu0 0
    %1863 = vmatprep.subr.bf16.mxu0 0
    %1864 = vmatpush2.bf16.msra.mxu0 0
    %1865 = vmatprep.mubr.bf16.mxu0 0
    %1866 = vmatmul.mubr.bf16.gmra.mxu0 %v1810
    %v1867 = vpop.f32.mrf.mxu0
    %v1868 = vadd.f32 %v258, %v1867
    %v1869 = vpop.f32.mrf.mxu0
    %v1870 = vpop.f32.mrf.mxu0
    %v1871 = vadd.f32 %v258, %v1870
    %v1872 = vpop.f32.mrf.mxu0
    %1873 = vmatprep.mubr.bf16.mxu0 0
    %1874 = vmatmul.mubr.bf16.gmra.mxu0 %v1813
    %v1875 = vpop.f32.mrf.mxu0
    %v1876 = vadd.f32 %v258, %v1875
    %v1877 = vpop.f32.mrf.mxu0
    %v1878 = vpop.f32.mrf.mxu0
    %v1879 = vadd.f32 %v258, %v1878
    %v1880 = vpop.f32.mrf.mxu0
    %1881 = vmatprep.mubr.bf16.mxu0 0
    %1882 = vmatmul.mubr.bf16.gmra.mxu0 %v1816
    %v1883 = vpop.f32.mrf.mxu0
    %v1884 = vadd.f32 %v258, %v1883
    %v1885 = vpop.f32.mrf.mxu0
    %v1886 = vpop.f32.mrf.mxu0
    %v1887 = vadd.f32 %v258, %v1886
    %v1888 = vpop.f32.mrf.mxu0
    %1889 = vmatprep.mubr.bf16.mxu0 0
    %1890 = vmatmul.mubr.bf16.gmra.mxu0 %v1819
    %v1891 = vpop.f32.mrf.mxu0
    %v1892 = vadd.f32 %v258, %v1891
    %v1893 = vpop.f32.mrf.mxu0
    %v1894 = vpop.f32.mrf.mxu0
    %v1895 = vadd.f32 %v258, %v1894
    %v1896 = vpop.f32.mrf.mxu0
    %1897 = vmatprep.mubr.bf16.mxu0 0
    %1898 = vmatmul.mubr.bf16.gmra.mxu0 %v1822
    %v1899 = vpop.f32.mrf.mxu0
    %v1900 = vadd.f32 %v258, %v1899
    %v1901 = vpop.f32.mrf.mxu0
    %v1902 = vpop.f32.mrf.mxu0
    %v1903 = vadd.f32 %v258, %v1902
    %v1904 = vpop.f32.mrf.mxu0
    %1905 = vmatprep.mubr.bf16.mxu0 0
    %1906 = vmatmul.mubr.bf16.gmra.mxu0 %v1825
    %v1907 = vpop.f32.mrf.mxu0
    %v1908 = vadd.f32 %v258, %v1907
    %v1909 = vpop.f32.mrf.mxu0
    %v1910 = vpop.f32.mrf.mxu0
    %v1911 = vadd.f32 %v258, %v1910
    %v1912 = vpop.f32.mrf.mxu0
    %1913 = vmatprep.mubr.bf16.mxu0 0
    %1914 = vmatmul.mubr.bf16.gmra.mxu0 %v1828
    %v1915 = vpop.f32.mrf.mxu0
    %v1916 = vadd.f32 %v258, %v1915
    %v1917 = vpop.f32.mrf.mxu0
    %v1918 = vpop.f32.mrf.mxu0
    %v1919 = vadd.f32 %v258, %v1918
    %v1920 = vpop.f32.mrf.mxu0
    %1921 = vmatprep.mubr.bf16.mxu0 0
    %1922 = vmatmul.mubr.bf16.gmra.mxu0 %v1831
    %v1923 = vpop.f32.mrf.mxu0
    %v1924 = vadd.f32 %v258, %v1923
    %v1925 = vpop.f32.mrf.mxu0
    %v1926 = vpop.f32.mrf.mxu0
    %v1927 = vadd.f32 %v258, %v1926
    %v1928 = vpop.f32.mrf.mxu0
    %1929 = vdwg.mxu0
    %v1930 = vmax.f32 %v1868, 0.0
    %v1931 = vmax.f32 %v1871, 0.0
    %v1932 = vmax.f32 %v1876, 0.0
    %v1933 = vmax.f32 %v1879, 0.0
    %v1934 = vmax.f32 %v1884, 0.0
    %v1935 = vmax.f32 %v1887, 0.0
    %v1936 = vmax.f32 %v1892, 0.0
    %v1937 = vmax.f32 %v1895, 0.0
    %v1938 = vmax.f32 %v1900, 0.0
    %v1939 = vmax.f32 %v1903, 0.0
    %v1940 = vmax.f32 %v1908, 0.0
    %v1941 = vmax.f32 %v1911, 0.0
    %v1942 = vmax.f32 %v1916, 0.0
    %v1943 = vmax.f32 %v1919, 0.0
    %v1944 = vmax.f32 %v1924, 0.0
    %v1945 = vmax.f32 %v1927, 0.0
    %v1946 = vpack.c.bf16 %v1931, %v1930
    %v1947 = vpack.c.bf16 %v1933, %v1932
    %v1948 = vpack.c.bf16 %v1935, %v1934
    %v1949 = vpack.c.bf16 %v1937, %v1936
    %v1950 = vpack.c.bf16 %v1939, %v1938
    %v1951 = vpack.c.bf16 %v1941, %v1940
    %v1952 = vpack.c.bf16 %v1943, %v1942
    %v1953 = vpack.c.bf16 %v1945, %v1944
    %v1955 = vsel %vm284, %v1946, 0
    %v1958 = vsel %vm284, %v1947, 0
    %v1961 = vsel %vm284, %v1948, 0
    %v1964 = vsel %vm284, %v1949, 0
    %v1967 = vsel %vm284, %v1950, 0
    %v1970 = vsel %vm284, %v1951, 0
    %v1973 = vsel %vm284, %v1952, 0
    %v1976 = vsel %vm284, %v1953, 0
    %1978 = vmatprep.subr.bf16.mxu0 0
    %1979 = vmatpush1.bf16.xpose.msra.mxu0 %v1976
    %1980 = vmatprep.subr.bf16.mxu0 0
    %1981 = vmatpush1.bf16.xpose.msra.mxu0 %v1973
    %1982 = vmatprep.subr.bf16.mxu0 0
    %1983 = vmatpush1.bf16.xpose.msra.mxu0 %v1970
    %1984 = vmatprep.subr.bf16.mxu0 0
    %1985 = vmatpush1.bf16.xpose.msra.mxu0 %v1967
    %1986 = vmatprep.subr.bf16.mxu0 0
    %1987 = vmatpush1.bf16.xpose.msra.mxu0 %v1964
    %1988 = vmatprep.subr.bf16.mxu0 0
    %1989 = vmatpush1.bf16.xpose.msra.mxu0 %v1961
    %1990 = vmatprep.subr.bf16.mxu0 0
    %1991 = vmatpush1.bf16.xpose.msra.mxu0 %v1958
    %1992 = vmatprep.subr.bf16.mxu0 0
    %1993 = vmatpush1.bf16.xpose.msra.mxu0 %v1955
    %1994 = vmatprep.subr.bf16.mxu0 0
    %1995 = vmatpush2.bf16.xpose.msra.mxu0 0
    %1996 = vmatprep.subr.bf16.mxu0 0
    %1997 = vmatpush2.bf16.xpose.msra.mxu0 0
    %1998 = vmatprep.subr.bf16.mxu0 0
    %1999 = vmatpush2.bf16.xpose.msra.mxu0 0
    %2000 = vmatprep.subr.bf16.mxu0 0
    %2001 = vmatpush2.bf16.xpose.msra.mxu0 0
    %2002 = vmatprep.subr.bf16.mxu0 0
    %2003 = vmatpush2.bf16.xpose.msra.mxu0 0
    %2004 = vmatprep.subr.bf16.mxu0 0
    %2005 = vmatpush2.bf16.xpose.msra.mxu0 0
    %2006 = vmatprep.subr.bf16.mxu0 0
    %2007 = vmatpush2.bf16.xpose.msra.mxu0 0
    %2008 = vmatprep.subr.bf16.mxu0 0
    %2009 = vmatpush2.bf16.xpose.msra.mxu0 0
    %2010 = vmatprep.mubr.bf16.mxu0 0
    %2011 = vmatmul.mubr.bf16.gmra.mxu0 %v436
    %v2012 = vpop.f32.mrf.mxu0
    %v2013 = vadd.f32 %v433, %v2012
    %v2014 = vpop.f32.mrf.mxu0
    %v2015 = vpop.f32.mrf.mxu0
    %v2016 = vpop.f32.mrf.mxu0
    %2017 = vdwg.mxu0
    %2018 = vst [vmem:[#allocation2 + $0x8] sm:$0x3] %v2013
    %v2019 = vld [vmem:[%s0 + $0x280] sm:$0xff]
    %v2020 = vld [vmem:[%s0 + $0x288] sm:$0xff]
    %v2021 = vld [vmem:[%s0 + $0x290] sm:$0xff]
    %v2022 = vld [vmem:[%s0 + $0x298] sm:$0xff]
    %v2023 = vld [vmem:[%s0 + $0x2a0] sm:$0xff]
    %v2024 = vld [vmem:[%s0 + $0x2a8] sm:$0xff]
    %v2025 = vld [vmem:[%s0 + $0x2b0] sm:$0xff]
    %v2026 = vld [vmem:[%s0 + $0x2b8] sm:$0xff]
    %v2027 = vld [vmem:[%s0 + $0x2c0] sm:$0xff]
    %v2028 = vld [vmem:[%s0 + $0x2c8] sm:$0xff]
    %v2029 = vld [vmem:[%s0 + $0x2d0] sm:$0xff]
    %v2030 = vld [vmem:[%s0 + $0x2d8] sm:$0xff]
    %v2031 = vld [vmem:[%s0 + $0x2e0] sm:$0xff]
    %v2032 = vld [vmem:[%s0 + $0x2e8] sm:$0xff]
    %v2033 = vld [vmem:[%s0 + $0x2f0] sm:$0xff]
    %v2034 = vld [vmem:[%s0 + $0x2f8] sm:$0xff]
    %v2035 = vpack.c.bf16 %v2020, %v2019
    %v2036 = vpack.c.bf16 %v2022, %v2021
    %v2037 = vpack.c.bf16 %v2024, %v2023
    %v2038 = vpack.c.bf16 %v2026, %v2025
    %v2039 = vpack.c.bf16 %v2028, %v2027
    %v2040 = vpack.c.bf16 %v2030, %v2029
    %v2041 = vpack.c.bf16 %v2032, %v2031
    %v2042 = vpack.c.bf16 %v2034, %v2033
    %v2044 = vsel %vm101, %v2035, 0
    %v2047 = vsel %vm101, %v2036, 0
    %v2050 = vsel %vm101, %v2037, 0
    %v2053 = vsel %vm101, %v2038, 0
    %v2056 = vsel %vm101, %v2039, 0
    %v2059 = vsel %vm101, %v2040, 0
    %v2062 = vsel %vm101, %v2041, 0
    %v2065 = vsel %vm101, %v2042, 0
    %2067 = vmatprep.subr.bf16.mxu0 0
    %2068 = vmatpush1.bf16.msra.mxu0 0
    %2069 = vmatprep.subr.bf16.mxu0 0
    %2070 = vmatpush1.bf16.msra.mxu0 0
    %2071 = vmatprep.subr.bf16.mxu0 0
    %2072 = vmatpush1.bf16.msra.mxu0 0
    %2073 = vmatprep.subr.bf16.mxu0 0
    %2074 = vmatpush1.bf16.msra.mxu0 0
    %2075 = vmatprep.subr.bf16.mxu0 0
    %2076 = vmatpush1.bf16.msra.mxu0 %v131
    %2077 = vmatprep.subr.bf16.mxu0 0
    %2078 = vmatpush1.bf16.msra.mxu0 %v96
    %2079 = vmatprep.subr.bf16.mxu0 0
    %2080 = vmatpush1.bf16.msra.mxu0 %v95
    %2081 = vmatprep.subr.bf16.mxu0 0
    %2082 = vmatpush1.bf16.msra.mxu0 %v94
    %2083 = vmatprep.subr.bf16.mxu0 0
    %2084 = vmatpush2.bf16.msra.mxu0 0
    %2085 = vmatprep.subr.bf16.mxu0 0
    %2086 = vmatpush2.bf16.msra.mxu0 0
    %2087 = vmatprep.subr.bf16.mxu0 0
    %2088 = vmatpush2.bf16.msra.mxu0 0
    %2089 = vmatprep.subr.bf16.mxu0 0
    %2090 = vmatpush2.bf16.msra.mxu0 0
    %2091 = vmatprep.subr.bf16.mxu0 0
    %2092 = vmatpush2.bf16.msra.mxu0 0
    %2093 = vmatprep.subr.bf16.mxu0 0
    %2094 = vmatpush2.bf16.msra.mxu0 0
    %2095 = vmatprep.subr.bf16.mxu0 0
    %2096 = vmatpush2.bf16.msra.mxu0 0
    %2097 = vmatprep.subr.bf16.mxu0 0
    %2098 = vmatpush2.bf16.msra.mxu0 0
    %2099 = vmatprep.mubr.bf16.mxu0 0
    %2100 = vmatmul.mubr.bf16.gmra.mxu0 %v2044
    %v2101 = vpop.f32.mrf.mxu0
    %v2102 = vadd.f32 %v76, %v2101
    %v2103 = vpop.f32.mrf.mxu0
    %v2104 = vpop.f32.mrf.mxu0
    %v2105 = vadd.f32 %v76, %v2104
    %v2106 = vpop.f32.mrf.mxu0
    %2107 = vmatprep.mubr.bf16.mxu0 0
    %2108 = vmatmul.mubr.bf16.gmra.mxu0 %v2047
    %v2109 = vpop.f32.mrf.mxu0
    %v2110 = vadd.f32 %v76, %v2109
    %v2111 = vpop.f32.mrf.mxu0
    %v2112 = vpop.f32.mrf.mxu0
    %v2113 = vadd.f32 %v76, %v2112
    %v2114 = vpop.f32.mrf.mxu0
    %2115 = vmatprep.mubr.bf16.mxu0 0
    %2116 = vmatmul.mubr.bf16.gmra.mxu0 %v2050
    %v2117 = vpop.f32.mrf.mxu0
    %v2118 = vadd.f32 %v76, %v2117
    %v2119 = vpop.f32.mrf.mxu0
    %v2120 = vpop.f32.mrf.mxu0
    %v2121 = vadd.f32 %v76, %v2120
    %v2122 = vpop.f32.mrf.mxu0
    %2123 = vmatprep.mubr.bf16.mxu0 0
    %2124 = vmatmul.mubr.bf16.gmra.mxu0 %v2053
    %v2125 = vpop.f32.mrf.mxu0
    %v2126 = vadd.f32 %v76, %v2125
    %v2127 = vpop.f32.mrf.mxu0
    %v2128 = vpop.f32.mrf.mxu0
    %v2129 = vadd.f32 %v76, %v2128
    %v2130 = vpop.f32.mrf.mxu0
    %2131 = vmatprep.mubr.bf16.mxu0 0
    %2132 = vmatmul.mubr.bf16.gmra.mxu0 %v2056
    %v2133 = vpop.f32.mrf.mxu0
    %v2134 = vadd.f32 %v76, %v2133
    %v2135 = vpop.f32.mrf.mxu0
    %v2136 = vpop.f32.mrf.mxu0
    %v2137 = vadd.f32 %v76, %v2136
    %v2138 = vpop.f32.mrf.mxu0
    %2139 = vmatprep.mubr.bf16.mxu0 0
    %2140 = vmatmul.mubr.bf16.gmra.mxu0 %v2059
    %v2141 = vpop.f32.mrf.mxu0
    %v2142 = vadd.f32 %v76, %v2141
    %v2143 = vpop.f32.mrf.mxu0
    %v2144 = vpop.f32.mrf.mxu0
    %v2145 = vadd.f32 %v76, %v2144
    %v2146 = vpop.f32.mrf.mxu0
    %2147 = vmatprep.mubr.bf16.mxu0 0
    %2148 = vmatmul.mubr.bf16.gmra.mxu0 %v2062
    %v2149 = vpop.f32.mrf.mxu0
    %v2150 = vadd.f32 %v76, %v2149
    %v2151 = vpop.f32.mrf.mxu0
    %v2152 = vpop.f32.mrf.mxu0
    %v2153 = vadd.f32 %v76, %v2152
    %v2154 = vpop.f32.mrf.mxu0
    %2155 = vmatprep.mubr.bf16.mxu0 0
    %2156 = vmatmul.mubr.bf16.gmra.mxu0 %v2065
    %v2157 = vpop.f32.mrf.mxu0
    %v2158 = vadd.f32 %v76, %v2157
    %v2159 = vpop.f32.mrf.mxu0
    %v2160 = vpop.f32.mrf.mxu0
    %v2161 = vadd.f32 %v76, %v2160
    %v2162 = vpop.f32.mrf.mxu0
    %2163 = vdwg.mxu0
    %v2164 = vmax.f32 %v2102, 0.0
    %v2165 = vmax.f32 %v2105, 0.0
    %v2166 = vmax.f32 %v2110, 0.0
    %v2167 = vmax.f32 %v2113, 0.0
    %v2168 = vmax.f32 %v2118, 0.0
    %v2169 = vmax.f32 %v2121, 0.0
    %v2170 = vmax.f32 %v2126, 0.0
    %v2171 = vmax.f32 %v2129, 0.0
    %v2172 = vmax.f32 %v2134, 0.0
    %v2173 = vmax.f32 %v2137, 0.0
    %v2174 = vmax.f32 %v2142, 0.0
    %v2175 = vmax.f32 %v2145, 0.0
    %v2176 = vmax.f32 %v2150, 0.0
    %v2177 = vmax.f32 %v2153, 0.0
    %v2178 = vmax.f32 %v2158, 0.0
    %v2179 = vmax.f32 %v2161, 0.0
    %v2180 = vpack.c.bf16 %v2165, %v2164
    %v2181 = vpack.c.bf16 %v2167, %v2166
    %v2182 = vpack.c.bf16 %v2169, %v2168
    %v2183 = vpack.c.bf16 %v2171, %v2170
    %v2184 = vpack.c.bf16 %v2173, %v2172
    %v2185 = vpack.c.bf16 %v2175, %v2174
    %v2186 = vpack.c.bf16 %v2177, %v2176
    %v2187 = vpack.c.bf16 %v2179, %v2178
    %v2189 = vsel %vm284, %v2180, 0
    %v2192 = vsel %vm284, %v2181, 0
    %v2195 = vsel %vm284, %v2182, 0
    %v2198 = vsel %vm284, %v2183, 0
    %v2201 = vsel %vm284, %v2184, 0
    %v2204 = vsel %vm284, %v2185, 0
    %v2207 = vsel %vm284, %v2186, 0
    %v2210 = vsel %vm284, %v2187, 0
    %2212 = vmatprep.subr.bf16.mxu0 0
    %2213 = vmatpush1.bf16.msra.mxu0 0
    %2214 = vmatprep.subr.bf16.mxu0 0
    %2215 = vmatpush1.bf16.msra.mxu0 0
    %2216 = vmatprep.subr.bf16.mxu0 0
    %2217 = vmatpush1.bf16.msra.mxu0 0
    %2218 = vmatprep.subr.bf16.mxu0 0
    %2219 = vmatpush1.bf16.msra.mxu0 0
    %2220 = vmatprep.subr.bf16.mxu0 0
    %2221 = vmatpush1.bf16.msra.mxu0 %v279
    %2222 = vmatprep.subr.bf16.mxu0 0
    %2223 = vmatpush1.bf16.msra.mxu0 %v278
    %2224 = vmatprep.subr.bf16.mxu0 0
    %2225 = vmatpush1.bf16.msra.mxu0 %v277
    %2226 = vmatprep.subr.bf16.mxu0 0
    %2227 = vmatpush1.bf16.msra.mxu0 %v276
    %2228 = vmatprep.subr.bf16.mxu0 0
    %2229 = vmatpush2.bf16.msra.mxu0 0
    %2230 = vmatprep.subr.bf16.mxu0 0
    %2231 = vmatpush2.bf16.msra.mxu0 0
    %2232 = vmatprep.subr.bf16.mxu0 0
    %2233 = vmatpush2.bf16.msra.mxu0 0
    %2234 = vmatprep.subr.bf16.mxu0 0
    %2235 = vmatpush2.bf16.msra.mxu0 0
    %2236 = vmatprep.subr.bf16.mxu0 0
    %2237 = vmatpush2.bf16.msra.mxu0 0
    %2238 = vmatprep.subr.bf16.mxu0 0
    %2239 = vmatpush2.bf16.msra.mxu0 0
    %2240 = vmatprep.subr.bf16.mxu0 0
    %2241 = vmatpush2.bf16.msra.mxu0 0
    %2242 = vmatprep.subr.bf16.mxu0 0
    %2243 = vmatpush2.bf16.msra.mxu0 0
    %2244 = vmatprep.mubr.bf16.mxu0 0
    %2245 = vmatmul.mubr.bf16.gmra.mxu0 %v2189
    %v2246 = vpop.f32.mrf.mxu0
    %v2247 = vadd.f32 %v258, %v2246
    %v2248 = vpop.f32.mrf.mxu0
    %v2249 = vpop.f32.mrf.mxu0
    %v2250 = vadd.f32 %v258, %v2249
    %v2251 = vpop.f32.mrf.mxu0
    %2252 = vmatprep.mubr.bf16.mxu0 0
    %2253 = vmatmul.mubr.bf16.gmra.mxu0 %v2192
    %v2254 = vpop.f32.mrf.mxu0
    %v2255 = vadd.f32 %v258, %v2254
    %v2256 = vpop.f32.mrf.mxu0
    %v2257 = vpop.f32.mrf.mxu0
    %v2258 = vadd.f32 %v258, %v2257
    %v2259 = vpop.f32.mrf.mxu0
    %2260 = vmatprep.mubr.bf16.mxu0 0
    %2261 = vmatmul.mubr.bf16.gmra.mxu0 %v2195
    %v2262 = vpop.f32.mrf.mxu0
    %v2263 = vadd.f32 %v258, %v2262
    %v2264 = vpop.f32.mrf.mxu0
    %v2265 = vpop.f32.mrf.mxu0
    %v2266 = vadd.f32 %v258, %v2265
    %v2267 = vpop.f32.mrf.mxu0
    %2268 = vmatprep.mubr.bf16.mxu0 0
    %2269 = vmatmul.mubr.bf16.gmra.mxu0 %v2198
    %v2270 = vpop.f32.mrf.mxu0
    %v2271 = vadd.f32 %v258, %v2270
    %v2272 = vpop.f32.mrf.mxu0
    %v2273 = vpop.f32.mrf.mxu0
    %v2274 = vadd.f32 %v258, %v2273
    %v2275 = vpop.f32.mrf.mxu0
    %2276 = vmatprep.mubr.bf16.mxu0 0
    %2277 = vmatmul.mubr.bf16.gmra.mxu0 %v2201
    %v2278 = vpop.f32.mrf.mxu0
    %v2279 = vadd.f32 %v258, %v2278
    %v2280 = vpop.f32.mrf.mxu0
    %v2281 = vpop.f32.mrf.mxu0
    %v2282 = vadd.f32 %v258, %v2281
    %v2283 = vpop.f32.mrf.mxu0
    %2284 = vmatprep.mubr.bf16.mxu0 0
    %2285 = vmatmul.mubr.bf16.gmra.mxu0 %v2204
    %v2286 = vpop.f32.mrf.mxu0
    %v2287 = vadd.f32 %v258, %v2286
    %v2288 = vpop.f32.mrf.mxu0
    %v2289 = vpop.f32.mrf.mxu0
    %v2290 = vadd.f32 %v258, %v2289
    %v2291 = vpop.f32.mrf.mxu0
    %2292 = vmatprep.mubr.bf16.mxu0 0
    %2293 = vmatmul.mubr.bf16.gmra.mxu0 %v2207
    %v2294 = vpop.f32.mrf.mxu0
    %v2295 = vadd.f32 %v258, %v2294
    %v2296 = vpop.f32.mrf.mxu0
    %v2297 = vpop.f32.mrf.mxu0
    %v2298 = vadd.f32 %v258, %v2297
    %v2299 = vpop.f32.mrf.mxu0
    %2300 = vmatprep.mubr.bf16.mxu0 0
    %2301 = vmatmul.mubr.bf16.gmra.mxu0 %v2210
    %v2302 = vpop.f32.mrf.mxu0
    %v2303 = vadd.f32 %v258, %v2302
    %v2304 = vpop.f32.mrf.mxu0
    %v2305 = vpop.f32.mrf.mxu0
    %v2306 = vadd.f32 %v258, %v2305
    %v2307 = vpop.f32.mrf.mxu0
    %2308 = vdwg.mxu0
    %v2309 = vmax.f32 %v2247, 0.0
    %v2310 = vmax.f32 %v2250, 0.0
    %v2311 = vmax.f32 %v2255, 0.0
    %v2312 = vmax.f32 %v2258, 0.0
    %v2313 = vmax.f32 %v2263, 0.0
    %v2314 = vmax.f32 %v2266, 0.0
    %v2315 = vmax.f32 %v2271, 0.0
    %v2316 = vmax.f32 %v2274, 0.0
    %v2317 = vmax.f32 %v2279, 0.0
    %v2318 = vmax.f32 %v2282, 0.0
    %v2319 = vmax.f32 %v2287, 0.0
    %v2320 = vmax.f32 %v2290, 0.0
    %v2321 = vmax.f32 %v2295, 0.0
    %v2322 = vmax.f32 %v2298, 0.0
    %v2323 = vmax.f32 %v2303, 0.0
    %v2324 = vmax.f32 %v2306, 0.0
    %v2325 = vpack.c.bf16 %v2310, %v2309
    %v2326 = vpack.c.bf16 %v2312, %v2311
    %v2327 = vpack.c.bf16 %v2314, %v2313
    %v2328 = vpack.c.bf16 %v2316, %v2315
    %v2329 = vpack.c.bf16 %v2318, %v2317
    %v2330 = vpack.c.bf16 %v2320, %v2319
    %v2331 = vpack.c.bf16 %v2322, %v2321
    %v2332 = vpack.c.bf16 %v2324, %v2323
    %v2334 = vsel %vm284, %v2325, 0
    %v2337 = vsel %vm284, %v2326, 0
    %v2340 = vsel %vm284, %v2327, 0
    %v2343 = vsel %vm284, %v2328, 0
    %v2346 = vsel %vm284, %v2329, 0
    %v2349 = vsel %vm284, %v2330, 0
    %v2352 = vsel %vm284, %v2331, 0
    %v2355 = vsel %vm284, %v2332, 0
    %2357 = vmatprep.subr.bf16.mxu0 0
    %2358 = vmatpush1.bf16.xpose.msra.mxu0 %v2355
    %2359 = vmatprep.subr.bf16.mxu0 0
    %2360 = vmatpush1.bf16.xpose.msra.mxu0 %v2352
    %2361 = vmatprep.subr.bf16.mxu0 0
    %2362 = vmatpush1.bf16.xpose.msra.mxu0 %v2349
    %2363 = vmatprep.subr.bf16.mxu0 0
    %2364 = vmatpush1.bf16.xpose.msra.mxu0 %v2346
    %2365 = vmatprep.subr.bf16.mxu0 0
    %2366 = vmatpush1.bf16.xpose.msra.mxu0 %v2343
    %2367 = vmatprep.subr.bf16.mxu0 0
    %2368 = vmatpush1.bf16.xpose.msra.mxu0 %v2340
    %2369 = vmatprep.subr.bf16.mxu0 0
    %2370 = vmatpush1.bf16.xpose.msra.mxu0 %v2337
    %2371 = vmatprep.subr.bf16.mxu0 0
    %2372 = vmatpush1.bf16.xpose.msra.mxu0 %v2334
    %2373 = vmatprep.subr.bf16.mxu0 0
    %2374 = vmatpush2.bf16.xpose.msra.mxu0 0
    %2375 = vmatprep.subr.bf16.mxu0 0
    %2376 = vmatpush2.bf16.xpose.msra.mxu0 0
    %2377 = vmatprep.subr.bf16.mxu0 0
    %2378 = vmatpush2.bf16.xpose.msra.mxu0 0
    %2379 = vmatprep.subr.bf16.mxu0 0
    %2380 = vmatpush2.bf16.xpose.msra.mxu0 0
    %2381 = vmatprep.subr.bf16.mxu0 0
    %2382 = vmatpush2.bf16.xpose.msra.mxu0 0
    %2383 = vmatprep.subr.bf16.mxu0 0
    %2384 = vmatpush2.bf16.xpose.msra.mxu0 0
    %2385 = vmatprep.subr.bf16.mxu0 0
    %2386 = vmatpush2.bf16.xpose.msra.mxu0 0
    %2387 = vmatprep.subr.bf16.mxu0 0
    %2388 = vmatpush2.bf16.xpose.msra.mxu0 0
    %2389 = vmatprep.mubr.bf16.mxu0 0
    %2390 = vmatmul.mubr.bf16.gmra.mxu0 %v436
    %v2391 = vpop.f32.mrf.mxu0
    %v2392 = vadd.f32 %v433, %v2391
    %v2393 = vpop.f32.mrf.mxu0
    %v2394 = vpop.f32.mrf.mxu0
    %v2395 = vpop.f32.mrf.mxu0
    %2396 = vdwg.mxu0
    %2397 = vst [vmem:[#allocation2 + $0xa] sm:$0x3] %v2392
    %v2398 = vld [vmem:[%s0 + $0x300] sm:$0xff]
    %v2399 = vld [vmem:[%s0 + $0x308] sm:$0xff]
    %v2400 = vld [vmem:[%s0 + $0x310] sm:$0xff]
    %v2401 = vld [vmem:[%s0 + $0x318] sm:$0xff]
    %v2402 = vld [vmem:[%s0 + $0x320] sm:$0xff]
    %v2403 = vld [vmem:[%s0 + $0x328] sm:$0xff]
    %v2404 = vld [vmem:[%s0 + $0x330] sm:$0xff]
    %v2405 = vld [vmem:[%s0 + $0x338] sm:$0xff]
    %v2406 = vld [vmem:[%s0 + $0x340] sm:$0xff]
    %v2407 = vld [vmem:[%s0 + $0x348] sm:$0xff]
    %v2408 = vld [vmem:[%s0 + $0x350] sm:$0xff]
    %v2409 = vld [vmem:[%s0 + $0x358] sm:$0xff]
    %v2410 = vld [vmem:[%s0 + $0x360] sm:$0xff]
    %v2411 = vld [vmem:[%s0 + $0x368] sm:$0xff]
    %v2412 = vld [vmem:[%s0 + $0x370] sm:$0xff]
    %v2413 = vld [vmem:[%s0 + $0x378] sm:$0xff]
    %v2414 = vpack.c.bf16 %v2399, %v2398
    %v2415 = vpack.c.bf16 %v2401, %v2400
    %v2416 = vpack.c.bf16 %v2403, %v2402
    %v2417 = vpack.c.bf16 %v2405, %v2404
    %v2418 = vpack.c.bf16 %v2407, %v2406
    %v2419 = vpack.c.bf16 %v2409, %v2408
    %v2420 = vpack.c.bf16 %v2411, %v2410
    %v2421 = vpack.c.bf16 %v2413, %v2412
    %v2423 = vsel %vm101, %v2414, 0
    %v2426 = vsel %vm101, %v2415, 0
    %v2429 = vsel %vm101, %v2416, 0
    %v2432 = vsel %vm101, %v2417, 0
    %v2435 = vsel %vm101, %v2418, 0
    %v2438 = vsel %vm101, %v2419, 0
    %v2441 = vsel %vm101, %v2420, 0
    %v2444 = vsel %vm101, %v2421, 0
    %2446 = vmatprep.subr.bf16.mxu0 0
    %2447 = vmatpush1.bf16.msra.mxu0 0
    %2448 = vmatprep.subr.bf16.mxu0 0
    %2449 = vmatpush1.bf16.msra.mxu0 0
    %2450 = vmatprep.subr.bf16.mxu0 0
    %2451 = vmatpush1.bf16.msra.mxu0 0
    %2452 = vmatprep.subr.bf16.mxu0 0
    %2453 = vmatpush1.bf16.msra.mxu0 0
    %2454 = vmatprep.subr.bf16.mxu0 0
    %2455 = vmatpush1.bf16.msra.mxu0 %v131
    %2456 = vmatprep.subr.bf16.mxu0 0
    %2457 = vmatpush1.bf16.msra.mxu0 %v96
    %2458 = vmatprep.subr.bf16.mxu0 0
    %2459 = vmatpush1.bf16.msra.mxu0 %v95
    %2460 = vmatprep.subr.bf16.mxu0 0
    %2461 = vmatpush1.bf16.msra.mxu0 %v94
    %2462 = vmatprep.subr.bf16.mxu0 0
    %2463 = vmatpush2.bf16.msra.mxu0 0
    %2464 = vmatprep.subr.bf16.mxu0 0
    %2465 = vmatpush2.bf16.msra.mxu0 0
    %2466 = vmatprep.subr.bf16.mxu0 0
    %2467 = vmatpush2.bf16.msra.mxu0 0
    %2468 = vmatprep.subr.bf16.mxu0 0
    %2469 = vmatpush2.bf16.msra.mxu0 0
    %2470 = vmatprep.subr.bf16.mxu0 0
    %2471 = vmatpush2.bf16.msra.mxu0 0
    %2472 = vmatprep.subr.bf16.mxu0 0
    %2473 = vmatpush2.bf16.msra.mxu0 0
    %2474 = vmatprep.subr.bf16.mxu0 0
    %2475 = vmatpush2.bf16.msra.mxu0 0
    %2476 = vmatprep.subr.bf16.mxu0 0
    %2477 = vmatpush2.bf16.msra.mxu0 0
    %2478 = vmatprep.mubr.bf16.mxu0 0
    %2479 = vmatmul.mubr.bf16.gmra.mxu0 %v2423
    %v2480 = vpop.f32.mrf.mxu0
    %v2481 = vadd.f32 %v76, %v2480
    %v2482 = vpop.f32.mrf.mxu0
    %v2483 = vpop.f32.mrf.mxu0
    %v2484 = vadd.f32 %v76, %v2483
    %v2485 = vpop.f32.mrf.mxu0
    %2486 = vmatprep.mubr.bf16.mxu0 0
    %2487 = vmatmul.mubr.bf16.gmra.mxu0 %v2426
    %v2488 = vpop.f32.mrf.mxu0
    %v2489 = vadd.f32 %v76, %v2488
    %v2490 = vpop.f32.mrf.mxu0
    %v2491 = vpop.f32.mrf.mxu0
    %v2492 = vadd.f32 %v76, %v2491
    %v2493 = vpop.f32.mrf.mxu0
    %2494 = vmatprep.mubr.bf16.mxu0 0
    %2495 = vmatmul.mubr.bf16.gmra.mxu0 %v2429
    %v2496 = vpop.f32.mrf.mxu0
    %v2497 = vadd.f32 %v76, %v2496
    %v2498 = vpop.f32.mrf.mxu0
    %v2499 = vpop.f32.mrf.mxu0
    %v2500 = vadd.f32 %v76, %v2499
    %v2501 = vpop.f32.mrf.mxu0
    %2502 = vmatprep.mubr.bf16.mxu0 0
    %2503 = vmatmul.mubr.bf16.gmra.mxu0 %v2432
    %v2504 = vpop.f32.mrf.mxu0
    %v2505 = vadd.f32 %v76, %v2504
    %v2506 = vpop.f32.mrf.mxu0
    %v2507 = vpop.f32.mrf.mxu0
    %v2508 = vadd.f32 %v76, %v2507
    %v2509 = vpop.f32.mrf.mxu0
    %2510 = vmatprep.mubr.bf16.mxu0 0
    %2511 = vmatmul.mubr.bf16.gmra.mxu0 %v2435
    %v2512 = vpop.f32.mrf.mxu0
    %v2513 = vadd.f32 %v76, %v2512
    %v2514 = vpop.f32.mrf.mxu0
    %v2515 = vpop.f32.mrf.mxu0
    %v2516 = vadd.f32 %v76, %v2515
    %v2517 = vpop.f32.mrf.mxu0
    %2518 = vmatprep.mubr.bf16.mxu0 0
    %2519 = vmatmul.mubr.bf16.gmra.mxu0 %v2438
    %v2520 = vpop.f32.mrf.mxu0
    %v2521 = vadd.f32 %v76, %v2520
    %v2522 = vpop.f32.mrf.mxu0
    %v2523 = vpop.f32.mrf.mxu0
    %v2524 = vadd.f32 %v76, %v2523
    %v2525 = vpop.f32.mrf.mxu0
    %2526 = vmatprep.mubr.bf16.mxu0 0
    %2527 = vmatmul.mubr.bf16.gmra.mxu0 %v2441
    %v2528 = vpop.f32.mrf.mxu0
    %v2529 = vadd.f32 %v76, %v2528
    %v2530 = vpop.f32.mrf.mxu0
    %v2531 = vpop.f32.mrf.mxu0
    %v2532 = vadd.f32 %v76, %v2531
    %v2533 = vpop.f32.mrf.mxu0
    %2534 = vmatprep.mubr.bf16.mxu0 0
    %2535 = vmatmul.mubr.bf16.gmra.mxu0 %v2444
    %v2536 = vpop.f32.mrf.mxu0
    %v2537 = vadd.f32 %v76, %v2536
    %v2538 = vpop.f32.mrf.mxu0
    %v2539 = vpop.f32.mrf.mxu0
    %v2540 = vadd.f32 %v76, %v2539
    %v2541 = vpop.f32.mrf.mxu0
    %2542 = vdwg.mxu0
    %v2543 = vmax.f32 %v2481, 0.0
    %v2544 = vmax.f32 %v2484, 0.0
    %v2545 = vmax.f32 %v2489, 0.0
    %v2546 = vmax.f32 %v2492, 0.0
    %v2547 = vmax.f32 %v2497, 0.0
    %v2548 = vmax.f32 %v2500, 0.0
    %v2549 = vmax.f32 %v2505, 0.0
    %v2550 = vmax.f32 %v2508, 0.0
    %v2551 = vmax.f32 %v2513, 0.0
    %v2552 = vmax.f32 %v2516, 0.0
    %v2553 = vmax.f32 %v2521, 0.0
    %v2554 = vmax.f32 %v2524, 0.0
    %v2555 = vmax.f32 %v2529, 0.0
    %v2556 = vmax.f32 %v2532, 0.0
    %v2557 = vmax.f32 %v2537, 0.0
    %v2558 = vmax.f32 %v2540, 0.0
    %v2559 = vpack.c.bf16 %v2544, %v2543
    %v2560 = vpack.c.bf16 %v2546, %v2545
    %v2561 = vpack.c.bf16 %v2548, %v2547
    %v2562 = vpack.c.bf16 %v2550, %v2549
    %v2563 = vpack.c.bf16 %v2552, %v2551
    %v2564 = vpack.c.bf16 %v2554, %v2553
    %v2565 = vpack.c.bf16 %v2556, %v2555
    %v2566 = vpack.c.bf16 %v2558, %v2557
    %v2568 = vsel %vm284, %v2559, 0
    %v2571 = vsel %vm284, %v2560, 0
    %v2574 = vsel %vm284, %v2561, 0
    %v2577 = vsel %vm284, %v2562, 0
    %v2580 = vsel %vm284, %v2563, 0
    %v2583 = vsel %vm284, %v2564, 0
    %v2586 = vsel %vm284, %v2565, 0
    %v2589 = vsel %vm284, %v2566, 0
    %2591 = vmatprep.subr.bf16.mxu0 0
    %2592 = vmatpush1.bf16.msra.mxu0 0
    %2593 = vmatprep.subr.bf16.mxu0 0
    %2594 = vmatpush1.bf16.msra.mxu0 0
    %2595 = vmatprep.subr.bf16.mxu0 0
    %2596 = vmatpush1.bf16.msra.mxu0 0
    %2597 = vmatprep.subr.bf16.mxu0 0
    %2598 = vmatpush1.bf16.msra.mxu0 0
    %2599 = vmatprep.subr.bf16.mxu0 0
    %2600 = vmatpush1.bf16.msra.mxu0 %v279
    %2601 = vmatprep.subr.bf16.mxu0 0
    %2602 = vmatpush1.bf16.msra.mxu0 %v278
    %2603 = vmatprep.subr.bf16.mxu0 0
    %2604 = vmatpush1.bf16.msra.mxu0 %v277
    %2605 = vmatprep.subr.bf16.mxu0 0
    %2606 = vmatpush1.bf16.msra.mxu0 %v276
    %2607 = vmatprep.subr.bf16.mxu0 0
    %2608 = vmatpush2.bf16.msra.mxu0 0
    %2609 = vmatprep.subr.bf16.mxu0 0
    %2610 = vmatpush2.bf16.msra.mxu0 0
    %2611 = vmatprep.subr.bf16.mxu0 0
    %2612 = vmatpush2.bf16.msra.mxu0 0
    %2613 = vmatprep.subr.bf16.mxu0 0
    %2614 = vmatpush2.bf16.msra.mxu0 0
    %2615 = vmatprep.subr.bf16.mxu0 0
    %2616 = vmatpush2.bf16.msra.mxu0 0
    %2617 = vmatprep.subr.bf16.mxu0 0
    %2618 = vmatpush2.bf16.msra.mxu0 0
    %2619 = vmatprep.subr.bf16.mxu0 0
    %2620 = vmatpush2.bf16.msra.mxu0 0
    %2621 = vmatprep.subr.bf16.mxu0 0
    %2622 = vmatpush2.bf16.msra.mxu0 0
    %2623 = vmatprep.mubr.bf16.mxu0 0
    %2624 = vmatmul.mubr.bf16.gmra.mxu0 %v2568
    %v2625 = vpop.f32.mrf.mxu0
    %v2626 = vadd.f32 %v258, %v2625
    %v2627 = vpop.f32.mrf.mxu0
    %v2628 = vpop.f32.mrf.mxu0
    %v2629 = vadd.f32 %v258, %v2628
    %v2630 = vpop.f32.mrf.mxu0
    %2631 = vmatprep.mubr.bf16.mxu0 0
    %2632 = vmatmul.mubr.bf16.gmra.mxu0 %v2571
    %v2633 = vpop.f32.mrf.mxu0
    %v2634 = vadd.f32 %v258, %v2633
    %v2635 = vpop.f32.mrf.mxu0
    %v2636 = vpop.f32.mrf.mxu0
    %v2637 = vadd.f32 %v258, %v2636
    %v2638 = vpop.f32.mrf.mxu0
    %2639 = vmatprep.mubr.bf16.mxu0 0
    %2640 = vmatmul.mubr.bf16.gmra.mxu0 %v2574
    %v2641 = vpop.f32.mrf.mxu0
    %v2642 = vadd.f32 %v258, %v2641
    %v2643 = vpop.f32.mrf.mxu0
    %v2644 = vpop.f32.mrf.mxu0
    %v2645 = vadd.f32 %v258, %v2644
    %v2646 = vpop.f32.mrf.mxu0
    %2647 = vmatprep.mubr.bf16.mxu0 0
    %2648 = vmatmul.mubr.bf16.gmra.mxu0 %v2577
    %v2649 = vpop.f32.mrf.mxu0
    %v2650 = vadd.f32 %v258, %v2649
    %v2651 = vpop.f32.mrf.mxu0
    %v2652 = vpop.f32.mrf.mxu0
    %v2653 = vadd.f32 %v258, %v2652
    %v2654 = vpop.f32.mrf.mxu0
    %2655 = vmatprep.mubr.bf16.mxu0 0
    %2656 = vmatmul.mubr.bf16.gmra.mxu0 %v2580
    %v2657 = vpop.f32.mrf.mxu0
    %v2658 = vadd.f32 %v258, %v2657
    %v2659 = vpop.f32.mrf.mxu0
    %v2660 = vpop.f32.mrf.mxu0
    %v2661 = vadd.f32 %v258, %v2660
    %v2662 = vpop.f32.mrf.mxu0
    %2663 = vmatprep.mubr.bf16.mxu0 0
    %2664 = vmatmul.mubr.bf16.gmra.mxu0 %v2583
    %v2665 = vpop.f32.mrf.mxu0
    %v2666 = vadd.f32 %v258, %v2665
    %v2667 = vpop.f32.mrf.mxu0
    %v2668 = vpop.f32.mrf.mxu0
    %v2669 = vadd.f32 %v258, %v2668
    %v2670 = vpop.f32.mrf.mxu0
    %2671 = vmatprep.mubr.bf16.mxu0 0
    %2672 = vmatmul.mubr.bf16.gmra.mxu0 %v2586
    %v2673 = vpop.f32.mrf.mxu0
    %v2674 = vadd.f32 %v258, %v2673
    %v2675 = vpop.f32.mrf.mxu0
    %v2676 = vpop.f32.mrf.mxu0
    %v2677 = vadd.f32 %v258, %v2676
    %v2678 = vpop.f32.mrf.mxu0
    %2679 = vmatprep.mubr.bf16.mxu0 0
    %2680 = vmatmul.mubr.bf16.gmra.mxu0 %v2589
    %v2681 = vpop.f32.mrf.mxu0
    %v2682 = vadd.f32 %v258, %v2681
    %v2683 = vpop.f32.mrf.mxu0
    %v2684 = vpop.f32.mrf.mxu0
    %v2685 = vadd.f32 %v258, %v2684
    %v2686 = vpop.f32.mrf.mxu0
    %2687 = vdwg.mxu0
    %v2688 = vmax.f32 %v2626, 0.0
    %v2689 = vmax.f32 %v2629, 0.0
    %v2690 = vmax.f32 %v2634, 0.0
    %v2691 = vmax.f32 %v2637, 0.0
    %v2692 = vmax.f32 %v2642, 0.0
    %v2693 = vmax.f32 %v2645, 0.0
    %v2694 = vmax.f32 %v2650, 0.0
    %v2695 = vmax.f32 %v2653, 0.0
    %v2696 = vmax.f32 %v2658, 0.0
    %v2697 = vmax.f32 %v2661, 0.0
    %v2698 = vmax.f32 %v2666, 0.0
    %v2699 = vmax.f32 %v2669, 0.0
    %v2700 = vmax.f32 %v2674, 0.0
    %v2701 = vmax.f32 %v2677, 0.0
    %v2702 = vmax.f32 %v2682, 0.0
    %v2703 = vmax.f32 %v2685, 0.0
    %v2704 = vpack.c.bf16 %v2689, %v2688
    %v2705 = vpack.c.bf16 %v2691, %v2690
    %v2706 = vpack.c.bf16 %v2693, %v2692
    %v2707 = vpack.c.bf16 %v2695, %v2694
    %v2708 = vpack.c.bf16 %v2697, %v2696
    %v2709 = vpack.c.bf16 %v2699, %v2698
    %v2710 = vpack.c.bf16 %v2701, %v2700
    %v2711 = vpack.c.bf16 %v2703, %v2702
    %v2713 = vsel %vm284, %v2704, 0
    %v2716 = vsel %vm284, %v2705, 0
    %v2719 = vsel %vm284, %v2706, 0
    %v2722 = vsel %vm284, %v2707, 0
    %v2725 = vsel %vm284, %v2708, 0
    %v2728 = vsel %vm284, %v2709, 0
    %v2731 = vsel %vm284, %v2710, 0
    %v2734 = vsel %vm284, %v2711, 0
    %2736 = vmatprep.subr.bf16.mxu0 0
    %2737 = vmatpush1.bf16.xpose.msra.mxu0 %v2734
    %2738 = vmatprep.subr.bf16.mxu0 0
    %2739 = vmatpush1.bf16.xpose.msra.mxu0 %v2731
    %2740 = vmatprep.subr.bf16.mxu0 0
    %2741 = vmatpush1.bf16.xpose.msra.mxu0 %v2728
    %2742 = vmatprep.subr.bf16.mxu0 0
    %2743 = vmatpush1.bf16.xpose.msra.mxu0 %v2725
    %2744 = vmatprep.subr.bf16.mxu0 0
    %2745 = vmatpush1.bf16.xpose.msra.mxu0 %v2722
    %2746 = vmatprep.subr.bf16.mxu0 0
    %2747 = vmatpush1.bf16.xpose.msra.mxu0 %v2719
    %2748 = vmatprep.subr.bf16.mxu0 0
    %2749 = vmatpush1.bf16.xpose.msra.mxu0 %v2716
    %2750 = vmatprep.subr.bf16.mxu0 0
    %2751 = vmatpush1.bf16.xpose.msra.mxu0 %v2713
    %2752 = vmatprep.subr.bf16.mxu0 0
    %2753 = vmatpush2.bf16.xpose.msra.mxu0 0
    %2754 = vmatprep.subr.bf16.mxu0 0
    %2755 = vmatpush2.bf16.xpose.msra.mxu0 0
    %2756 = vmatprep.subr.bf16.mxu0 0
    %2757 = vmatpush2.bf16.xpose.msra.mxu0 0
    %2758 = vmatprep.subr.bf16.mxu0 0
    %2759 = vmatpush2.bf16.xpose.msra.mxu0 0
    %2760 = vmatprep.subr.bf16.mxu0 0
    %2761 = vmatpush2.bf16.xpose.msra.mxu0 0
    %2762 = vmatprep.subr.bf16.mxu0 0
    %2763 = vmatpush2.bf16.xpose.msra.mxu0 0
    %2764 = vmatprep.subr.bf16.mxu0 0
    %2765 = vmatpush2.bf16.xpose.msra.mxu0 0
    %2766 = vmatprep.subr.bf16.mxu0 0
    %2767 = vmatpush2.bf16.xpose.msra.mxu0 0
    %2768 = vmatprep.mubr.bf16.mxu0 0
    %2769 = vmatmul.mubr.bf16.gmra.mxu0 %v436
    %v2770 = vpop.f32.mrf.mxu0
    %v2771 = vadd.f32 %v433, %v2770
    %v2772 = vpop.f32.mrf.mxu0
    %v2773 = vpop.f32.mrf.mxu0
    %v2774 = vpop.f32.mrf.mxu0
    %2775 = vdwg.mxu0
    %2776 = vst [vmem:[#allocation2 + $0xc] sm:$0x3] %v2771
    %v2777 = vld [vmem:[%s0 + $0x380] sm:$0xff]
    %v2778 = vld [vmem:[%s0 + $0x388] sm:$0xff]
    %v2779 = vld [vmem:[%s0 + $0x390] sm:$0xff]
    %v2780 = vld [vmem:[%s0 + $0x398] sm:$0xff]
    %v2781 = vld [vmem:[%s0 + $0x3a0] sm:$0xff]
    %v2782 = vld [vmem:[%s0 + $0x3a8] sm:$0xff]
    %v2783 = vld [vmem:[%s0 + $0x3b0] sm:$0xff]
    %v2784 = vld [vmem:[%s0 + $0x3b8] sm:$0xff]
    %v2785 = vld [vmem:[%s0 + $0x3c0] sm:$0xff]
    %v2786 = vld [vmem:[%s0 + $0x3c8] sm:$0xff]
    %v2787 = vld [vmem:[%s0 + $0x3d0] sm:$0xff]
    %v2788 = vld [vmem:[%s0 + $0x3d8] sm:$0xff]
    %v2789 = vld [vmem:[%s0 + $0x3e0] sm:$0xff]
    %v2790 = vld [vmem:[%s0 + $0x3e8] sm:$0xff]
    %v2791 = vld [vmem:[%s0 + $0x3f0] sm:$0xff]
    %v2792 = vld [vmem:[%s0 + $0x3f8] sm:$0xff]
    %v2793 = vpack.c.bf16 %v2778, %v2777
    %v2794 = vpack.c.bf16 %v2780, %v2779
    %v2795 = vpack.c.bf16 %v2782, %v2781
    %v2796 = vpack.c.bf16 %v2784, %v2783
    %v2797 = vpack.c.bf16 %v2786, %v2785
    %v2798 = vpack.c.bf16 %v2788, %v2787
    %v2799 = vpack.c.bf16 %v2790, %v2789
    %v2800 = vpack.c.bf16 %v2792, %v2791
    %v2802 = vsel %vm101, %v2793, 0
    %v2805 = vsel %vm101, %v2794, 0
    %v2808 = vsel %vm101, %v2795, 0
    %v2811 = vsel %vm101, %v2796, 0
    %v2814 = vsel %vm101, %v2797, 0
    %v2817 = vsel %vm101, %v2798, 0
    %v2820 = vsel %vm101, %v2799, 0
    %v2823 = vsel %vm101, %v2800, 0
    %2825 = vmatprep.subr.bf16.mxu0 0
    %2826 = vmatpush1.bf16.msra.mxu0 0
    %2827 = vmatprep.subr.bf16.mxu0 0
    %2828 = vmatpush1.bf16.msra.mxu0 0
    %2829 = vmatprep.subr.bf16.mxu0 0
    %2830 = vmatpush1.bf16.msra.mxu0 0
    %2831 = vmatprep.subr.bf16.mxu0 0
    %2832 = vmatpush1.bf16.msra.mxu0 0
    %2833 = vmatprep.subr.bf16.mxu0 0
    %2834 = vmatpush1.bf16.msra.mxu0 %v131
    %2835 = vmatprep.subr.bf16.mxu0 0
    %2836 = vmatpush1.bf16.msra.mxu0 %v96
    %2837 = vmatprep.subr.bf16.mxu0 0
    %2838 = vmatpush1.bf16.msra.mxu0 %v95
    %2839 = vmatprep.subr.bf16.mxu0 0
    %2840 = vmatpush1.bf16.msra.mxu0 %v94
    %2841 = vmatprep.subr.bf16.mxu0 0
    %2842 = vmatpush2.bf16.msra.mxu0 0
    %2843 = vmatprep.subr.bf16.mxu0 0
    %2844 = vmatpush2.bf16.msra.mxu0 0
    %2845 = vmatprep.subr.bf16.mxu0 0
    %2846 = vmatpush2.bf16.msra.mxu0 0
    %2847 = vmatprep.subr.bf16.mxu0 0
    %2848 = vmatpush2.bf16.msra.mxu0 0
    %2849 = vmatprep.subr.bf16.mxu0 0
    %2850 = vmatpush2.bf16.msra.mxu0 0
    %2851 = vmatprep.subr.bf16.mxu0 0
    %2852 = vmatpush2.bf16.msra.mxu0 0
    %2853 = vmatprep.subr.bf16.mxu0 0
    %2854 = vmatpush2.bf16.msra.mxu0 0
    %2855 = vmatprep.subr.bf16.mxu0 0
    %2856 = vmatpush2.bf16.msra.mxu0 0
    %2857 = vmatprep.mubr.bf16.mxu0 0
    %2858 = vmatmul.mubr.bf16.gmra.mxu0 %v2802
    %v2859 = vpop.f32.mrf.mxu0
    %v2860 = vadd.f32 %v76, %v2859
    %v2861 = vpop.f32.mrf.mxu0
    %v2862 = vpop.f32.mrf.mxu0
    %v2863 = vadd.f32 %v76, %v2862
    %v2864 = vpop.f32.mrf.mxu0
    %2865 = vmatprep.mubr.bf16.mxu0 0
    %2866 = vmatmul.mubr.bf16.gmra.mxu0 %v2805
    %v2867 = vpop.f32.mrf.mxu0
    %v2868 = vadd.f32 %v76, %v2867
    %v2869 = vpop.f32.mrf.mxu0
    %v2870 = vpop.f32.mrf.mxu0
    %v2871 = vadd.f32 %v76, %v2870
    %v2872 = vpop.f32.mrf.mxu0
    %2873 = vmatprep.mubr.bf16.mxu0 0
    %2874 = vmatmul.mubr.bf16.gmra.mxu0 %v2808
    %v2875 = vpop.f32.mrf.mxu0
    %v2876 = vadd.f32 %v76, %v2875
    %v2877 = vpop.f32.mrf.mxu0
    %v2878 = vpop.f32.mrf.mxu0
    %v2879 = vadd.f32 %v76, %v2878
    %v2880 = vpop.f32.mrf.mxu0
    %2881 = vmatprep.mubr.bf16.mxu0 0
    %2882 = vmatmul.mubr.bf16.gmra.mxu0 %v2811
    %v2883 = vpop.f32.mrf.mxu0
    %v2884 = vadd.f32 %v76, %v2883
    %v2885 = vpop.f32.mrf.mxu0
    %v2886 = vpop.f32.mrf.mxu0
    %v2887 = vadd.f32 %v76, %v2886
    %v2888 = vpop.f32.mrf.mxu0
    %2889 = vmatprep.mubr.bf16.mxu0 0
    %2890 = vmatmul.mubr.bf16.gmra.mxu0 %v2814
    %v2891 = vpop.f32.mrf.mxu0
    %v2892 = vadd.f32 %v76, %v2891
    %v2893 = vpop.f32.mrf.mxu0
    %v2894 = vpop.f32.mrf.mxu0
    %v2895 = vadd.f32 %v76, %v2894
    %v2896 = vpop.f32.mrf.mxu0
    %2897 = vmatprep.mubr.bf16.mxu0 0
    %2898 = vmatmul.mubr.bf16.gmra.mxu0 %v2817
    %v2899 = vpop.f32.mrf.mxu0
    %v2900 = vadd.f32 %v76, %v2899
    %v2901 = vpop.f32.mrf.mxu0
    %v2902 = vpop.f32.mrf.mxu0
    %v2903 = vadd.f32 %v76, %v2902
    %v2904 = vpop.f32.mrf.mxu0
    %2905 = vmatprep.mubr.bf16.mxu0 0
    %2906 = vmatmul.mubr.bf16.gmra.mxu0 %v2820
    %v2907 = vpop.f32.mrf.mxu0
    %v2908 = vadd.f32 %v76, %v2907
    %v2909 = vpop.f32.mrf.mxu0
    %v2910 = vpop.f32.mrf.mxu0
    %v2911 = vadd.f32 %v76, %v2910
    %v2912 = vpop.f32.mrf.mxu0
    %2913 = vmatprep.mubr.bf16.mxu0 0
    %2914 = vmatmul.mubr.bf16.gmra.mxu0 %v2823
    %v2915 = vpop.f32.mrf.mxu0
    %v2916 = vadd.f32 %v76, %v2915
    %v2917 = vpop.f32.mrf.mxu0
    %v2918 = vpop.f32.mrf.mxu0
    %v2919 = vadd.f32 %v76, %v2918
    %v2920 = vpop.f32.mrf.mxu0
    %2921 = vdwg.mxu0
    %v2922 = vmax.f32 %v2860, 0.0
    %v2923 = vmax.f32 %v2863, 0.0
    %v2924 = vmax.f32 %v2868, 0.0
    %v2925 = vmax.f32 %v2871, 0.0
    %v2926 = vmax.f32 %v2876, 0.0
    %v2927 = vmax.f32 %v2879, 0.0
    %v2928 = vmax.f32 %v2884, 0.0
    %v2929 = vmax.f32 %v2887, 0.0
    %v2930 = vmax.f32 %v2892, 0.0
    %v2931 = vmax.f32 %v2895, 0.0
    %v2932 = vmax.f32 %v2900, 0.0
    %v2933 = vmax.f32 %v2903, 0.0
    %v2934 = vmax.f32 %v2908, 0.0
    %v2935 = vmax.f32 %v2911, 0.0
    %v2936 = vmax.f32 %v2916, 0.0
    %v2937 = vmax.f32 %v2919, 0.0
    %v2938 = vpack.c.bf16 %v2923, %v2922
    %v2939 = vpack.c.bf16 %v2925, %v2924
    %v2940 = vpack.c.bf16 %v2927, %v2926
    %v2941 = vpack.c.bf16 %v2929, %v2928
    %v2942 = vpack.c.bf16 %v2931, %v2930
    %v2943 = vpack.c.bf16 %v2933, %v2932
    %v2944 = vpack.c.bf16 %v2935, %v2934
    %v2945 = vpack.c.bf16 %v2937, %v2936
    %v2947 = vsel %vm284, %v2938, 0
    %v2950 = vsel %vm284, %v2939, 0
    %v2953 = vsel %vm284, %v2940, 0
    %v2956 = vsel %vm284, %v2941, 0
    %v2959 = vsel %vm284, %v2942, 0
    %v2962 = vsel %vm284, %v2943, 0
    %v2965 = vsel %vm284, %v2944, 0
    %v2968 = vsel %vm284, %v2945, 0
    %2970 = vmatprep.subr.bf16.mxu0 0
    %2971 = vmatpush1.bf16.msra.mxu0 0
    %2972 = vmatprep.subr.bf16.mxu0 0
    %2973 = vmatpush1.bf16.msra.mxu0 0
    %2974 = vmatprep.subr.bf16.mxu0 0
    %2975 = vmatpush1.bf16.msra.mxu0 0
    %2976 = vmatprep.subr.bf16.mxu0 0
    %2977 = vmatpush1.bf16.msra.mxu0 0
    %2978 = vmatprep.subr.bf16.mxu0 0
    %2979 = vmatpush1.bf16.msra.mxu0 %v279
    %2980 = vmatprep.subr.bf16.mxu0 0
    %2981 = vmatpush1.bf16.msra.mxu0 %v278
    %2982 = vmatprep.subr.bf16.mxu0 0
    %2983 = vmatpush1.bf16.msra.mxu0 %v277
    %2984 = vmatprep.subr.bf16.mxu0 0
    %2985 = vmatpush1.bf16.msra.mxu0 %v276
    %2986 = vmatprep.subr.bf16.mxu0 0
    %2987 = vmatpush2.bf16.msra.mxu0 0
    %2988 = vmatprep.subr.bf16.mxu0 0
    %2989 = vmatpush2.bf16.msra.mxu0 0
    %2990 = vmatprep.subr.bf16.mxu0 0
    %2991 = vmatpush2.bf16.msra.mxu0 0
    %2992 = vmatprep.subr.bf16.mxu0 0
    %2993 = vmatpush2.bf16.msra.mxu0 0
    %2994 = vmatprep.subr.bf16.mxu0 0
    %2995 = vmatpush2.bf16.msra.mxu0 0
    %2996 = vmatprep.subr.bf16.mxu0 0
    %2997 = vmatpush2.bf16.msra.mxu0 0
    %2998 = vmatprep.subr.bf16.mxu0 0
    %2999 = vmatpush2.bf16.msra.mxu0 0
    %3000 = vmatprep.subr.bf16.mxu0 0
    %3001 = vmatpush2.bf16.msra.mxu0 0
    %3002 = vmatprep.mubr.bf16.mxu0 0
    %3003 = vmatmul.mubr.bf16.gmra.mxu0 %v2947
    %v3004 = vpop.f32.mrf.mxu0
    %v3005 = vadd.f32 %v258, %v3004
    %v3006 = vpop.f32.mrf.mxu0
    %v3007 = vpop.f32.mrf.mxu0
    %v3008 = vadd.f32 %v258, %v3007
    %v3009 = vpop.f32.mrf.mxu0
    %3010 = vmatprep.mubr.bf16.mxu0 0
    %3011 = vmatmul.mubr.bf16.gmra.mxu0 %v2950
    %v3012 = vpop.f32.mrf.mxu0
    %v3013 = vadd.f32 %v258, %v3012
    %v3014 = vpop.f32.mrf.mxu0
    %v3015 = vpop.f32.mrf.mxu0
    %v3016 = vadd.f32 %v258, %v3015
    %v3017 = vpop.f32.mrf.mxu0
    %3018 = vmatprep.mubr.bf16.mxu0 0
    %3019 = vmatmul.mubr.bf16.gmra.mxu0 %v2953
    %v3020 = vpop.f32.mrf.mxu0
    %v3021 = vadd.f32 %v258, %v3020
    %v3022 = vpop.f32.mrf.mxu0
    %v3023 = vpop.f32.mrf.mxu0
    %v3024 = vadd.f32 %v258, %v3023
    %v3025 = vpop.f32.mrf.mxu0
    %3026 = vmatprep.mubr.bf16.mxu0 0
    %3027 = vmatmul.mubr.bf16.gmra.mxu0 %v2956
    %v3028 = vpop.f32.mrf.mxu0
    %v3029 = vadd.f32 %v258, %v3028
    %v3030 = vpop.f32.mrf.mxu0
    %v3031 = vpop.f32.mrf.mxu0
    %v3032 = vadd.f32 %v258, %v3031
    %v3033 = vpop.f32.mrf.mxu0
    %3034 = vmatprep.mubr.bf16.mxu0 0
    %3035 = vmatmul.mubr.bf16.gmra.mxu0 %v2959
    %v3036 = vpop.f32.mrf.mxu0
    %v3037 = vadd.f32 %v258, %v3036
    %v3038 = vpop.f32.mrf.mxu0
    %v3039 = vpop.f32.mrf.mxu0
    %v3040 = vadd.f32 %v258, %v3039
    %v3041 = vpop.f32.mrf.mxu0
    %3042 = vmatprep.mubr.bf16.mxu0 0
    %3043 = vmatmul.mubr.bf16.gmra.mxu0 %v2962
    %v3044 = vpop.f32.mrf.mxu0
    %v3045 = vadd.f32 %v258, %v3044
    %v3046 = vpop.f32.mrf.mxu0
    %v3047 = vpop.f32.mrf.mxu0
    %v3048 = vadd.f32 %v258, %v3047
    %v3049 = vpop.f32.mrf.mxu0
    %3050 = vmatprep.mubr.bf16.mxu0 0
    %3051 = vmatmul.mubr.bf16.gmra.mxu0 %v2965
    %v3052 = vpop.f32.mrf.mxu0
    %v3053 = vadd.f32 %v258, %v3052
    %v3054 = vpop.f32.mrf.mxu0
    %v3055 = vpop.f32.mrf.mxu0
    %v3056 = vadd.f32 %v258, %v3055
    %v3057 = vpop.f32.mrf.mxu0
    %3058 = vmatprep.mubr.bf16.mxu0 0
    %3059 = vmatmul.mubr.bf16.gmra.mxu0 %v2968
    %v3060 = vpop.f32.mrf.mxu0
    %v3061 = vadd.f32 %v258, %v3060
    %v3062 = vpop.f32.mrf.mxu0
    %v3063 = vpop.f32.mrf.mxu0
    %v3064 = vadd.f32 %v258, %v3063
    %v3065 = vpop.f32.mrf.mxu0
    %3066 = vdwg.mxu0
    %v3067 = vmax.f32 %v3005, 0.0
    %v3068 = vmax.f32 %v3008, 0.0
    %v3069 = vmax.f32 %v3013, 0.0
    %v3070 = vmax.f32 %v3016, 0.0
    %v3071 = vmax.f32 %v3021, 0.0
    %v3072 = vmax.f32 %v3024, 0.0
    %v3073 = vmax.f32 %v3029, 0.0
    %v3074 = vmax.f32 %v3032, 0.0
    %v3075 = vmax.f32 %v3037, 0.0
    %v3076 = vmax.f32 %v3040, 0.0
    %v3077 = vmax.f32 %v3045, 0.0
    %v3078 = vmax.f32 %v3048, 0.0
    %v3079 = vmax.f32 %v3053, 0.0
    %v3080 = vmax.f32 %v3056, 0.0
    %v3081 = vmax.f32 %v3061, 0.0
    %v3082 = vmax.f32 %v3064, 0.0
    %v3083 = vpack.c.bf16 %v3068, %v3067
    %v3084 = vpack.c.bf16 %v3070, %v3069
    %v3085 = vpack.c.bf16 %v3072, %v3071
    %v3086 = vpack.c.bf16 %v3074, %v3073
    %v3087 = vpack.c.bf16 %v3076, %v3075
    %v3088 = vpack.c.bf16 %v3078, %v3077
    %v3089 = vpack.c.bf16 %v3080, %v3079
    %v3090 = vpack.c.bf16 %v3082, %v3081
    %v3092 = vsel %vm284, %v3083, 0
    %v3095 = vsel %vm284, %v3084, 0
    %v3098 = vsel %vm284, %v3085, 0
    %v3101 = vsel %vm284, %v3086, 0
    %v3104 = vsel %vm284, %v3087, 0
    %v3107 = vsel %vm284, %v3088, 0
    %v3110 = vsel %vm284, %v3089, 0
    %v3113 = vsel %vm284, %v3090, 0
    %3115 = vmatprep.subr.bf16.mxu0 0
    %3116 = vmatpush1.bf16.xpose.msra.mxu0 %v3113
    %3117 = vmatprep.subr.bf16.mxu0 0
    %3118 = vmatpush1.bf16.xpose.msra.mxu0 %v3110
    %3119 = vmatprep.subr.bf16.mxu0 0
    %3120 = vmatpush1.bf16.xpose.msra.mxu0 %v3107
    %3121 = vmatprep.subr.bf16.mxu0 0
    %3122 = vmatpush1.bf16.xpose.msra.mxu0 %v3104
    %3123 = vmatprep.subr.bf16.mxu0 0
    %3124 = vmatpush1.bf16.xpose.msra.mxu0 %v3101
    %3125 = vmatprep.subr.bf16.mxu0 0
    %3126 = vmatpush1.bf16.xpose.msra.mxu0 %v3098
    %3127 = vmatprep.subr.bf16.mxu0 0
    %3128 = vmatpush1.bf16.xpose.msra.mxu0 %v3095
    %3129 = vmatprep.subr.bf16.mxu0 0
    %3130 = vmatpush1.bf16.xpose.msra.mxu0 %v3092
    %3131 = vmatprep.subr.bf16.mxu0 0
    %3132 = vmatpush2.bf16.xpose.msra.mxu0 0
    %3133 = vmatprep.subr.bf16.mxu0 0
    %3134 = vmatpush2.bf16.xpose.msra.mxu0 0
    %3135 = vmatprep.subr.bf16.mxu0 0
    %3136 = vmatpush2.bf16.xpose.msra.mxu0 0
    %3137 = vmatprep.subr.bf16.mxu0 0
    %3138 = vmatpush2.bf16.xpose.msra.mxu0 0
    %3139 = vmatprep.subr.bf16.mxu0 0
    %3140 = vmatpush2.bf16.xpose.msra.mxu0 0
    %3141 = vmatprep.subr.bf16.mxu0 0
    %3142 = vmatpush2.bf16.xpose.msra.mxu0 0
    %3143 = vmatprep.subr.bf16.mxu0 0
    %3144 = vmatpush2.bf16.xpose.msra.mxu0 0
    %3145 = vmatprep.subr.bf16.mxu0 0
    %3146 = vmatpush2.bf16.xpose.msra.mxu0 0
    %3147 = vmatprep.mubr.bf16.mxu0 0
    %3148 = vmatmul.mubr.bf16.gmra.mxu0 %v436
    %v3149 = vpop.f32.mrf.mxu0
    %v3150 = vadd.f32 %v433, %v3149
    %v3151 = vpop.f32.mrf.mxu0
    %v3152 = vpop.f32.mrf.mxu0
    %v3153 = vpop.f32.mrf.mxu0
    %3154 = vdwg.mxu0
    %3155 = vst [vmem:[#allocation2 + $0xe] sm:$0x3] %v3150
    %v3156 = vld [vmem:[%s0 + $0x400] sm:$0xff]
    %v3157 = vld [vmem:[%s0 + $0x408] sm:$0xff]
    %v3158 = vld [vmem:[%s0 + $0x410] sm:$0xff]
    %v3159 = vld [vmem:[%s0 + $0x418] sm:$0xff]
    %v3160 = vld [vmem:[%s0 + $0x420] sm:$0xff]
    %v3161 = vld [vmem:[%s0 + $0x428] sm:$0xff]
    %v3162 = vld [vmem:[%s0 + $0x430] sm:$0xff]
    %v3163 = vld [vmem:[%s0 + $0x438] sm:$0xff]
    %v3164 = vld [vmem:[%s0 + $0x440] sm:$0xff]
    %v3165 = vld [vmem:[%s0 + $0x448] sm:$0xff]
    %v3166 = vld [vmem:[%s0 + $0x450] sm:$0xff]
    %v3167 = vld [vmem:[%s0 + $0x458] sm:$0xff]
    %v3168 = vld [vmem:[%s0 + $0x460] sm:$0xff]
    %v3169 = vld [vmem:[%s0 + $0x468] sm:$0xff]
    %v3170 = vld [vmem:[%s0 + $0x470] sm:$0xff]
    %v3171 = vld [vmem:[%s0 + $0x478] sm:$0xff]
    %v3172 = vpack.c.bf16 %v3157, %v3156
    %v3173 = vpack.c.bf16 %v3159, %v3158
    %v3174 = vpack.c.bf16 %v3161, %v3160
    %v3175 = vpack.c.bf16 %v3163, %v3162
    %v3176 = vpack.c.bf16 %v3165, %v3164
    %v3177 = vpack.c.bf16 %v3167, %v3166
    %v3178 = vpack.c.bf16 %v3169, %v3168
    %v3179 = vpack.c.bf16 %v3171, %v3170
    %v3181 = vsel %vm101, %v3172, 0
    %v3184 = vsel %vm101, %v3173, 0
    %v3187 = vsel %vm101, %v3174, 0
    %v3190 = vsel %vm101, %v3175, 0
    %v3193 = vsel %vm101, %v3176, 0
    %v3196 = vsel %vm101, %v3177, 0
    %v3199 = vsel %vm101, %v3178, 0
    %v3202 = vsel %vm101, %v3179, 0
    %3204 = vmatprep.subr.bf16.mxu0 0
    %3205 = vmatpush1.bf16.msra.mxu0 0
    %3206 = vmatprep.subr.bf16.mxu0 0
    %3207 = vmatpush1.bf16.msra.mxu0 0
    %3208 = vmatprep.subr.bf16.mxu0 0
    %3209 = vmatpush1.bf16.msra.mxu0 0
    %3210 = vmatprep.subr.bf16.mxu0 0
    %3211 = vmatpush1.bf16.msra.mxu0 0
    %3212 = vmatprep.subr.bf16.mxu0 0
    %3213 = vmatpush1.bf16.msra.mxu0 %v131
    %3214 = vmatprep.subr.bf16.mxu0 0
    %3215 = vmatpush1.bf16.msra.mxu0 %v96
    %3216 = vmatprep.subr.bf16.mxu0 0
    %3217 = vmatpush1.bf16.msra.mxu0 %v95
    %3218 = vmatprep.subr.bf16.mxu0 0
    %3219 = vmatpush1.bf16.msra.mxu0 %v94
    %3220 = vmatprep.subr.bf16.mxu0 0
    %3221 = vmatpush2.bf16.msra.mxu0 0
    %3222 = vmatprep.subr.bf16.mxu0 0
    %3223 = vmatpush2.bf16.msra.mxu0 0
    %3224 = vmatprep.subr.bf16.mxu0 0
    %3225 = vmatpush2.bf16.msra.mxu0 0
    %3226 = vmatprep.subr.bf16.mxu0 0
    %3227 = vmatpush2.bf16.msra.mxu0 0
    %3228 = vmatprep.subr.bf16.mxu0 0
    %3229 = vmatpush2.bf16.msra.mxu0 0
    %3230 = vmatprep.subr.bf16.mxu0 0
    %3231 = vmatpush2.bf16.msra.mxu0 0
    %3232 = vmatprep.subr.bf16.mxu0 0
    %3233 = vmatpush2.bf16.msra.mxu0 0
    %3234 = vmatprep.subr.bf16.mxu0 0
    %3235 = vmatpush2.bf16.msra.mxu0 0
    %3236 = vmatprep.mubr.bf16.mxu0 0
    %3237 = vmatmul.mubr.bf16.gmra.mxu0 %v3181
    %v3238 = vpop.f32.mrf.mxu0
    %v3239 = vadd.f32 %v76, %v3238
    %v3240 = vpop.f32.mrf.mxu0
    %v3241 = vpop.f32.mrf.mxu0
    %v3242 = vadd.f32 %v76, %v3241
    %v3243 = vpop.f32.mrf.mxu0
    %3244 = vmatprep.mubr.bf16.mxu0 0
    %3245 = vmatmul.mubr.bf16.gmra.mxu0 %v3184
    %v3246 = vpop.f32.mrf.mxu0
    %v3247 = vadd.f32 %v76, %v3246
    %v3248 = vpop.f32.mrf.mxu0
    %v3249 = vpop.f32.mrf.mxu0
    %v3250 = vadd.f32 %v76, %v3249
    %v3251 = vpop.f32.mrf.mxu0
    %3252 = vmatprep.mubr.bf16.mxu0 0
    %3253 = vmatmul.mubr.bf16.gmra.mxu0 %v3187
    %v3254 = vpop.f32.mrf.mxu0
    %v3255 = vadd.f32 %v76, %v3254
    %v3256 = vpop.f32.mrf.mxu0
    %v3257 = vpop.f32.mrf.mxu0
    %v3258 = vadd.f32 %v76, %v3257
    %v3259 = vpop.f32.mrf.mxu0
    %3260 = vmatprep.mubr.bf16.mxu0 0
    %3261 = vmatmul.mubr.bf16.gmra.mxu0 %v3190
    %v3262 = vpop.f32.mrf.mxu0
    %v3263 = vadd.f32 %v76, %v3262
    %v3264 = vpop.f32.mrf.mxu0
    %v3265 = vpop.f32.mrf.mxu0
    %v3266 = vadd.f32 %v76, %v3265
    %v3267 = vpop.f32.mrf.mxu0
    %3268 = vmatprep.mubr.bf16.mxu0 0
    %3269 = vmatmul.mubr.bf16.gmra.mxu0 %v3193
    %v3270 = vpop.f32.mrf.mxu0
    %v3271 = vadd.f32 %v76, %v3270
    %v3272 = vpop.f32.mrf.mxu0
    %v3273 = vpop.f32.mrf.mxu0
    %v3274 = vadd.f32 %v76, %v3273
    %v3275 = vpop.f32.mrf.mxu0
    %3276 = vmatprep.mubr.bf16.mxu0 0
    %3277 = vmatmul.mubr.bf16.gmra.mxu0 %v3196
    %v3278 = vpop.f32.mrf.mxu0
    %v3279 = vadd.f32 %v76, %v3278
    %v3280 = vpop.f32.mrf.mxu0
    %v3281 = vpop.f32.mrf.mxu0
    %v3282 = vadd.f32 %v76, %v3281
    %v3283 = vpop.f32.mrf.mxu0
    %3284 = vmatprep.mubr.bf16.mxu0 0
    %3285 = vmatmul.mubr.bf16.gmra.mxu0 %v3199
    %v3286 = vpop.f32.mrf.mxu0
    %v3287 = vadd.f32 %v76, %v3286
    %v3288 = vpop.f32.mrf.mxu0
    %v3289 = vpop.f32.mrf.mxu0
    %v3290 = vadd.f32 %v76, %v3289
    %v3291 = vpop.f32.mrf.mxu0
    %3292 = vmatprep.mubr.bf16.mxu0 0
    %3293 = vmatmul.mubr.bf16.gmra.mxu0 %v3202
    %v3294 = vpop.f32.mrf.mxu0
    %v3295 = vadd.f32 %v76, %v3294
    %v3296 = vpop.f32.mrf.mxu0
    %v3297 = vpop.f32.mrf.mxu0
    %v3298 = vadd.f32 %v76, %v3297
    %v3299 = vpop.f32.mrf.mxu0
    %3300 = vdwg.mxu0
    %v3301 = vmax.f32 %v3239, 0.0
    %v3302 = vmax.f32 %v3242, 0.0
    %v3303 = vmax.f32 %v3247, 0.0
    %v3304 = vmax.f32 %v3250, 0.0
    %v3305 = vmax.f32 %v3255, 0.0
    %v3306 = vmax.f32 %v3258, 0.0
    %v3307 = vmax.f32 %v3263, 0.0
    %v3308 = vmax.f32 %v3266, 0.0
    %v3309 = vmax.f32 %v3271, 0.0
    %v3310 = vmax.f32 %v3274, 0.0
    %v3311 = vmax.f32 %v3279, 0.0
    %v3312 = vmax.f32 %v3282, 0.0
    %v3313 = vmax.f32 %v3287, 0.0
    %v3314 = vmax.f32 %v3290, 0.0
    %v3315 = vmax.f32 %v3295, 0.0
    %v3316 = vmax.f32 %v3298, 0.0
    %v3317 = vpack.c.bf16 %v3302, %v3301
    %v3318 = vpack.c.bf16 %v3304, %v3303
    %v3319 = vpack.c.bf16 %v3306, %v3305
    %v3320 = vpack.c.bf16 %v3308, %v3307
    %v3321 = vpack.c.bf16 %v3310, %v3309
    %v3322 = vpack.c.bf16 %v3312, %v3311
    %v3323 = vpack.c.bf16 %v3314, %v3313
    %v3324 = vpack.c.bf16 %v3316, %v3315
    %v3326 = vsel %vm284, %v3317, 0
    %v3329 = vsel %vm284, %v3318, 0
    %v3332 = vsel %vm284, %v3319, 0
    %v3335 = vsel %vm284, %v3320, 0
    %v3338 = vsel %vm284, %v3321, 0
    %v3341 = vsel %vm284, %v3322, 0
    %v3344 = vsel %vm284, %v3323, 0
    %v3347 = vsel %vm284, %v3324, 0
    %3349 = vmatprep.subr.bf16.mxu0 0
    %3350 = vmatpush1.bf16.msra.mxu0 0
    %3351 = vmatprep.subr.bf16.mxu0 0
    %3352 = vmatpush1.bf16.msra.mxu0 0
    %3353 = vmatprep.subr.bf16.mxu0 0
    %3354 = vmatpush1.bf16.msra.mxu0 0
    %3355 = vmatprep.subr.bf16.mxu0 0
    %3356 = vmatpush1.bf16.msra.mxu0 0
    %3357 = vmatprep.subr.bf16.mxu0 0
    %3358 = vmatpush1.bf16.msra.mxu0 %v279
    %3359 = vmatprep.subr.bf16.mxu0 0
    %3360 = vmatpush1.bf16.msra.mxu0 %v278
    %3361 = vmatprep.subr.bf16.mxu0 0
    %3362 = vmatpush1.bf16.msra.mxu0 %v277
    %3363 = vmatprep.subr.bf16.mxu0 0
    %3364 = vmatpush1.bf16.msra.mxu0 %v276
    %3365 = vmatprep.subr.bf16.mxu0 0
    %3366 = vmatpush2.bf16.msra.mxu0 0
    %3367 = vmatprep.subr.bf16.mxu0 0
    %3368 = vmatpush2.bf16.msra.mxu0 0
    %3369 = vmatprep.subr.bf16.mxu0 0
    %3370 = vmatpush2.bf16.msra.mxu0 0
    %3371 = vmatprep.subr.bf16.mxu0 0
    %3372 = vmatpush2.bf16.msra.mxu0 0
    %3373 = vmatprep.subr.bf16.mxu0 0
    %3374 = vmatpush2.bf16.msra.mxu0 0
    %3375 = vmatprep.subr.bf16.mxu0 0
    %3376 = vmatpush2.bf16.msra.mxu0 0
    %3377 = vmatprep.subr.bf16.mxu0 0
    %3378 = vmatpush2.bf16.msra.mxu0 0
    %3379 = vmatprep.subr.bf16.mxu0 0
    %3380 = vmatpush2.bf16.msra.mxu0 0
    %3381 = vmatprep.mubr.bf16.mxu0 0
    %3382 = vmatmul.mubr.bf16.gmra.mxu0 %v3326
    %v3383 = vpop.f32.mrf.mxu0
    %v3384 = vadd.f32 %v258, %v3383
    %v3385 = vpop.f32.mrf.mxu0
    %v3386 = vpop.f32.mrf.mxu0
    %v3387 = vadd.f32 %v258, %v3386
    %v3388 = vpop.f32.mrf.mxu0
    %3389 = vmatprep.mubr.bf16.mxu0 0
    %3390 = vmatmul.mubr.bf16.gmra.mxu0 %v3329
    %v3391 = vpop.f32.mrf.mxu0
    %v3392 = vadd.f32 %v258, %v3391
    %v3393 = vpop.f32.mrf.mxu0
    %v3394 = vpop.f32.mrf.mxu0
    %v3395 = vadd.f32 %v258, %v3394
    %v3396 = vpop.f32.mrf.mxu0
    %3397 = vmatprep.mubr.bf16.mxu0 0
    %3398 = vmatmul.mubr.bf16.gmra.mxu0 %v3332
    %v3399 = vpop.f32.mrf.mxu0
    %v3400 = vadd.f32 %v258, %v3399
    %v3401 = vpop.f32.mrf.mxu0
    %v3402 = vpop.f32.mrf.mxu0
    %v3403 = vadd.f32 %v258, %v3402
    %v3404 = vpop.f32.mrf.mxu0
    %3405 = vmatprep.mubr.bf16.mxu0 0
    %3406 = vmatmul.mubr.bf16.gmra.mxu0 %v3335
    %v3407 = vpop.f32.mrf.mxu0
    %v3408 = vadd.f32 %v258, %v3407
    %v3409 = vpop.f32.mrf.mxu0
    %v3410 = vpop.f32.mrf.mxu0
    %v3411 = vadd.f32 %v258, %v3410
    %v3412 = vpop.f32.mrf.mxu0
    %3413 = vmatprep.mubr.bf16.mxu0 0
    %3414 = vmatmul.mubr.bf16.gmra.mxu0 %v3338
    %v3415 = vpop.f32.mrf.mxu0
    %v3416 = vadd.f32 %v258, %v3415
    %v3417 = vpop.f32.mrf.mxu0
    %v3418 = vpop.f32.mrf.mxu0
    %v3419 = vadd.f32 %v258, %v3418
    %v3420 = vpop.f32.mrf.mxu0
    %3421 = vmatprep.mubr.bf16.mxu0 0
    %3422 = vmatmul.mubr.bf16.gmra.mxu0 %v3341
    %v3423 = vpop.f32.mrf.mxu0
    %v3424 = vadd.f32 %v258, %v3423
    %v3425 = vpop.f32.mrf.mxu0
    %v3426 = vpop.f32.mrf.mxu0
    %v3427 = vadd.f32 %v258, %v3426
    %v3428 = vpop.f32.mrf.mxu0
    %3429 = vmatprep.mubr.bf16.mxu0 0
    %3430 = vmatmul.mubr.bf16.gmra.mxu0 %v3344
    %v3431 = vpop.f32.mrf.mxu0
    %v3432 = vadd.f32 %v258, %v3431
    %v3433 = vpop.f32.mrf.mxu0
    %v3434 = vpop.f32.mrf.mxu0
    %v3435 = vadd.f32 %v258, %v3434
    %v3436 = vpop.f32.mrf.mxu0
    %3437 = vmatprep.mubr.bf16.mxu0 0
    %3438 = vmatmul.mubr.bf16.gmra.mxu0 %v3347
    %v3439 = vpop.f32.mrf.mxu0
    %v3440 = vadd.f32 %v258, %v3439
    %v3441 = vpop.f32.mrf.mxu0
    %v3442 = vpop.f32.mrf.mxu0
    %v3443 = vadd.f32 %v258, %v3442
    %v3444 = vpop.f32.mrf.mxu0
    %3445 = vdwg.mxu0
    %v3446 = vmax.f32 %v3384, 0.0
    %v3447 = vmax.f32 %v3387, 0.0
    %v3448 = vmax.f32 %v3392, 0.0
    %v3449 = vmax.f32 %v3395, 0.0
    %v3450 = vmax.f32 %v3400, 0.0
    %v3451 = vmax.f32 %v3403, 0.0
    %v3452 = vmax.f32 %v3408, 0.0
    %v3453 = vmax.f32 %v3411, 0.0
    %v3454 = vmax.f32 %v3416, 0.0
    %v3455 = vmax.f32 %v3419, 0.0
    %v3456 = vmax.f32 %v3424, 0.0
    %v3457 = vmax.f32 %v3427, 0.0
    %v3458 = vmax.f32 %v3432, 0.0
    %v3459 = vmax.f32 %v3435, 0.0
    %v3460 = vmax.f32 %v3440, 0.0
    %v3461 = vmax.f32 %v3443, 0.0
    %v3462 = vpack.c.bf16 %v3447, %v3446
    %v3463 = vpack.c.bf16 %v3449, %v3448
    %v3464 = vpack.c.bf16 %v3451, %v3450
    %v3465 = vpack.c.bf16 %v3453, %v3452
    %v3466 = vpack.c.bf16 %v3455, %v3454
    %v3467 = vpack.c.bf16 %v3457, %v3456
    %v3468 = vpack.c.bf16 %v3459, %v3458
    %v3469 = vpack.c.bf16 %v3461, %v3460
    %v3471 = vsel %vm284, %v3462, 0
    %v3474 = vsel %vm284, %v3463, 0
    %v3477 = vsel %vm284, %v3464, 0
    %v3480 = vsel %vm284, %v3465, 0
    %v3483 = vsel %vm284, %v3466, 0
    %v3486 = vsel %vm284, %v3467, 0
    %v3489 = vsel %vm284, %v3468, 0
    %v3492 = vsel %vm284, %v3469, 0
    %3494 = vmatprep.subr.bf16.mxu0 0
    %3495 = vmatpush1.bf16.xpose.msra.mxu0 %v3492
    %3496 = vmatprep.subr.bf16.mxu0 0
    %3497 = vmatpush1.bf16.xpose.msra.mxu0 %v3489
    %3498 = vmatprep.subr.bf16.mxu0 0
    %3499 = vmatpush1.bf16.xpose.msra.mxu0 %v3486
    %3500 = vmatprep.subr.bf16.mxu0 0
    %3501 = vmatpush1.bf16.xpose.msra.mxu0 %v3483
    %3502 = vmatprep.subr.bf16.mxu0 0
    %3503 = vmatpush1.bf16.xpose.msra.mxu0 %v3480
    %3504 = vmatprep.subr.bf16.mxu0 0
    %3505 = vmatpush1.bf16.xpose.msra.mxu0 %v3477
    %3506 = vmatprep.subr.bf16.mxu0 0
    %3507 = vmatpush1.bf16.xpose.msra.mxu0 %v3474
    %3508 = vmatprep.subr.bf16.mxu0 0
    %3509 = vmatpush1.bf16.xpose.msra.mxu0 %v3471
    %3510 = vmatprep.subr.bf16.mxu0 0
    %3511 = vmatpush2.bf16.xpose.msra.mxu0 0
    %3512 = vmatprep.subr.bf16.mxu0 0
    %3513 = vmatpush2.bf16.xpose.msra.mxu0 0
    %3514 = vmatprep.subr.bf16.mxu0 0
    %3515 = vmatpush2.bf16.xpose.msra.mxu0 0
    %3516 = vmatprep.subr.bf16.mxu0 0
    %3517 = vmatpush2.bf16.xpose.msra.mxu0 0
    %3518 = vmatprep.subr.bf16.mxu0 0
    %3519 = vmatpush2.bf16.xpose.msra.mxu0 0
    %3520 = vmatprep.subr.bf16.mxu0 0
    %3521 = vmatpush2.bf16.xpose.msra.mxu0 0
    %3522 = vmatprep.subr.bf16.mxu0 0
    %3523 = vmatpush2.bf16.xpose.msra.mxu0 0
    %3524 = vmatprep.subr.bf16.mxu0 0
    %3525 = vmatpush2.bf16.xpose.msra.mxu0 0
    %3526 = vmatprep.mubr.bf16.mxu0 0
    %3527 = vmatmul.mubr.bf16.gmra.mxu0 %v436
    %v3528 = vpop.f32.mrf.mxu0
    %v3529 = vadd.f32 %v433, %v3528
    %v3530 = vpop.f32.mrf.mxu0
    %v3531 = vpop.f32.mrf.mxu0
    %v3532 = vpop.f32.mrf.mxu0
    %3533 = vdwg.mxu0
    %3534 = vst [vmem:[#allocation2 + $0x10] sm:$0x3] %v3529
    %v3535 = vld [vmem:[%s0 + $0x480] sm:$0xff]
    %v3536 = vld [vmem:[%s0 + $0x488] sm:$0xff]
    %v3537 = vld [vmem:[%s0 + $0x490] sm:$0xff]
    %v3538 = vld [vmem:[%s0 + $0x498] sm:$0xff]
    %v3539 = vld [vmem:[%s0 + $0x4a0] sm:$0xff]
    %v3540 = vld [vmem:[%s0 + $0x4a8] sm:$0xff]
    %v3541 = vld [vmem:[%s0 + $0x4b0] sm:$0xff]
    %v3542 = vld [vmem:[%s0 + $0x4b8] sm:$0xff]
    %v3543 = vld [vmem:[%s0 + $0x4c0] sm:$0xff]
    %v3544 = vld [vmem:[%s0 + $0x4c8] sm:$0xff]
    %v3545 = vld [vmem:[%s0 + $0x4d0] sm:$0xff]
    %v3546 = vld [vmem:[%s0 + $0x4d8] sm:$0xff]
    %v3547 = vld [vmem:[%s0 + $0x4e0] sm:$0xff]
    %v3548 = vld [vmem:[%s0 + $0x4e8] sm:$0xff]
    %v3549 = vld [vmem:[%s0 + $0x4f0] sm:$0xff]
    %v3550 = vld [vmem:[%s0 + $0x4f8] sm:$0xff]
    %v3551 = vpack.c.bf16 %v3536, %v3535
    %v3552 = vpack.c.bf16 %v3538, %v3537
    %v3553 = vpack.c.bf16 %v3540, %v3539
    %v3554 = vpack.c.bf16 %v3542, %v3541
    %v3555 = vpack.c.bf16 %v3544, %v3543
    %v3556 = vpack.c.bf16 %v3546, %v3545
    %v3557 = vpack.c.bf16 %v3548, %v3547
    %v3558 = vpack.c.bf16 %v3550, %v3549
    %v3560 = vsel %vm101, %v3551, 0
    %v3563 = vsel %vm101, %v3552, 0
    %v3566 = vsel %vm101, %v3553, 0
    %v3569 = vsel %vm101, %v3554, 0
    %v3572 = vsel %vm101, %v3555, 0
    %v3575 = vsel %vm101, %v3556, 0
    %v3578 = vsel %vm101, %v3557, 0
    %v3581 = vsel %vm101, %v3558, 0
    %3583 = vmatprep.subr.bf16.mxu0 0
    %3584 = vmatpush1.bf16.msra.mxu0 0
    %3585 = vmatprep.subr.bf16.mxu0 0
    %3586 = vmatpush1.bf16.msra.mxu0 0
    %3587 = vmatprep.subr.bf16.mxu0 0
    %3588 = vmatpush1.bf16.msra.mxu0 0
    %3589 = vmatprep.subr.bf16.mxu0 0
    %3590 = vmatpush1.bf16.msra.mxu0 0
    %3591 = vmatprep.subr.bf16.mxu0 0
    %3592 = vmatpush1.bf16.msra.mxu0 %v131
    %3593 = vmatprep.subr.bf16.mxu0 0
    %3594 = vmatpush1.bf16.msra.mxu0 %v96
    %3595 = vmatprep.subr.bf16.mxu0 0
    %3596 = vmatpush1.bf16.msra.mxu0 %v95
    %3597 = vmatprep.subr.bf16.mxu0 0
    %3598 = vmatpush1.bf16.msra.mxu0 %v94
    %3599 = vmatprep.subr.bf16.mxu0 0
    %3600 = vmatpush2.bf16.msra.mxu0 0
    %3601 = vmatprep.subr.bf16.mxu0 0
    %3602 = vmatpush2.bf16.msra.mxu0 0
    %3603 = vmatprep.subr.bf16.mxu0 0
    %3604 = vmatpush2.bf16.msra.mxu0 0
    %3605 = vmatprep.subr.bf16.mxu0 0
    %3606 = vmatpush2.bf16.msra.mxu0 0
    %3607 = vmatprep.subr.bf16.mxu0 0
    %3608 = vmatpush2.bf16.msra.mxu0 0
    %3609 = vmatprep.subr.bf16.mxu0 0
    %3610 = vmatpush2.bf16.msra.mxu0 0
    %3611 = vmatprep.subr.bf16.mxu0 0
    %3612 = vmatpush2.bf16.msra.mxu0 0
    %3613 = vmatprep.subr.bf16.mxu0 0
    %3614 = vmatpush2.bf16.msra.mxu0 0
    %3615 = vmatprep.mubr.bf16.mxu0 0
    %3616 = vmatmul.mubr.bf16.gmra.mxu0 %v3560
    %v3617 = vpop.f32.mrf.mxu0
    %v3618 = vadd.f32 %v76, %v3617
    %v3619 = vpop.f32.mrf.mxu0
    %v3620 = vpop.f32.mrf.mxu0
    %v3621 = vadd.f32 %v76, %v3620
    %v3622 = vpop.f32.mrf.mxu0
    %3623 = vmatprep.mubr.bf16.mxu0 0
    %3624 = vmatmul.mubr.bf16.gmra.mxu0 %v3563
    %v3625 = vpop.f32.mrf.mxu0
    %v3626 = vadd.f32 %v76, %v3625
    %v3627 = vpop.f32.mrf.mxu0
    %v3628 = vpop.f32.mrf.mxu0
    %v3629 = vadd.f32 %v76, %v3628
    %v3630 = vpop.f32.mrf.mxu0
    %3631 = vmatprep.mubr.bf16.mxu0 0
    %3632 = vmatmul.mubr.bf16.gmra.mxu0 %v3566
    %v3633 = vpop.f32.mrf.mxu0
    %v3634 = vadd.f32 %v76, %v3633
    %v3635 = vpop.f32.mrf.mxu0
    %v3636 = vpop.f32.mrf.mxu0
    %v3637 = vadd.f32 %v76, %v3636
    %v3638 = vpop.f32.mrf.mxu0
    %3639 = vmatprep.mubr.bf16.mxu0 0
    %3640 = vmatmul.mubr.bf16.gmra.mxu0 %v3569
    %v3641 = vpop.f32.mrf.mxu0
    %v3642 = vadd.f32 %v76, %v3641
    %v3643 = vpop.f32.mrf.mxu0
    %v3644 = vpop.f32.mrf.mxu0
    %v3645 = vadd.f32 %v76, %v3644
    %v3646 = vpop.f32.mrf.mxu0
    %3647 = vmatprep.mubr.bf16.mxu0 0
    %3648 = vmatmul.mubr.bf16.gmra.mxu0 %v3572
    %v3649 = vpop.f32.mrf.mxu0
    %v3650 = vadd.f32 %v76, %v3649
    %v3651 = vpop.f32.mrf.mxu0
    %v3652 = vpop.f32.mrf.mxu0
    %v3653 = vadd.f32 %v76, %v3652
    %v3654 = vpop.f32.mrf.mxu0
    %3655 = vmatprep.mubr.bf16.mxu0 0
    %3656 = vmatmul.mubr.bf16.gmra.mxu0 %v3575
    %v3657 = vpop.f32.mrf.mxu0
    %v3658 = vadd.f32 %v76, %v3657
    %v3659 = vpop.f32.mrf.mxu0
    %v3660 = vpop.f32.mrf.mxu0
    %v3661 = vadd.f32 %v76, %v3660
    %v3662 = vpop.f32.mrf.mxu0
    %3663 = vmatprep.mubr.bf16.mxu0 0
    %3664 = vmatmul.mubr.bf16.gmra.mxu0 %v3578
    %v3665 = vpop.f32.mrf.mxu0
    %v3666 = vadd.f32 %v76, %v3665
    %v3667 = vpop.f32.mrf.mxu0
    %v3668 = vpop.f32.mrf.mxu0
    %v3669 = vadd.f32 %v76, %v3668
    %v3670 = vpop.f32.mrf.mxu0
    %3671 = vmatprep.mubr.bf16.mxu0 0
    %3672 = vmatmul.mubr.bf16.gmra.mxu0 %v3581
    %v3673 = vpop.f32.mrf.mxu0
    %v3674 = vadd.f32 %v76, %v3673
    %v3675 = vpop.f32.mrf.mxu0
    %v3676 = vpop.f32.mrf.mxu0
    %v3677 = vadd.f32 %v76, %v3676
    %v3678 = vpop.f32.mrf.mxu0
    %3679 = vdwg.mxu0
    %v3680 = vmax.f32 %v3618, 0.0
    %v3681 = vmax.f32 %v3621, 0.0
    %v3682 = vmax.f32 %v3626, 0.0
    %v3683 = vmax.f32 %v3629, 0.0
    %v3684 = vmax.f32 %v3634, 0.0
    %v3685 = vmax.f32 %v3637, 0.0
    %v3686 = vmax.f32 %v3642, 0.0
    %v3687 = vmax.f32 %v3645, 0.0
    %v3688 = vmax.f32 %v3650, 0.0
    %v3689 = vmax.f32 %v3653, 0.0
    %v3690 = vmax.f32 %v3658, 0.0
    %v3691 = vmax.f32 %v3661, 0.0
    %v3692 = vmax.f32 %v3666, 0.0
    %v3693 = vmax.f32 %v3669, 0.0
    %v3694 = vmax.f32 %v3674, 0.0
    %v3695 = vmax.f32 %v3677, 0.0
    %v3696 = vpack.c.bf16 %v3681, %v3680
    %v3697 = vpack.c.bf16 %v3683, %v3682
    %v3698 = vpack.c.bf16 %v3685, %v3684
    %v3699 = vpack.c.bf16 %v3687, %v3686
    %v3700 = vpack.c.bf16 %v3689, %v3688
    %v3701 = vpack.c.bf16 %v3691, %v3690
    %v3702 = vpack.c.bf16 %v3693, %v3692
    %v3703 = vpack.c.bf16 %v3695, %v3694
    %v3705 = vsel %vm284, %v3696, 0
    %v3708 = vsel %vm284, %v3697, 0
    %v3711 = vsel %vm284, %v3698, 0
    %v3714 = vsel %vm284, %v3699, 0
    %v3717 = vsel %vm284, %v3700, 0
    %v3720 = vsel %vm284, %v3701, 0
    %v3723 = vsel %vm284, %v3702, 0
    %v3726 = vsel %vm284, %v3703, 0
    %3728 = vmatprep.subr.bf16.mxu0 0
    %3729 = vmatpush1.bf16.msra.mxu0 0
    %3730 = vmatprep.subr.bf16.mxu0 0
    %3731 = vmatpush1.bf16.msra.mxu0 0
    %3732 = vmatprep.subr.bf16.mxu0 0
    %3733 = vmatpush1.bf16.msra.mxu0 0
    %3734 = vmatprep.subr.bf16.mxu0 0
    %3735 = vmatpush1.bf16.msra.mxu0 0
    %3736 = vmatprep.subr.bf16.mxu0 0
    %3737 = vmatpush1.bf16.msra.mxu0 %v279
    %3738 = vmatprep.subr.bf16.mxu0 0
    %3739 = vmatpush1.bf16.msra.mxu0 %v278
    %3740 = vmatprep.subr.bf16.mxu0 0
    %3741 = vmatpush1.bf16.msra.mxu0 %v277
    %3742 = vmatprep.subr.bf16.mxu0 0
    %3743 = vmatpush1.bf16.msra.mxu0 %v276
    %3744 = vmatprep.subr.bf16.mxu0 0
    %3745 = vmatpush2.bf16.msra.mxu0 0
    %3746 = vmatprep.subr.bf16.mxu0 0
    %3747 = vmatpush2.bf16.msra.mxu0 0
    %3748 = vmatprep.subr.bf16.mxu0 0
    %3749 = vmatpush2.bf16.msra.mxu0 0
    %3750 = vmatprep.subr.bf16.mxu0 0
    %3751 = vmatpush2.bf16.msra.mxu0 0
    %3752 = vmatprep.subr.bf16.mxu0 0
    %3753 = vmatpush2.bf16.msra.mxu0 0
    %3754 = vmatprep.subr.bf16.mxu0 0
    %3755 = vmatpush2.bf16.msra.mxu0 0
    %3756 = vmatprep.subr.bf16.mxu0 0
    %3757 = vmatpush2.bf16.msra.mxu0 0
    %3758 = vmatprep.subr.bf16.mxu0 0
    %3759 = vmatpush2.bf16.msra.mxu0 0
    %3760 = vmatprep.mubr.bf16.mxu0 0
    %3761 = vmatmul.mubr.bf16.gmra.mxu0 %v3705
    %v3762 = vpop.f32.mrf.mxu0
    %v3763 = vadd.f32 %v258, %v3762
    %v3764 = vpop.f32.mrf.mxu0
    %v3765 = vpop.f32.mrf.mxu0
    %v3766 = vadd.f32 %v258, %v3765
    %v3767 = vpop.f32.mrf.mxu0
    %3768 = vmatprep.mubr.bf16.mxu0 0
    %3769 = vmatmul.mubr.bf16.gmra.mxu0 %v3708
    %v3770 = vpop.f32.mrf.mxu0
    %v3771 = vadd.f32 %v258, %v3770
    %v3772 = vpop.f32.mrf.mxu0
    %v3773 = vpop.f32.mrf.mxu0
    %v3774 = vadd.f32 %v258, %v3773
    %v3775 = vpop.f32.mrf.mxu0
    %3776 = vmatprep.mubr.bf16.mxu0 0
    %3777 = vmatmul.mubr.bf16.gmra.mxu0 %v3711
    %v3778 = vpop.f32.mrf.mxu0
    %v3779 = vadd.f32 %v258, %v3778
    %v3780 = vpop.f32.mrf.mxu0
    %v3781 = vpop.f32.mrf.mxu0
    %v3782 = vadd.f32 %v258, %v3781
    %v3783 = vpop.f32.mrf.mxu0
    %3784 = vmatprep.mubr.bf16.mxu0 0
    %3785 = vmatmul.mubr.bf16.gmra.mxu0 %v3714
    %v3786 = vpop.f32.mrf.mxu0
    %v3787 = vadd.f32 %v258, %v3786
    %v3788 = vpop.f32.mrf.mxu0
    %v3789 = vpop.f32.mrf.mxu0
    %v3790 = vadd.f32 %v258, %v3789
    %v3791 = vpop.f32.mrf.mxu0
    %3792 = vmatprep.mubr.bf16.mxu0 0
    %3793 = vmatmul.mubr.bf16.gmra.mxu0 %v3717
    %v3794 = vpop.f32.mrf.mxu0
    %v3795 = vadd.f32 %v258, %v3794
    %v3796 = vpop.f32.mrf.mxu0
    %v3797 = vpop.f32.mrf.mxu0
    %v3798 = vadd.f32 %v258, %v3797
    %v3799 = vpop.f32.mrf.mxu0
    %3800 = vmatprep.mubr.bf16.mxu0 0
    %3801 = vmatmul.mubr.bf16.gmra.mxu0 %v3720
    %v3802 = vpop.f32.mrf.mxu0
    %v3803 = vadd.f32 %v258, %v3802
    %v3804 = vpop.f32.mrf.mxu0
    %v3805 = vpop.f32.mrf.mxu0
    %v3806 = vadd.f32 %v258, %v3805
    %v3807 = vpop.f32.mrf.mxu0
    %3808 = vmatprep.mubr.bf16.mxu0 0
    %3809 = vmatmul.mubr.bf16.gmra.mxu0 %v3723
    %v3810 = vpop.f32.mrf.mxu0
    %v3811 = vadd.f32 %v258, %v3810
    %v3812 = vpop.f32.mrf.mxu0
    %v3813 = vpop.f32.mrf.mxu0
    %v3814 = vadd.f32 %v258, %v3813
    %v3815 = vpop.f32.mrf.mxu0
    %3816 = vmatprep.mubr.bf16.mxu0 0
    %3817 = vmatmul.mubr.bf16.gmra.mxu0 %v3726
    %v3818 = vpop.f32.mrf.mxu0
    %v3819 = vadd.f32 %v258, %v3818
    %v3820 = vpop.f32.mrf.mxu0
    %v3821 = vpop.f32.mrf.mxu0
    %v3822 = vadd.f32 %v258, %v3821
    %v3823 = vpop.f32.mrf.mxu0
    %3824 = vdwg.mxu0
    %v3825 = vmax.f32 %v3763, 0.0
    %v3826 = vmax.f32 %v3766, 0.0
    %v3827 = vmax.f32 %v3771, 0.0
    %v3828 = vmax.f32 %v3774, 0.0
    %v3829 = vmax.f32 %v3779, 0.0
    %v3830 = vmax.f32 %v3782, 0.0
    %v3831 = vmax.f32 %v3787, 0.0
    %v3832 = vmax.f32 %v3790, 0.0
    %v3833 = vmax.f32 %v3795, 0.0
    %v3834 = vmax.f32 %v3798, 0.0
    %v3835 = vmax.f32 %v3803, 0.0
    %v3836 = vmax.f32 %v3806, 0.0
    %v3837 = vmax.f32 %v3811, 0.0
    %v3838 = vmax.f32 %v3814, 0.0
    %v3839 = vmax.f32 %v3819, 0.0
    %v3840 = vmax.f32 %v3822, 0.0
    %v3841 = vpack.c.bf16 %v3826, %v3825
    %v3842 = vpack.c.bf16 %v3828, %v3827
    %v3843 = vpack.c.bf16 %v3830, %v3829
    %v3844 = vpack.c.bf16 %v3832, %v3831
    %v3845 = vpack.c.bf16 %v3834, %v3833
    %v3846 = vpack.c.bf16 %v3836, %v3835
    %v3847 = vpack.c.bf16 %v3838, %v3837
    %v3848 = vpack.c.bf16 %v3840, %v3839
    %v3850 = vsel %vm284, %v3841, 0
    %v3853 = vsel %vm284, %v3842, 0
    %v3856 = vsel %vm284, %v3843, 0
    %v3859 = vsel %vm284, %v3844, 0
    %v3862 = vsel %vm284, %v3845, 0
    %v3865 = vsel %vm284, %v3846, 0
    %v3868 = vsel %vm284, %v3847, 0
    %v3871 = vsel %vm284, %v3848, 0
    %3873 = vmatprep.subr.bf16.mxu0 0
    %3874 = vmatpush1.bf16.xpose.msra.mxu0 %v3871
    %3875 = vmatprep.subr.bf16.mxu0 0
    %3876 = vmatpush1.bf16.xpose.msra.mxu0 %v3868
    %3877 = vmatprep.subr.bf16.mxu0 0
    %3878 = vmatpush1.bf16.xpose.msra.mxu0 %v3865
    %3879 = vmatprep.subr.bf16.mxu0 0
    %3880 = vmatpush1.bf16.xpose.msra.mxu0 %v3862
    %3881 = vmatprep.subr.bf16.mxu0 0
    %3882 = vmatpush1.bf16.xpose.msra.mxu0 %v3859
    %3883 = vmatprep.subr.bf16.mxu0 0
    %3884 = vmatpush1.bf16.xpose.msra.mxu0 %v3856
    %3885 = vmatprep.subr.bf16.mxu0 0
    %3886 = vmatpush1.bf16.xpose.msra.mxu0 %v3853
    %3887 = vmatprep.subr.bf16.mxu0 0
    %3888 = vmatpush1.bf16.xpose.msra.mxu0 %v3850
    %3889 = vmatprep.subr.bf16.mxu0 0
    %3890 = vmatpush2.bf16.xpose.msra.mxu0 0
    %3891 = vmatprep.subr.bf16.mxu0 0
    %3892 = vmatpush2.bf16.xpose.msra.mxu0 0
    %3893 = vmatprep.subr.bf16.mxu0 0
    %3894 = vmatpush2.bf16.xpose.msra.mxu0 0
    %3895 = vmatprep.subr.bf16.mxu0 0
    %3896 = vmatpush2.bf16.xpose.msra.mxu0 0
    %3897 = vmatprep.subr.bf16.mxu0 0
    %3898 = vmatpush2.bf16.xpose.msra.mxu0 0
    %3899 = vmatprep.subr.bf16.mxu0 0
    %3900 = vmatpush2.bf16.xpose.msra.mxu0 0
    %3901 = vmatprep.subr.bf16.mxu0 0
    %3902 = vmatpush2.bf16.xpose.msra.mxu0 0
    %3903 = vmatprep.subr.bf16.mxu0 0
    %3904 = vmatpush2.bf16.xpose.msra.mxu0 0
    %3905 = vmatprep.mubr.bf16.mxu0 0
    %3906 = vmatmul.mubr.bf16.gmra.mxu0 %v436
    %v3907 = vpop.f32.mrf.mxu0
    %v3908 = vadd.f32 %v433, %v3907
    %v3909 = vpop.f32.mrf.mxu0
    %v3910 = vpop.f32.mrf.mxu0
    %v3911 = vpop.f32.mrf.mxu0
    %3912 = vdwg.mxu0
    %3913 = vst [vmem:[#allocation2 + $0x12] sm:$0x3] %v3908
    %v3914 = vld [vmem:[%s0 + $0x500] sm:$0xff]
    %v3915 = vld [vmem:[%s0 + $0x508] sm:$0xff]
    %v3916 = vld [vmem:[%s0 + $0x510] sm:$0xff]
    %v3917 = vld [vmem:[%s0 + $0x518] sm:$0xff]
    %v3918 = vld [vmem:[%s0 + $0x520] sm:$0xff]
    %v3919 = vld [vmem:[%s0 + $0x528] sm:$0xff]
    %v3920 = vld [vmem:[%s0 + $0x530] sm:$0xff]
    %v3921 = vld [vmem:[%s0 + $0x538] sm:$0xff]
    %v3922 = vld [vmem:[%s0 + $0x540] sm:$0xff]
    %v3923 = vld [vmem:[%s0 + $0x548] sm:$0xff]
    %v3924 = vld [vmem:[%s0 + $0x550] sm:$0xff]
    %v3925 = vld [vmem:[%s0 + $0x558] sm:$0xff]
    %v3926 = vld [vmem:[%s0 + $0x560] sm:$0xff]
    %v3927 = vld [vmem:[%s0 + $0x568] sm:$0xff]
    %v3928 = vld [vmem:[%s0 + $0x570] sm:$0xff]
    %v3929 = vld [vmem:[%s0 + $0x578] sm:$0xff]
    %v3930 = vpack.c.bf16 %v3915, %v3914
    %v3931 = vpack.c.bf16 %v3917, %v3916
    %v3932 = vpack.c.bf16 %v3919, %v3918
    %v3933 = vpack.c.bf16 %v3921, %v3920
    %v3934 = vpack.c.bf16 %v3923, %v3922
    %v3935 = vpack.c.bf16 %v3925, %v3924
    %v3936 = vpack.c.bf16 %v3927, %v3926
    %v3937 = vpack.c.bf16 %v3929, %v3928
    %v3939 = vsel %vm101, %v3930, 0
    %v3942 = vsel %vm101, %v3931, 0
    %v3945 = vsel %vm101, %v3932, 0
    %v3948 = vsel %vm101, %v3933, 0
    %v3951 = vsel %vm101, %v3934, 0
    %v3954 = vsel %vm101, %v3935, 0
    %v3957 = vsel %vm101, %v3936, 0
    %v3960 = vsel %vm101, %v3937, 0
    %3962 = vmatprep.subr.bf16.mxu0 0
    %3963 = vmatpush1.bf16.msra.mxu0 0
    %3964 = vmatprep.subr.bf16.mxu0 0
    %3965 = vmatpush1.bf16.msra.mxu0 0
    %3966 = vmatprep.subr.bf16.mxu0 0
    %3967 = vmatpush1.bf16.msra.mxu0 0
    %3968 = vmatprep.subr.bf16.mxu0 0
    %3969 = vmatpush1.bf16.msra.mxu0 0
    %3970 = vmatprep.subr.bf16.mxu0 0
    %3971 = vmatpush1.bf16.msra.mxu0 %v131
    %3972 = vmatprep.subr.bf16.mxu0 0
    %3973 = vmatpush1.bf16.msra.mxu0 %v96
    %3974 = vmatprep.subr.bf16.mxu0 0
    %3975 = vmatpush1.bf16.msra.mxu0 %v95
    %3976 = vmatprep.subr.bf16.mxu0 0
    %3977 = vmatpush1.bf16.msra.mxu0 %v94
    %3978 = vmatprep.subr.bf16.mxu0 0
    %3979 = vmatpush2.bf16.msra.mxu0 0
    %3980 = vmatprep.subr.bf16.mxu0 0
    %3981 = vmatpush2.bf16.msra.mxu0 0
    %3982 = vmatprep.subr.bf16.mxu0 0
    %3983 = vmatpush2.bf16.msra.mxu0 0
    %3984 = vmatprep.subr.bf16.mxu0 0
    %3985 = vmatpush2.bf16.msra.mxu0 0
    %3986 = vmatprep.subr.bf16.mxu0 0
    %3987 = vmatpush2.bf16.msra.mxu0 0
    %3988 = vmatprep.subr.bf16.mxu0 0
    %3989 = vmatpush2.bf16.msra.mxu0 0
    %3990 = vmatprep.subr.bf16.mxu0 0
    %3991 = vmatpush2.bf16.msra.mxu0 0
    %3992 = vmatprep.subr.bf16.mxu0 0
    %3993 = vmatpush2.bf16.msra.mxu0 0
    %3994 = vmatprep.mubr.bf16.mxu0 0
    %3995 = vmatmul.mubr.bf16.gmra.mxu0 %v3939
    %v3996 = vpop.f32.mrf.mxu0
    %v3997 = vadd.f32 %v76, %v3996
    %v3998 = vpop.f32.mrf.mxu0
    %v3999 = vpop.f32.mrf.mxu0
    %v4000 = vadd.f32 %v76, %v3999
    %v4001 = vpop.f32.mrf.mxu0
    %4002 = vmatprep.mubr.bf16.mxu0 0
    %4003 = vmatmul.mubr.bf16.gmra.mxu0 %v3942
    %v4004 = vpop.f32.mrf.mxu0
    %v4005 = vadd.f32 %v76, %v4004
    %v4006 = vpop.f32.mrf.mxu0
    %v4007 = vpop.f32.mrf.mxu0
    %v4008 = vadd.f32 %v76, %v4007
    %v4009 = vpop.f32.mrf.mxu0
    %4010 = vmatprep.mubr.bf16.mxu0 0
    %4011 = vmatmul.mubr.bf16.gmra.mxu0 %v3945
    %v4012 = vpop.f32.mrf.mxu0
    %v4013 = vadd.f32 %v76, %v4012
    %v4014 = vpop.f32.mrf.mxu0
    %v4015 = vpop.f32.mrf.mxu0
    %v4016 = vadd.f32 %v76, %v4015
    %v4017 = vpop.f32.mrf.mxu0
    %4018 = vmatprep.mubr.bf16.mxu0 0
    %4019 = vmatmul.mubr.bf16.gmra.mxu0 %v3948
    %v4020 = vpop.f32.mrf.mxu0
    %v4021 = vadd.f32 %v76, %v4020
    %v4022 = vpop.f32.mrf.mxu0
    %v4023 = vpop.f32.mrf.mxu0
    %v4024 = vadd.f32 %v76, %v4023
    %v4025 = vpop.f32.mrf.mxu0
    %4026 = vmatprep.mubr.bf16.mxu0 0
    %4027 = vmatmul.mubr.bf16.gmra.mxu0 %v3951
    %v4028 = vpop.f32.mrf.mxu0
    %v4029 = vadd.f32 %v76, %v4028
    %v4030 = vpop.f32.mrf.mxu0
    %v4031 = vpop.f32.mrf.mxu0
    %v4032 = vadd.f32 %v76, %v4031
    %v4033 = vpop.f32.mrf.mxu0
    %4034 = vmatprep.mubr.bf16.mxu0 0
    %4035 = vmatmul.mubr.bf16.gmra.mxu0 %v3954
    %v4036 = vpop.f32.mrf.mxu0
    %v4037 = vadd.f32 %v76, %v4036
    %v4038 = vpop.f32.mrf.mxu0
    %v4039 = vpop.f32.mrf.mxu0
    %v4040 = vadd.f32 %v76, %v4039
    %v4041 = vpop.f32.mrf.mxu0
    %4042 = vmatprep.mubr.bf16.mxu0 0
    %4043 = vmatmul.mubr.bf16.gmra.mxu0 %v3957
    %v4044 = vpop.f32.mrf.mxu0
    %v4045 = vadd.f32 %v76, %v4044
    %v4046 = vpop.f32.mrf.mxu0
    %v4047 = vpop.f32.mrf.mxu0
    %v4048 = vadd.f32 %v76, %v4047
    %v4049 = vpop.f32.mrf.mxu0
    %4050 = vmatprep.mubr.bf16.mxu0 0
    %4051 = vmatmul.mubr.bf16.gmra.mxu0 %v3960
    %v4052 = vpop.f32.mrf.mxu0
    %v4053 = vadd.f32 %v76, %v4052
    %v4054 = vpop.f32.mrf.mxu0
    %v4055 = vpop.f32.mrf.mxu0
    %v4056 = vadd.f32 %v76, %v4055
    %v4057 = vpop.f32.mrf.mxu0
    %4058 = vdwg.mxu0
    %v4059 = vmax.f32 %v3997, 0.0
    %v4060 = vmax.f32 %v4000, 0.0
    %v4061 = vmax.f32 %v4005, 0.0
    %v4062 = vmax.f32 %v4008, 0.0
    %v4063 = vmax.f32 %v4013, 0.0
    %v4064 = vmax.f32 %v4016, 0.0
    %v4065 = vmax.f32 %v4021, 0.0
    %v4066 = vmax.f32 %v4024, 0.0
    %v4067 = vmax.f32 %v4029, 0.0
    %v4068 = vmax.f32 %v4032, 0.0
    %v4069 = vmax.f32 %v4037, 0.0
    %v4070 = vmax.f32 %v4040, 0.0
    %v4071 = vmax.f32 %v4045, 0.0
    %v4072 = vmax.f32 %v4048, 0.0
    %v4073 = vmax.f32 %v4053, 0.0
    %v4074 = vmax.f32 %v4056, 0.0
    %v4075 = vpack.c.bf16 %v4060, %v4059
    %v4076 = vpack.c.bf16 %v4062, %v4061
    %v4077 = vpack.c.bf16 %v4064, %v4063
    %v4078 = vpack.c.bf16 %v4066, %v4065
    %v4079 = vpack.c.bf16 %v4068, %v4067
    %v4080 = vpack.c.bf16 %v4070, %v4069
    %v4081 = vpack.c.bf16 %v4072, %v4071
    %v4082 = vpack.c.bf16 %v4074, %v4073
    %v4084 = vsel %vm284, %v4075, 0
    %v4087 = vsel %vm284, %v4076, 0
    %v4090 = vsel %vm284, %v4077, 0
    %v4093 = vsel %vm284, %v4078, 0
    %v4096 = vsel %vm284, %v4079, 0
    %v4099 = vsel %vm284, %v4080, 0
    %v4102 = vsel %vm284, %v4081, 0
    %v4105 = vsel %vm284, %v4082, 0
    %4107 = vmatprep.subr.bf16.mxu0 0
    %4108 = vmatpush1.bf16.msra.mxu0 0
    %4109 = vmatprep.subr.bf16.mxu0 0
    %4110 = vmatpush1.bf16.msra.mxu0 0
    %4111 = vmatprep.subr.bf16.mxu0 0
    %4112 = vmatpush1.bf16.msra.mxu0 0
    %4113 = vmatprep.subr.bf16.mxu0 0
    %4114 = vmatpush1.bf16.msra.mxu0 0
    %4115 = vmatprep.subr.bf16.mxu0 0
    %4116 = vmatpush1.bf16.msra.mxu0 %v279
    %4117 = vmatprep.subr.bf16.mxu0 0
    %4118 = vmatpush1.bf16.msra.mxu0 %v278
    %4119 = vmatprep.subr.bf16.mxu0 0
    %4120 = vmatpush1.bf16.msra.mxu0 %v277
    %4121 = vmatprep.subr.bf16.mxu0 0
    %4122 = vmatpush1.bf16.msra.mxu0 %v276
    %4123 = vmatprep.subr.bf16.mxu0 0
    %4124 = vmatpush2.bf16.msra.mxu0 0
    %4125 = vmatprep.subr.bf16.mxu0 0
    %4126 = vmatpush2.bf16.msra.mxu0 0
    %4127 = vmatprep.subr.bf16.mxu0 0
    %4128 = vmatpush2.bf16.msra.mxu0 0
    %4129 = vmatprep.subr.bf16.mxu0 0
    %4130 = vmatpush2.bf16.msra.mxu0 0
    %4131 = vmatprep.subr.bf16.mxu0 0
    %4132 = vmatpush2.bf16.msra.mxu0 0
    %4133 = vmatprep.subr.bf16.mxu0 0
    %4134 = vmatpush2.bf16.msra.mxu0 0
    %4135 = vmatprep.subr.bf16.mxu0 0
    %4136 = vmatpush2.bf16.msra.mxu0 0
    %4137 = vmatprep.subr.bf16.mxu0 0
    %4138 = vmatpush2.bf16.msra.mxu0 0
    %4139 = vmatprep.mubr.bf16.mxu0 0
    %4140 = vmatmul.mubr.bf16.gmra.mxu0 %v4084
    %v4141 = vpop.f32.mrf.mxu0
    %v4142 = vadd.f32 %v258, %v4141
    %v4143 = vpop.f32.mrf.mxu0
    %v4144 = vpop.f32.mrf.mxu0
    %v4145 = vadd.f32 %v258, %v4144
    %v4146 = vpop.f32.mrf.mxu0
    %4147 = vmatprep.mubr.bf16.mxu0 0
    %4148 = vmatmul.mubr.bf16.gmra.mxu0 %v4087
    %v4149 = vpop.f32.mrf.mxu0
    %v4150 = vadd.f32 %v258, %v4149
    %v4151 = vpop.f32.mrf.mxu0
    %v4152 = vpop.f32.mrf.mxu0
    %v4153 = vadd.f32 %v258, %v4152
    %v4154 = vpop.f32.mrf.mxu0
    %4155 = vmatprep.mubr.bf16.mxu0 0
    %4156 = vmatmul.mubr.bf16.gmra.mxu0 %v4090
    %v4157 = vpop.f32.mrf.mxu0
    %v4158 = vadd.f32 %v258, %v4157
    %v4159 = vpop.f32.mrf.mxu0
    %v4160 = vpop.f32.mrf.mxu0
    %v4161 = vadd.f32 %v258, %v4160
    %v4162 = vpop.f32.mrf.mxu0
    %4163 = vmatprep.mubr.bf16.mxu0 0
    %4164 = vmatmul.mubr.bf16.gmra.mxu0 %v4093
    %v4165 = vpop.f32.mrf.mxu0
    %v4166 = vadd.f32 %v258, %v4165
    %v4167 = vpop.f32.mrf.mxu0
    %v4168 = vpop.f32.mrf.mxu0
    %v4169 = vadd.f32 %v258, %v4168
    %v4170 = vpop.f32.mrf.mxu0
    %4171 = vmatprep.mubr.bf16.mxu0 0
    %4172 = vmatmul.mubr.bf16.gmra.mxu0 %v4096
    %v4173 = vpop.f32.mrf.mxu0
    %v4174 = vadd.f32 %v258, %v4173
    %v4175 = vpop.f32.mrf.mxu0
    %v4176 = vpop.f32.mrf.mxu0
    %v4177 = vadd.f32 %v258, %v4176
    %v4178 = vpop.f32.mrf.mxu0
    %4179 = vmatprep.mubr.bf16.mxu0 0
    %4180 = vmatmul.mubr.bf16.gmra.mxu0 %v4099
    %v4181 = vpop.f32.mrf.mxu0
    %v4182 = vadd.f32 %v258, %v4181
    %v4183 = vpop.f32.mrf.mxu0
    %v4184 = vpop.f32.mrf.mxu0
    %v4185 = vadd.f32 %v258, %v4184
    %v4186 = vpop.f32.mrf.mxu0
    %4187 = vmatprep.mubr.bf16.mxu0 0
    %4188 = vmatmul.mubr.bf16.gmra.mxu0 %v4102
    %v4189 = vpop.f32.mrf.mxu0
    %v4190 = vadd.f32 %v258, %v4189
    %v4191 = vpop.f32.mrf.mxu0
    %v4192 = vpop.f32.mrf.mxu0
    %v4193 = vadd.f32 %v258, %v4192
    %v4194 = vpop.f32.mrf.mxu0
    %4195 = vmatprep.mubr.bf16.mxu0 0
    %4196 = vmatmul.mubr.bf16.gmra.mxu0 %v4105
    %v4197 = vpop.f32.mrf.mxu0
    %v4198 = vadd.f32 %v258, %v4197
    %v4199 = vpop.f32.mrf.mxu0
    %v4200 = vpop.f32.mrf.mxu0
    %v4201 = vadd.f32 %v258, %v4200
    %v4202 = vpop.f32.mrf.mxu0
    %4203 = vdwg.mxu0
    %v4204 = vmax.f32 %v4142, 0.0
    %v4205 = vmax.f32 %v4145, 0.0
    %v4206 = vmax.f32 %v4150, 0.0
    %v4207 = vmax.f32 %v4153, 0.0
    %v4208 = vmax.f32 %v4158, 0.0
    %v4209 = vmax.f32 %v4161, 0.0
    %v4210 = vmax.f32 %v4166, 0.0
    %v4211 = vmax.f32 %v4169, 0.0
    %v4212 = vmax.f32 %v4174, 0.0
    %v4213 = vmax.f32 %v4177, 0.0
    %v4214 = vmax.f32 %v4182, 0.0
    %v4215 = vmax.f32 %v4185, 0.0
    %v4216 = vmax.f32 %v4190, 0.0
    %v4217 = vmax.f32 %v4193, 0.0
    %v4218 = vmax.f32 %v4198, 0.0
    %v4219 = vmax.f32 %v4201, 0.0
    %v4220 = vpack.c.bf16 %v4205, %v4204
    %v4221 = vpack.c.bf16 %v4207, %v4206
    %v4222 = vpack.c.bf16 %v4209, %v4208
    %v4223 = vpack.c.bf16 %v4211, %v4210
    %v4224 = vpack.c.bf16 %v4213, %v4212
    %v4225 = vpack.c.bf16 %v4215, %v4214
    %v4226 = vpack.c.bf16 %v4217, %v4216
    %v4227 = vpack.c.bf16 %v4219, %v4218
    %v4229 = vsel %vm284, %v4220, 0
    %v4232 = vsel %vm284, %v4221, 0
    %v4235 = vsel %vm284, %v4222, 0
    %v4238 = vsel %vm284, %v4223, 0
    %v4241 = vsel %vm284, %v4224, 0
    %v4244 = vsel %vm284, %v4225, 0
    %v4247 = vsel %vm284, %v4226, 0
    %v4250 = vsel %vm284, %v4227, 0
    %4252 = vmatprep.subr.bf16.mxu0 0
    %4253 = vmatpush1.bf16.xpose.msra.mxu0 %v4250
    %4254 = vmatprep.subr.bf16.mxu0 0
    %4255 = vmatpush1.bf16.xpose.msra.mxu0 %v4247
    %4256 = vmatprep.subr.bf16.mxu0 0
    %4257 = vmatpush1.bf16.xpose.msra.mxu0 %v4244
    %4258 = vmatprep.subr.bf16.mxu0 0
    %4259 = vmatpush1.bf16.xpose.msra.mxu0 %v4241
    %4260 = vmatprep.subr.bf16.mxu0 0
    %4261 = vmatpush1.bf16.xpose.msra.mxu0 %v4238
    %4262 = vmatprep.subr.bf16.mxu0 0
    %4263 = vmatpush1.bf16.xpose.msra.mxu0 %v4235
    %4264 = vmatprep.subr.bf16.mxu0 0
    %4265 = vmatpush1.bf16.xpose.msra.mxu0 %v4232
    %4266 = vmatprep.subr.bf16.mxu0 0
    %4267 = vmatpush1.bf16.xpose.msra.mxu0 %v4229
    %4268 = vmatprep.subr.bf16.mxu0 0
    %4269 = vmatpush2.bf16.xpose.msra.mxu0 0
    %4270 = vmatprep.subr.bf16.mxu0 0
    %4271 = vmatpush2.bf16.xpose.msra.mxu0 0
    %4272 = vmatprep.subr.bf16.mxu0 0
    %4273 = vmatpush2.bf16.xpose.msra.mxu0 0
    %4274 = vmatprep.subr.bf16.mxu0 0
    %4275 = vmatpush2.bf16.xpose.msra.mxu0 0
    %4276 = vmatprep.subr.bf16.mxu0 0
    %4277 = vmatpush2.bf16.xpose.msra.mxu0 0
    %4278 = vmatprep.subr.bf16.mxu0 0
    %4279 = vmatpush2.bf16.xpose.msra.mxu0 0
    %4280 = vmatprep.subr.bf16.mxu0 0
    %4281 = vmatpush2.bf16.xpose.msra.mxu0 0
    %4282 = vmatprep.subr.bf16.mxu0 0
    %4283 = vmatpush2.bf16.xpose.msra.mxu0 0
    %4284 = vmatprep.mubr.bf16.mxu0 0
    %4285 = vmatmul.mubr.bf16.gmra.mxu0 %v436
    %v4286 = vpop.f32.mrf.mxu0
    %v4287 = vadd.f32 %v433, %v4286
    %v4288 = vpop.f32.mrf.mxu0
    %v4289 = vpop.f32.mrf.mxu0
    %v4290 = vpop.f32.mrf.mxu0
    %4291 = vdwg.mxu0
    %4292 = vst [vmem:[#allocation2 + $0x14] sm:$0x3] %v4287
    %v4293 = vld [vmem:[%s0 + $0x580] sm:$0xff]
    %v4294 = vld [vmem:[%s0 + $0x588] sm:$0xff]
    %v4295 = vld [vmem:[%s0 + $0x590] sm:$0xff]
    %v4296 = vld [vmem:[%s0 + $0x598] sm:$0xff]
    %v4297 = vld [vmem:[%s0 + $0x5a0] sm:$0xff]
    %v4298 = vld [vmem:[%s0 + $0x5a8] sm:$0xff]
    %v4299 = vld [vmem:[%s0 + $0x5b0] sm:$0xff]
    %v4300 = vld [vmem:[%s0 + $0x5b8] sm:$0xff]
    %v4301 = vld [vmem:[%s0 + $0x5c0] sm:$0xff]
    %v4302 = vld [vmem:[%s0 + $0x5c8] sm:$0xff]
    %v4303 = vld [vmem:[%s0 + $0x5d0] sm:$0xff]
    %v4304 = vld [vmem:[%s0 + $0x5d8] sm:$0xff]
    %v4305 = vld [vmem:[%s0 + $0x5e0] sm:$0xff]
    %v4306 = vld [vmem:[%s0 + $0x5e8] sm:$0xff]
    %v4307 = vld [vmem:[%s0 + $0x5f0] sm:$0xff]
    %v4308 = vld [vmem:[%s0 + $0x5f8] sm:$0xff]
    %v4309 = vpack.c.bf16 %v4294, %v4293
    %v4310 = vpack.c.bf16 %v4296, %v4295
    %v4311 = vpack.c.bf16 %v4298, %v4297
    %v4312 = vpack.c.bf16 %v4300, %v4299
    %v4313 = vpack.c.bf16 %v4302, %v4301
    %v4314 = vpack.c.bf16 %v4304, %v4303
    %v4315 = vpack.c.bf16 %v4306, %v4305
    %v4316 = vpack.c.bf16 %v4308, %v4307
    %v4318 = vsel %vm101, %v4309, 0
    %v4321 = vsel %vm101, %v4310, 0
    %v4324 = vsel %vm101, %v4311, 0
    %v4327 = vsel %vm101, %v4312, 0
    %v4330 = vsel %vm101, %v4313, 0
    %v4333 = vsel %vm101, %v4314, 0
    %v4336 = vsel %vm101, %v4315, 0
    %v4339 = vsel %vm101, %v4316, 0
    %4341 = vmatprep.subr.bf16.mxu0 0
    %4342 = vmatpush1.bf16.msra.mxu0 0
    %4343 = vmatprep.subr.bf16.mxu0 0
    %4344 = vmatpush1.bf16.msra.mxu0 0
    %4345 = vmatprep.subr.bf16.mxu0 0
    %4346 = vmatpush1.bf16.msra.mxu0 0
    %4347 = vmatprep.subr.bf16.mxu0 0
    %4348 = vmatpush1.bf16.msra.mxu0 0
    %4349 = vmatprep.subr.bf16.mxu0 0
    %4350 = vmatpush1.bf16.msra.mxu0 %v131
    %4351 = vmatprep.subr.bf16.mxu0 0
    %4352 = vmatpush1.bf16.msra.mxu0 %v96
    %4353 = vmatprep.subr.bf16.mxu0 0
    %4354 = vmatpush1.bf16.msra.mxu0 %v95
    %4355 = vmatprep.subr.bf16.mxu0 0
    %4356 = vmatpush1.bf16.msra.mxu0 %v94
    %4357 = vmatprep.subr.bf16.mxu0 0
    %4358 = vmatpush2.bf16.msra.mxu0 0
    %4359 = vmatprep.subr.bf16.mxu0 0
    %4360 = vmatpush2.bf16.msra.mxu0 0
    %4361 = vmatprep.subr.bf16.mxu0 0
    %4362 = vmatpush2.bf16.msra.mxu0 0
    %4363 = vmatprep.subr.bf16.mxu0 0
    %4364 = vmatpush2.bf16.msra.mxu0 0
    %4365 = vmatprep.subr.bf16.mxu0 0
    %4366 = vmatpush2.bf16.msra.mxu0 0
    %4367 = vmatprep.subr.bf16.mxu0 0
    %4368 = vmatpush2.bf16.msra.mxu0 0
    %4369 = vmatprep.subr.bf16.mxu0 0
    %4370 = vmatpush2.bf16.msra.mxu0 0
    %4371 = vmatprep.subr.bf16.mxu0 0
    %4372 = vmatpush2.bf16.msra.mxu0 0
    %4373 = vmatprep.mubr.bf16.mxu0 0
    %4374 = vmatmul.mubr.bf16.gmra.mxu0 %v4318
    %v4375 = vpop.f32.mrf.mxu0
    %v4376 = vadd.f32 %v76, %v4375
    %v4377 = vpop.f32.mrf.mxu0
    %v4378 = vpop.f32.mrf.mxu0
    %v4379 = vadd.f32 %v76, %v4378
    %v4380 = vpop.f32.mrf.mxu0
    %4381 = vmatprep.mubr.bf16.mxu0 0
    %4382 = vmatmul.mubr.bf16.gmra.mxu0 %v4321
    %v4383 = vpop.f32.mrf.mxu0
    %v4384 = vadd.f32 %v76, %v4383
    %v4385 = vpop.f32.mrf.mxu0
    %v4386 = vpop.f32.mrf.mxu0
    %v4387 = vadd.f32 %v76, %v4386
    %v4388 = vpop.f32.mrf.mxu0
    %4389 = vmatprep.mubr.bf16.mxu0 0
    %4390 = vmatmul.mubr.bf16.gmra.mxu0 %v4324
    %v4391 = vpop.f32.mrf.mxu0
    %v4392 = vadd.f32 %v76, %v4391
    %v4393 = vpop.f32.mrf.mxu0
    %v4394 = vpop.f32.mrf.mxu0
    %v4395 = vadd.f32 %v76, %v4394
    %v4396 = vpop.f32.mrf.mxu0
    %4397 = vmatprep.mubr.bf16.mxu0 0
    %4398 = vmatmul.mubr.bf16.gmra.mxu0 %v4327
    %v4399 = vpop.f32.mrf.mxu0
    %v4400 = vadd.f32 %v76, %v4399
    %v4401 = vpop.f32.mrf.mxu0
    %v4402 = vpop.f32.mrf.mxu0
    %v4403 = vadd.f32 %v76, %v4402
    %v4404 = vpop.f32.mrf.mxu0
    %4405 = vmatprep.mubr.bf16.mxu0 0
    %4406 = vmatmul.mubr.bf16.gmra.mxu0 %v4330
    %v4407 = vpop.f32.mrf.mxu0
    %v4408 = vadd.f32 %v76, %v4407
    %v4409 = vpop.f32.mrf.mxu0
    %v4410 = vpop.f32.mrf.mxu0
    %v4411 = vadd.f32 %v76, %v4410
    %v4412 = vpop.f32.mrf.mxu0
    %4413 = vmatprep.mubr.bf16.mxu0 0
    %4414 = vmatmul.mubr.bf16.gmra.mxu0 %v4333
    %v4415 = vpop.f32.mrf.mxu0
    %v4416 = vadd.f32 %v76, %v4415
    %v4417 = vpop.f32.mrf.mxu0
    %v4418 = vpop.f32.mrf.mxu0
    %v4419 = vadd.f32 %v76, %v4418
    %v4420 = vpop.f32.mrf.mxu0
    %4421 = vmatprep.mubr.bf16.mxu0 0
    %4422 = vmatmul.mubr.bf16.gmra.mxu0 %v4336
    %v4423 = vpop.f32.mrf.mxu0
    %v4424 = vadd.f32 %v76, %v4423
    %v4425 = vpop.f32.mrf.mxu0
    %v4426 = vpop.f32.mrf.mxu0
    %v4427 = vadd.f32 %v76, %v4426
    %v4428 = vpop.f32.mrf.mxu0
    %4429 = vmatprep.mubr.bf16.mxu0 0
    %4430 = vmatmul.mubr.bf16.gmra.mxu0 %v4339
    %v4431 = vpop.f32.mrf.mxu0
    %v4432 = vadd.f32 %v76, %v4431
    %v4433 = vpop.f32.mrf.mxu0
    %v4434 = vpop.f32.mrf.mxu0
    %v4435 = vadd.f32 %v76, %v4434
    %v4436 = vpop.f32.mrf.mxu0
    %4437 = vdwg.mxu0
    %v4438 = vmax.f32 %v4376, 0.0
    %v4439 = vmax.f32 %v4379, 0.0
    %v4440 = vmax.f32 %v4384, 0.0
    %v4441 = vmax.f32 %v4387, 0.0
    %v4442 = vmax.f32 %v4392, 0.0
    %v4443 = vmax.f32 %v4395, 0.0
    %v4444 = vmax.f32 %v4400, 0.0
    %v4445 = vmax.f32 %v4403, 0.0
    %v4446 = vmax.f32 %v4408, 0.0
    %v4447 = vmax.f32 %v4411, 0.0
    %v4448 = vmax.f32 %v4416, 0.0
    %v4449 = vmax.f32 %v4419, 0.0
    %v4450 = vmax.f32 %v4424, 0.0
    %v4451 = vmax.f32 %v4427, 0.0
    %v4452 = vmax.f32 %v4432, 0.0
    %v4453 = vmax.f32 %v4435, 0.0
    %v4454 = vpack.c.bf16 %v4439, %v4438
    %v4455 = vpack.c.bf16 %v4441, %v4440
    %v4456 = vpack.c.bf16 %v4443, %v4442
    %v4457 = vpack.c.bf16 %v4445, %v4444
    %v4458 = vpack.c.bf16 %v4447, %v4446
    %v4459 = vpack.c.bf16 %v4449, %v4448
    %v4460 = vpack.c.bf16 %v4451, %v4450
    %v4461 = vpack.c.bf16 %v4453, %v4452
    %v4463 = vsel %vm284, %v4454, 0
    %v4466 = vsel %vm284, %v4455, 0
    %v4469 = vsel %vm284, %v4456, 0
    %v4472 = vsel %vm284, %v4457, 0
    %v4475 = vsel %vm284, %v4458, 0
    %v4478 = vsel %vm284, %v4459, 0
    %v4481 = vsel %vm284, %v4460, 0
    %v4484 = vsel %vm284, %v4461, 0
    %4486 = vmatprep.subr.bf16.mxu0 0
    %4487 = vmatpush1.bf16.msra.mxu0 0
    %4488 = vmatprep.subr.bf16.mxu0 0
    %4489 = vmatpush1.bf16.msra.mxu0 0
    %4490 = vmatprep.subr.bf16.mxu0 0
    %4491 = vmatpush1.bf16.msra.mxu0 0
    %4492 = vmatprep.subr.bf16.mxu0 0
    %4493 = vmatpush1.bf16.msra.mxu0 0
    %4494 = vmatprep.subr.bf16.mxu0 0
    %4495 = vmatpush1.bf16.msra.mxu0 %v279
    %4496 = vmatprep.subr.bf16.mxu0 0
    %4497 = vmatpush1.bf16.msra.mxu0 %v278
    %4498 = vmatprep.subr.bf16.mxu0 0
    %4499 = vmatpush1.bf16.msra.mxu0 %v277
    %4500 = vmatprep.subr.bf16.mxu0 0
    %4501 = vmatpush1.bf16.msra.mxu0 %v276
    %4502 = vmatprep.subr.bf16.mxu0 0
    %4503 = vmatpush2.bf16.msra.mxu0 0
    %4504 = vmatprep.subr.bf16.mxu0 0
    %4505 = vmatpush2.bf16.msra.mxu0 0
    %4506 = vmatprep.subr.bf16.mxu0 0
    %4507 = vmatpush2.bf16.msra.mxu0 0
    %4508 = vmatprep.subr.bf16.mxu0 0
    %4509 = vmatpush2.bf16.msra.mxu0 0
    %4510 = vmatprep.subr.bf16.mxu0 0
    %4511 = vmatpush2.bf16.msra.mxu0 0
    %4512 = vmatprep.subr.bf16.mxu0 0
    %4513 = vmatpush2.bf16.msra.mxu0 0
    %4514 = vmatprep.subr.bf16.mxu0 0
    %4515 = vmatpush2.bf16.msra.mxu0 0
    %4516 = vmatprep.subr.bf16.mxu0 0
    %4517 = vmatpush2.bf16.msra.mxu0 0
    %4518 = vmatprep.mubr.bf16.mxu0 0
    %4519 = vmatmul.mubr.bf16.gmra.mxu0 %v4463
    %v4520 = vpop.f32.mrf.mxu0
    %v4521 = vadd.f32 %v258, %v4520
    %v4522 = vpop.f32.mrf.mxu0
    %v4523 = vpop.f32.mrf.mxu0
    %v4524 = vadd.f32 %v258, %v4523
    %v4525 = vpop.f32.mrf.mxu0
    %4526 = vmatprep.mubr.bf16.mxu0 0
    %4527 = vmatmul.mubr.bf16.gmra.mxu0 %v4466
    %v4528 = vpop.f32.mrf.mxu0
    %v4529 = vadd.f32 %v258, %v4528
    %v4530 = vpop.f32.mrf.mxu0
    %v4531 = vpop.f32.mrf.mxu0
    %v4532 = vadd.f32 %v258, %v4531
    %v4533 = vpop.f32.mrf.mxu0
    %4534 = vmatprep.mubr.bf16.mxu0 0
    %4535 = vmatmul.mubr.bf16.gmra.mxu0 %v4469
    %v4536 = vpop.f32.mrf.mxu0
    %v4537 = vadd.f32 %v258, %v4536
    %v4538 = vpop.f32.mrf.mxu0
    %v4539 = vpop.f32.mrf.mxu0
    %v4540 = vadd.f32 %v258, %v4539
    %v4541 = vpop.f32.mrf.mxu0
    %4542 = vmatprep.mubr.bf16.mxu0 0
    %4543 = vmatmul.mubr.bf16.gmra.mxu0 %v4472
    %v4544 = vpop.f32.mrf.mxu0
    %v4545 = vadd.f32 %v258, %v4544
    %v4546 = vpop.f32.mrf.mxu0
    %v4547 = vpop.f32.mrf.mxu0
    %v4548 = vadd.f32 %v258, %v4547
    %v4549 = vpop.f32.mrf.mxu0
    %4550 = vmatprep.mubr.bf16.mxu0 0
    %4551 = vmatmul.mubr.bf16.gmra.mxu0 %v4475
    %v4552 = vpop.f32.mrf.mxu0
    %v4553 = vadd.f32 %v258, %v4552
    %v4554 = vpop.f32.mrf.mxu0
    %v4555 = vpop.f32.mrf.mxu0
    %v4556 = vadd.f32 %v258, %v4555
    %v4557 = vpop.f32.mrf.mxu0
    %4558 = vmatprep.mubr.bf16.mxu0 0
    %4559 = vmatmul.mubr.bf16.gmra.mxu0 %v4478
    %v4560 = vpop.f32.mrf.mxu0
    %v4561 = vadd.f32 %v258, %v4560
    %v4562 = vpop.f32.mrf.mxu0
    %v4563 = vpop.f32.mrf.mxu0
    %v4564 = vadd.f32 %v258, %v4563
    %v4565 = vpop.f32.mrf.mxu0
    %4566 = vmatprep.mubr.bf16.mxu0 0
    %4567 = vmatmul.mubr.bf16.gmra.mxu0 %v4481
    %v4568 = vpop.f32.mrf.mxu0
    %v4569 = vadd.f32 %v258, %v4568
    %v4570 = vpop.f32.mrf.mxu0
    %v4571 = vpop.f32.mrf.mxu0
    %v4572 = vadd.f32 %v258, %v4571
    %v4573 = vpop.f32.mrf.mxu0
    %4574 = vmatprep.mubr.bf16.mxu0 0
    %4575 = vmatmul.mubr.bf16.gmra.mxu0 %v4484
    %v4576 = vpop.f32.mrf.mxu0
    %v4577 = vadd.f32 %v258, %v4576
    %v4578 = vpop.f32.mrf.mxu0
    %v4579 = vpop.f32.mrf.mxu0
    %v4580 = vadd.f32 %v258, %v4579
    %v4581 = vpop.f32.mrf.mxu0
    %4582 = vdwg.mxu0
    %v4583 = vmax.f32 %v4521, 0.0
    %v4584 = vmax.f32 %v4524, 0.0
    %v4585 = vmax.f32 %v4529, 0.0
    %v4586 = vmax.f32 %v4532, 0.0
    %v4587 = vmax.f32 %v4537, 0.0
    %v4588 = vmax.f32 %v4540, 0.0
    %v4589 = vmax.f32 %v4545, 0.0
    %v4590 = vmax.f32 %v4548, 0.0
    %v4591 = vmax.f32 %v4553, 0.0
    %v4592 = vmax.f32 %v4556, 0.0
    %v4593 = vmax.f32 %v4561, 0.0
    %v4594 = vmax.f32 %v4564, 0.0
    %v4595 = vmax.f32 %v4569, 0.0
    %v4596 = vmax.f32 %v4572, 0.0
    %v4597 = vmax.f32 %v4577, 0.0
    %v4598 = vmax.f32 %v4580, 0.0
    %v4599 = vpack.c.bf16 %v4584, %v4583
    %v4600 = vpack.c.bf16 %v4586, %v4585
    %v4601 = vpack.c.bf16 %v4588, %v4587
    %v4602 = vpack.c.bf16 %v4590, %v4589
    %v4603 = vpack.c.bf16 %v4592, %v4591
    %v4604 = vpack.c.bf16 %v4594, %v4593
    %v4605 = vpack.c.bf16 %v4596, %v4595
    %v4606 = vpack.c.bf16 %v4598, %v4597
    %v4608 = vsel %vm284, %v4599, 0
    %v4611 = vsel %vm284, %v4600, 0
    %v4614 = vsel %vm284, %v4601, 0
    %v4617 = vsel %vm284, %v4602, 0
    %v4620 = vsel %vm284, %v4603, 0
    %v4623 = vsel %vm284, %v4604, 0
    %v4626 = vsel %vm284, %v4605, 0
    %v4629 = vsel %vm284, %v4606, 0
    %4631 = vmatprep.subr.bf16.mxu0 0
    %4632 = vmatpush1.bf16.xpose.msra.mxu0 %v4629
    %4633 = vmatprep.subr.bf16.mxu0 0
    %4634 = vmatpush1.bf16.xpose.msra.mxu0 %v4626
    %4635 = vmatprep.subr.bf16.mxu0 0
    %4636 = vmatpush1.bf16.xpose.msra.mxu0 %v4623
    %4637 = vmatprep.subr.bf16.mxu0 0
    %4638 = vmatpush1.bf16.xpose.msra.mxu0 %v4620
    %4639 = vmatprep.subr.bf16.mxu0 0
    %4640 = vmatpush1.bf16.xpose.msra.mxu0 %v4617
    %4641 = vmatprep.subr.bf16.mxu0 0
    %4642 = vmatpush1.bf16.xpose.msra.mxu0 %v4614
    %4643 = vmatprep.subr.bf16.mxu0 0
    %4644 = vmatpush1.bf16.xpose.msra.mxu0 %v4611
    %4645 = vmatprep.subr.bf16.mxu0 0
    %4646 = vmatpush1.bf16.xpose.msra.mxu0 %v4608
    %4647 = vmatprep.subr.bf16.mxu0 0
    %4648 = vmatpush2.bf16.xpose.msra.mxu0 0
    %4649 = vmatprep.subr.bf16.mxu0 0
    %4650 = vmatpush2.bf16.xpose.msra.mxu0 0
    %4651 = vmatprep.subr.bf16.mxu0 0
    %4652 = vmatpush2.bf16.xpose.msra.mxu0 0
    %4653 = vmatprep.subr.bf16.mxu0 0
    %4654 = vmatpush2.bf16.xpose.msra.mxu0 0
    %4655 = vmatprep.subr.bf16.mxu0 0
    %4656 = vmatpush2.bf16.xpose.msra.mxu0 0
    %4657 = vmatprep.subr.bf16.mxu0 0
    %4658 = vmatpush2.bf16.xpose.msra.mxu0 0
    %4659 = vmatprep.subr.bf16.mxu0 0
    %4660 = vmatpush2.bf16.xpose.msra.mxu0 0
    %4661 = vmatprep.subr.bf16.mxu0 0
    %4662 = vmatpush2.bf16.xpose.msra.mxu0 0
    %4663 = vmatprep.mubr.bf16.mxu0 0
    %4664 = vmatmul.mubr.bf16.gmra.mxu0 %v436
    %v4665 = vpop.f32.mrf.mxu0
    %v4666 = vadd.f32 %v433, %v4665
    %v4667 = vpop.f32.mrf.mxu0
    %v4668 = vpop.f32.mrf.mxu0
    %v4669 = vpop.f32.mrf.mxu0
    %4670 = vdwg.mxu0
    %4671 = vst [vmem:[#allocation2 + $0x16] sm:$0x3] %v4666
    %v4672 = vld [vmem:[%s0 + $0x600] sm:$0xff]
    %v4673 = vld [vmem:[%s0 + $0x608] sm:$0xff]
    %v4674 = vld [vmem:[%s0 + $0x610] sm:$0xff]
    %v4675 = vld [vmem:[%s0 + $0x618] sm:$0xff]
    %v4676 = vld [vmem:[%s0 + $0x620] sm:$0xff]
    %v4677 = vld [vmem:[%s0 + $0x628] sm:$0xff]
    %v4678 = vld [vmem:[%s0 + $0x630] sm:$0xff]
    %v4679 = vld [vmem:[%s0 + $0x638] sm:$0xff]
    %v4680 = vld [vmem:[%s0 + $0x640] sm:$0xff]
    %v4681 = vld [vmem:[%s0 + $0x648] sm:$0xff]
    %v4682 = vld [vmem:[%s0 + $0x650] sm:$0xff]
    %v4683 = vld [vmem:[%s0 + $0x658] sm:$0xff]
    %v4684 = vld [vmem:[%s0 + $0x660] sm:$0xff]
    %v4685 = vld [vmem:[%s0 + $0x668] sm:$0xff]
    %v4686 = vld [vmem:[%s0 + $0x670] sm:$0xff]
    %v4687 = vld [vmem:[%s0 + $0x678] sm:$0xff]
    %v4688 = vpack.c.bf16 %v4673, %v4672
    %v4689 = vpack.c.bf16 %v4675, %v4674
    %v4690 = vpack.c.bf16 %v4677, %v4676
    %v4691 = vpack.c.bf16 %v4679, %v4678
    %v4692 = vpack.c.bf16 %v4681, %v4680
    %v4693 = vpack.c.bf16 %v4683, %v4682
    %v4694 = vpack.c.bf16 %v4685, %v4684
    %v4695 = vpack.c.bf16 %v4687, %v4686
    %v4697 = vsel %vm101, %v4688, 0
    %v4700 = vsel %vm101, %v4689, 0
    %v4703 = vsel %vm101, %v4690, 0
    %v4706 = vsel %vm101, %v4691, 0
    %v4709 = vsel %vm101, %v4692, 0
    %v4712 = vsel %vm101, %v4693, 0
    %v4715 = vsel %vm101, %v4694, 0
    %v4718 = vsel %vm101, %v4695, 0
    %4720 = vmatprep.subr.bf16.mxu0 0
    %4721 = vmatpush1.bf16.msra.mxu0 0
    %4722 = vmatprep.subr.bf16.mxu0 0
    %4723 = vmatpush1.bf16.msra.mxu0 0
    %4724 = vmatprep.subr.bf16.mxu0 0
    %4725 = vmatpush1.bf16.msra.mxu0 0
    %4726 = vmatprep.subr.bf16.mxu0 0
    %4727 = vmatpush1.bf16.msra.mxu0 0
    %4728 = vmatprep.subr.bf16.mxu0 0
    %4729 = vmatpush1.bf16.msra.mxu0 %v131
    %4730 = vmatprep.subr.bf16.mxu0 0
    %4731 = vmatpush1.bf16.msra.mxu0 %v96
    %4732 = vmatprep.subr.bf16.mxu0 0
    %4733 = vmatpush1.bf16.msra.mxu0 %v95
    %4734 = vmatprep.subr.bf16.mxu0 0
    %4735 = vmatpush1.bf16.msra.mxu0 %v94
    %4736 = vmatprep.subr.bf16.mxu0 0
    %4737 = vmatpush2.bf16.msra.mxu0 0
    %4738 = vmatprep.subr.bf16.mxu0 0
    %4739 = vmatpush2.bf16.msra.mxu0 0
    %4740 = vmatprep.subr.bf16.mxu0 0
    %4741 = vmatpush2.bf16.msra.mxu0 0
    %4742 = vmatprep.subr.bf16.mxu0 0
    %4743 = vmatpush2.bf16.msra.mxu0 0
    %4744 = vmatprep.subr.bf16.mxu0 0
    %4745 = vmatpush2.bf16.msra.mxu0 0
    %4746 = vmatprep.subr.bf16.mxu0 0
    %4747 = vmatpush2.bf16.msra.mxu0 0
    %4748 = vmatprep.subr.bf16.mxu0 0
    %4749 = vmatpush2.bf16.msra.mxu0 0
    %4750 = vmatprep.subr.bf16.mxu0 0
    %4751 = vmatpush2.bf16.msra.mxu0 0
    %4752 = vmatprep.mubr.bf16.mxu0 0
    %4753 = vmatmul.mubr.bf16.gmra.mxu0 %v4697
    %v4754 = vpop.f32.mrf.mxu0
    %v4755 = vadd.f32 %v76, %v4754
    %v4756 = vpop.f32.mrf.mxu0
    %v4757 = vpop.f32.mrf.mxu0
    %v4758 = vadd.f32 %v76, %v4757
    %v4759 = vpop.f32.mrf.mxu0
    %4760 = vmatprep.mubr.bf16.mxu0 0
    %4761 = vmatmul.mubr.bf16.gmra.mxu0 %v4700
    %v4762 = vpop.f32.mrf.mxu0
    %v4763 = vadd.f32 %v76, %v4762
    %v4764 = vpop.f32.mrf.mxu0
    %v4765 = vpop.f32.mrf.mxu0
    %v4766 = vadd.f32 %v76, %v4765
    %v4767 = vpop.f32.mrf.mxu0
    %4768 = vmatprep.mubr.bf16.mxu0 0
    %4769 = vmatmul.mubr.bf16.gmra.mxu0 %v4703
    %v4770 = vpop.f32.mrf.mxu0
    %v4771 = vadd.f32 %v76, %v4770
    %v4772 = vpop.f32.mrf.mxu0
    %v4773 = vpop.f32.mrf.mxu0
    %v4774 = vadd.f32 %v76, %v4773
    %v4775 = vpop.f32.mrf.mxu0
    %4776 = vmatprep.mubr.bf16.mxu0 0
    %4777 = vmatmul.mubr.bf16.gmra.mxu0 %v4706
    %v4778 = vpop.f32.mrf.mxu0
    %v4779 = vadd.f32 %v76, %v4778
    %v4780 = vpop.f32.mrf.mxu0
    %v4781 = vpop.f32.mrf.mxu0
    %v4782 = vadd.f32 %v76, %v4781
    %v4783 = vpop.f32.mrf.mxu0
    %4784 = vmatprep.mubr.bf16.mxu0 0
    %4785 = vmatmul.mubr.bf16.gmra.mxu0 %v4709
    %v4786 = vpop.f32.mrf.mxu0
    %v4787 = vadd.f32 %v76, %v4786
    %v4788 = vpop.f32.mrf.mxu0
    %v4789 = vpop.f32.mrf.mxu0
    %v4790 = vadd.f32 %v76, %v4789
    %v4791 = vpop.f32.mrf.mxu0
    %4792 = vmatprep.mubr.bf16.mxu0 0
    %4793 = vmatmul.mubr.bf16.gmra.mxu0 %v4712
    %v4794 = vpop.f32.mrf.mxu0
    %v4795 = vadd.f32 %v76, %v4794
    %v4796 = vpop.f32.mrf.mxu0
    %v4797 = vpop.f32.mrf.mxu0
    %v4798 = vadd.f32 %v76, %v4797
    %v4799 = vpop.f32.mrf.mxu0
    %4800 = vmatprep.mubr.bf16.mxu0 0
    %4801 = vmatmul.mubr.bf16.gmra.mxu0 %v4715
    %v4802 = vpop.f32.mrf.mxu0
    %v4803 = vadd.f32 %v76, %v4802
    %v4804 = vpop.f32.mrf.mxu0
    %v4805 = vpop.f32.mrf.mxu0
    %v4806 = vadd.f32 %v76, %v4805
    %v4807 = vpop.f32.mrf.mxu0
    %4808 = vmatprep.mubr.bf16.mxu0 0
    %4809 = vmatmul.mubr.bf16.gmra.mxu0 %v4718
    %v4810 = vpop.f32.mrf.mxu0
    %v4811 = vadd.f32 %v76, %v4810
    %v4812 = vpop.f32.mrf.mxu0
    %v4813 = vpop.f32.mrf.mxu0
    %v4814 = vadd.f32 %v76, %v4813
    %v4815 = vpop.f32.mrf.mxu0
    %4816 = vdwg.mxu0
    %v4817 = vmax.f32 %v4755, 0.0
    %v4818 = vmax.f32 %v4758, 0.0
    %v4819 = vmax.f32 %v4763, 0.0
    %v4820 = vmax.f32 %v4766, 0.0
    %v4821 = vmax.f32 %v4771, 0.0
    %v4822 = vmax.f32 %v4774, 0.0
    %v4823 = vmax.f32 %v4779, 0.0
    %v4824 = vmax.f32 %v4782, 0.0
    %v4825 = vmax.f32 %v4787, 0.0
    %v4826 = vmax.f32 %v4790, 0.0
    %v4827 = vmax.f32 %v4795, 0.0
    %v4828 = vmax.f32 %v4798, 0.0
    %v4829 = vmax.f32 %v4803, 0.0
    %v4830 = vmax.f32 %v4806, 0.0
    %v4831 = vmax.f32 %v4811, 0.0
    %v4832 = vmax.f32 %v4814, 0.0
    %v4833 = vpack.c.bf16 %v4818, %v4817
    %v4834 = vpack.c.bf16 %v4820, %v4819
    %v4835 = vpack.c.bf16 %v4822, %v4821
    %v4836 = vpack.c.bf16 %v4824, %v4823
    %v4837 = vpack.c.bf16 %v4826, %v4825
    %v4838 = vpack.c.bf16 %v4828, %v4827
    %v4839 = vpack.c.bf16 %v4830, %v4829
    %v4840 = vpack.c.bf16 %v4832, %v4831
    %v4842 = vsel %vm284, %v4833, 0
    %v4845 = vsel %vm284, %v4834, 0
    %v4848 = vsel %vm284, %v4835, 0
    %v4851 = vsel %vm284, %v4836, 0
    %v4854 = vsel %vm284, %v4837, 0
    %v4857 = vsel %vm284, %v4838, 0
    %v4860 = vsel %vm284, %v4839, 0
    %v4863 = vsel %vm284, %v4840, 0
    %4865 = vmatprep.subr.bf16.mxu0 0
    %4866 = vmatpush1.bf16.msra.mxu0 0
    %4867 = vmatprep.subr.bf16.mxu0 0
    %4868 = vmatpush1.bf16.msra.mxu0 0
    %4869 = vmatprep.subr.bf16.mxu0 0
    %4870 = vmatpush1.bf16.msra.mxu0 0
    %4871 = vmatprep.subr.bf16.mxu0 0
    %4872 = vmatpush1.bf16.msra.mxu0 0
    %4873 = vmatprep.subr.bf16.mxu0 0
    %4874 = vmatpush1.bf16.msra.mxu0 %v279
    %4875 = vmatprep.subr.bf16.mxu0 0
    %4876 = vmatpush1.bf16.msra.mxu0 %v278
    %4877 = vmatprep.subr.bf16.mxu0 0
    %4878 = vmatpush1.bf16.msra.mxu0 %v277
    %4879 = vmatprep.subr.bf16.mxu0 0
    %4880 = vmatpush1.bf16.msra.mxu0 %v276
    %4881 = vmatprep.subr.bf16.mxu0 0
    %4882 = vmatpush2.bf16.msra.mxu0 0
    %4883 = vmatprep.subr.bf16.mxu0 0
    %4884 = vmatpush2.bf16.msra.mxu0 0
    %4885 = vmatprep.subr.bf16.mxu0 0
    %4886 = vmatpush2.bf16.msra.mxu0 0
    %4887 = vmatprep.subr.bf16.mxu0 0
    %4888 = vmatpush2.bf16.msra.mxu0 0
    %4889 = vmatprep.subr.bf16.mxu0 0
    %4890 = vmatpush2.bf16.msra.mxu0 0
    %4891 = vmatprep.subr.bf16.mxu0 0
    %4892 = vmatpush2.bf16.msra.mxu0 0
    %4893 = vmatprep.subr.bf16.mxu0 0
    %4894 = vmatpush2.bf16.msra.mxu0 0
    %4895 = vmatprep.subr.bf16.mxu0 0
    %4896 = vmatpush2.bf16.msra.mxu0 0
    %4897 = vmatprep.mubr.bf16.mxu0 0
    %4898 = vmatmul.mubr.bf16.gmra.mxu0 %v4842
    %v4899 = vpop.f32.mrf.mxu0
    %v4900 = vadd.f32 %v258, %v4899
    %v4901 = vpop.f32.mrf.mxu0
    %v4902 = vpop.f32.mrf.mxu0
    %v4903 = vadd.f32 %v258, %v4902
    %v4904 = vpop.f32.mrf.mxu0
    %4905 = vmatprep.mubr.bf16.mxu0 0
    %4906 = vmatmul.mubr.bf16.gmra.mxu0 %v4845
    %v4907 = vpop.f32.mrf.mxu0
    %v4908 = vadd.f32 %v258, %v4907
    %v4909 = vpop.f32.mrf.mxu0
    %v4910 = vpop.f32.mrf.mxu0
    %v4911 = vadd.f32 %v258, %v4910
    %v4912 = vpop.f32.mrf.mxu0
    %4913 = vmatprep.mubr.bf16.mxu0 0
    %4914 = vmatmul.mubr.bf16.gmra.mxu0 %v4848
    %v4915 = vpop.f32.mrf.mxu0
    %v4916 = vadd.f32 %v258, %v4915
    %v4917 = vpop.f32.mrf.mxu0
    %v4918 = vpop.f32.mrf.mxu0
    %v4919 = vadd.f32 %v258, %v4918
    %v4920 = vpop.f32.mrf.mxu0
    %4921 = vmatprep.mubr.bf16.mxu0 0
    %4922 = vmatmul.mubr.bf16.gmra.mxu0 %v4851
    %v4923 = vpop.f32.mrf.mxu0
    %v4924 = vadd.f32 %v258, %v4923
    %v4925 = vpop.f32.mrf.mxu0
    %v4926 = vpop.f32.mrf.mxu0
    %v4927 = vadd.f32 %v258, %v4926
    %v4928 = vpop.f32.mrf.mxu0
    %4929 = vmatprep.mubr.bf16.mxu0 0
    %4930 = vmatmul.mubr.bf16.gmra.mxu0 %v4854
    %v4931 = vpop.f32.mrf.mxu0
    %v4932 = vadd.f32 %v258, %v4931
    %v4933 = vpop.f32.mrf.mxu0
    %v4934 = vpop.f32.mrf.mxu0
    %v4935 = vadd.f32 %v258, %v4934
    %v4936 = vpop.f32.mrf.mxu0
    %4937 = vmatprep.mubr.bf16.mxu0 0
    %4938 = vmatmul.mubr.bf16.gmra.mxu0 %v4857
    %v4939 = vpop.f32.mrf.mxu0
    %v4940 = vadd.f32 %v258, %v4939
    %v4941 = vpop.f32.mrf.mxu0
    %v4942 = vpop.f32.mrf.mxu0
    %v4943 = vadd.f32 %v258, %v4942
    %v4944 = vpop.f32.mrf.mxu0
    %4945 = vmatprep.mubr.bf16.mxu0 0
    %4946 = vmatmul.mubr.bf16.gmra.mxu0 %v4860
    %v4947 = vpop.f32.mrf.mxu0
    %v4948 = vadd.f32 %v258, %v4947
    %v4949 = vpop.f32.mrf.mxu0
    %v4950 = vpop.f32.mrf.mxu0
    %v4951 = vadd.f32 %v258, %v4950
    %v4952 = vpop.f32.mrf.mxu0
    %4953 = vmatprep.mubr.bf16.mxu0 0
    %4954 = vmatmul.mubr.bf16.gmra.mxu0 %v4863
    %v4955 = vpop.f32.mrf.mxu0
    %v4956 = vadd.f32 %v258, %v4955
    %v4957 = vpop.f32.mrf.mxu0
    %v4958 = vpop.f32.mrf.mxu0
    %v4959 = vadd.f32 %v258, %v4958
    %v4960 = vpop.f32.mrf.mxu0
    %4961 = vdwg.mxu0
    %v4962 = vmax.f32 %v4900, 0.0
    %v4963 = vmax.f32 %v4903, 0.0
    %v4964 = vmax.f32 %v4908, 0.0
    %v4965 = vmax.f32 %v4911, 0.0
    %v4966 = vmax.f32 %v4916, 0.0
    %v4967 = vmax.f32 %v4919, 0.0
    %v4968 = vmax.f32 %v4924, 0.0
    %v4969 = vmax.f32 %v4927, 0.0
    %v4970 = vmax.f32 %v4932, 0.0
    %v4971 = vmax.f32 %v4935, 0.0
    %v4972 = vmax.f32 %v4940, 0.0
    %v4973 = vmax.f32 %v4943, 0.0
    %v4974 = vmax.f32 %v4948, 0.0
    %v4975 = vmax.f32 %v4951, 0.0
    %v4976 = vmax.f32 %v4956, 0.0
    %v4977 = vmax.f32 %v4959, 0.0
    %v4978 = vpack.c.bf16 %v4963, %v4962
    %v4979 = vpack.c.bf16 %v4965, %v4964
    %v4980 = vpack.c.bf16 %v4967, %v4966
    %v4981 = vpack.c.bf16 %v4969, %v4968
    %v4982 = vpack.c.bf16 %v4971, %v4970
    %v4983 = vpack.c.bf16 %v4973, %v4972
    %v4984 = vpack.c.bf16 %v4975, %v4974
    %v4985 = vpack.c.bf16 %v4977, %v4976
    %v4987 = vsel %vm284, %v4978, 0
    %v4990 = vsel %vm284, %v4979, 0
    %v4993 = vsel %vm284, %v4980, 0
    %v4996 = vsel %vm284, %v4981, 0
    %v4999 = vsel %vm284, %v4982, 0
    %v5002 = vsel %vm284, %v4983, 0
    %v5005 = vsel %vm284, %v4984, 0
    %v5008 = vsel %vm284, %v4985, 0
    %5010 = vmatprep.subr.bf16.mxu0 0
    %5011 = vmatpush1.bf16.xpose.msra.mxu0 %v5008
    %5012 = vmatprep.subr.bf16.mxu0 0
    %5013 = vmatpush1.bf16.xpose.msra.mxu0 %v5005
    %5014 = vmatprep.subr.bf16.mxu0 0
    %5015 = vmatpush1.bf16.xpose.msra.mxu0 %v5002
    %5016 = vmatprep.subr.bf16.mxu0 0
    %5017 = vmatpush1.bf16.xpose.msra.mxu0 %v4999
    %5018 = vmatprep.subr.bf16.mxu0 0
    %5019 = vmatpush1.bf16.xpose.msra.mxu0 %v4996
    %5020 = vmatprep.subr.bf16.mxu0 0
    %5021 = vmatpush1.bf16.xpose.msra.mxu0 %v4993
    %5022 = vmatprep.subr.bf16.mxu0 0
    %5023 = vmatpush1.bf16.xpose.msra.mxu0 %v4990
    %5024 = vmatprep.subr.bf16.mxu0 0
    %5025 = vmatpush1.bf16.xpose.msra.mxu0 %v4987
    %5026 = vmatprep.subr.bf16.mxu0 0
    %5027 = vmatpush2.bf16.xpose.msra.mxu0 0
    %5028 = vmatprep.subr.bf16.mxu0 0
    %5029 = vmatpush2.bf16.xpose.msra.mxu0 0
    %5030 = vmatprep.subr.bf16.mxu0 0
    %5031 = vmatpush2.bf16.xpose.msra.mxu0 0
    %5032 = vmatprep.subr.bf16.mxu0 0
    %5033 = vmatpush2.bf16.xpose.msra.mxu0 0
    %5034 = vmatprep.subr.bf16.mxu0 0
    %5035 = vmatpush2.bf16.xpose.msra.mxu0 0
    %5036 = vmatprep.subr.bf16.mxu0 0
    %5037 = vmatpush2.bf16.xpose.msra.mxu0 0
    %5038 = vmatprep.subr.bf16.mxu0 0
    %5039 = vmatpush2.bf16.xpose.msra.mxu0 0
    %5040 = vmatprep.subr.bf16.mxu0 0
    %5041 = vmatpush2.bf16.xpose.msra.mxu0 0
    %5042 = vmatprep.mubr.bf16.mxu0 0
    %5043 = vmatmul.mubr.bf16.gmra.mxu0 %v436
    %v5044 = vpop.f32.mrf.mxu0
    %v5045 = vadd.f32 %v433, %v5044
    %v5046 = vpop.f32.mrf.mxu0
    %v5047 = vpop.f32.mrf.mxu0
    %v5048 = vpop.f32.mrf.mxu0
    %5049 = vdwg.mxu0
    %5050 = vst [vmem:[#allocation2 + $0x18] sm:$0x3] %v5045
    %v5051 = vld [vmem:[%s0 + $0x680] sm:$0xff]
    %v5052 = vld [vmem:[%s0 + $0x688] sm:$0xff]
    %v5053 = vld [vmem:[%s0 + $0x690] sm:$0xff]
    %v5054 = vld [vmem:[%s0 + $0x698] sm:$0xff]
    %v5055 = vld [vmem:[%s0 + $0x6a0] sm:$0xff]
    %v5056 = vld [vmem:[%s0 + $0x6a8] sm:$0xff]
    %v5057 = vld [vmem:[%s0 + $0x6b0] sm:$0xff]
    %v5058 = vld [vmem:[%s0 + $0x6b8] sm:$0xff]
    %v5059 = vld [vmem:[%s0 + $0x6c0] sm:$0xff]
    %v5060 = vld [vmem:[%s0 + $0x6c8] sm:$0xff]
    %v5061 = vld [vmem:[%s0 + $0x6d0] sm:$0xff]
    %v5062 = vld [vmem:[%s0 + $0x6d8] sm:$0xff]
    %v5063 = vld [vmem:[%s0 + $0x6e0] sm:$0xff]
    %v5064 = vld [vmem:[%s0 + $0x6e8] sm:$0xff]
    %v5065 = vld [vmem:[%s0 + $0x6f0] sm:$0xff]
    %v5066 = vld [vmem:[%s0 + $0x6f8] sm:$0xff]
    %v5067 = vpack.c.bf16 %v5052, %v5051
    %v5068 = vpack.c.bf16 %v5054, %v5053
    %v5069 = vpack.c.bf16 %v5056, %v5055
    %v5070 = vpack.c.bf16 %v5058, %v5057
    %v5071 = vpack.c.bf16 %v5060, %v5059
    %v5072 = vpack.c.bf16 %v5062, %v5061
    %v5073 = vpack.c.bf16 %v5064, %v5063
    %v5074 = vpack.c.bf16 %v5066, %v5065
    %v5076 = vsel %vm101, %v5067, 0
    %v5079 = vsel %vm101, %v5068, 0
    %v5082 = vsel %vm101, %v5069, 0
    %v5085 = vsel %vm101, %v5070, 0
    %v5088 = vsel %vm101, %v5071, 0
    %v5091 = vsel %vm101, %v5072, 0
    %v5094 = vsel %vm101, %v5073, 0
    %v5097 = vsel %vm101, %v5074, 0
    %5099 = vmatprep.subr.bf16.mxu0 0
    %5100 = vmatpush1.bf16.msra.mxu0 0
    %5101 = vmatprep.subr.bf16.mxu0 0
    %5102 = vmatpush1.bf16.msra.mxu0 0
    %5103 = vmatprep.subr.bf16.mxu0 0
    %5104 = vmatpush1.bf16.msra.mxu0 0
    %5105 = vmatprep.subr.bf16.mxu0 0
    %5106 = vmatpush1.bf16.msra.mxu0 0
    %5107 = vmatprep.subr.bf16.mxu0 0
    %5108 = vmatpush1.bf16.msra.mxu0 %v131
    %5109 = vmatprep.subr.bf16.mxu0 0
    %5110 = vmatpush1.bf16.msra.mxu0 %v96
    %5111 = vmatprep.subr.bf16.mxu0 0
    %5112 = vmatpush1.bf16.msra.mxu0 %v95
    %5113 = vmatprep.subr.bf16.mxu0 0
    %5114 = vmatpush1.bf16.msra.mxu0 %v94
    %5115 = vmatprep.subr.bf16.mxu0 0
    %5116 = vmatpush2.bf16.msra.mxu0 0
    %5117 = vmatprep.subr.bf16.mxu0 0
    %5118 = vmatpush2.bf16.msra.mxu0 0
    %5119 = vmatprep.subr.bf16.mxu0 0
    %5120 = vmatpush2.bf16.msra.mxu0 0
    %5121 = vmatprep.subr.bf16.mxu0 0
    %5122 = vmatpush2.bf16.msra.mxu0 0
    %5123 = vmatprep.subr.bf16.mxu0 0
    %5124 = vmatpush2.bf16.msra.mxu0 0
    %5125 = vmatprep.subr.bf16.mxu0 0
    %5126 = vmatpush2.bf16.msra.mxu0 0
    %5127 = vmatprep.subr.bf16.mxu0 0
    %5128 = vmatpush2.bf16.msra.mxu0 0
    %5129 = vmatprep.subr.bf16.mxu0 0
    %5130 = vmatpush2.bf16.msra.mxu0 0
    %5131 = vmatprep.mubr.bf16.mxu0 0
    %5132 = vmatmul.mubr.bf16.gmra.mxu0 %v5076
    %v5133 = vpop.f32.mrf.mxu0
    %v5134 = vadd.f32 %v76, %v5133
    %v5135 = vpop.f32.mrf.mxu0
    %v5136 = vpop.f32.mrf.mxu0
    %v5137 = vadd.f32 %v76, %v5136
    %v5138 = vpop.f32.mrf.mxu0
    %5139 = vmatprep.mubr.bf16.mxu0 0
    %5140 = vmatmul.mubr.bf16.gmra.mxu0 %v5079
    %v5141 = vpop.f32.mrf.mxu0
    %v5142 = vadd.f32 %v76, %v5141
    %v5143 = vpop.f32.mrf.mxu0
    %v5144 = vpop.f32.mrf.mxu0
    %v5145 = vadd.f32 %v76, %v5144
    %v5146 = vpop.f32.mrf.mxu0
    %5147 = vmatprep.mubr.bf16.mxu0 0
    %5148 = vmatmul.mubr.bf16.gmra.mxu0 %v5082
    %v5149 = vpop.f32.mrf.mxu0
    %v5150 = vadd.f32 %v76, %v5149
    %v5151 = vpop.f32.mrf.mxu0
    %v5152 = vpop.f32.mrf.mxu0
    %v5153 = vadd.f32 %v76, %v5152
    %v5154 = vpop.f32.mrf.mxu0
    %5155 = vmatprep.mubr.bf16.mxu0 0
    %5156 = vmatmul.mubr.bf16.gmra.mxu0 %v5085
    %v5157 = vpop.f32.mrf.mxu0
    %v5158 = vadd.f32 %v76, %v5157
    %v5159 = vpop.f32.mrf.mxu0
    %v5160 = vpop.f32.mrf.mxu0
    %v5161 = vadd.f32 %v76, %v5160
    %v5162 = vpop.f32.mrf.mxu0
    %5163 = vmatprep.mubr.bf16.mxu0 0
    %5164 = vmatmul.mubr.bf16.gmra.mxu0 %v5088
    %v5165 = vpop.f32.mrf.mxu0
    %v5166 = vadd.f32 %v76, %v5165
    %v5167 = vpop.f32.mrf.mxu0
    %v5168 = vpop.f32.mrf.mxu0
    %v5169 = vadd.f32 %v76, %v5168
    %v5170 = vpop.f32.mrf.mxu0
    %5171 = vmatprep.mubr.bf16.mxu0 0
    %5172 = vmatmul.mubr.bf16.gmra.mxu0 %v5091
    %v5173 = vpop.f32.mrf.mxu0
    %v5174 = vadd.f32 %v76, %v5173
    %v5175 = vpop.f32.mrf.mxu0
    %v5176 = vpop.f32.mrf.mxu0
    %v5177 = vadd.f32 %v76, %v5176
    %v5178 = vpop.f32.mrf.mxu0
    %5179 = vmatprep.mubr.bf16.mxu0 0
    %5180 = vmatmul.mubr.bf16.gmra.mxu0 %v5094
    %v5181 = vpop.f32.mrf.mxu0
    %v5182 = vadd.f32 %v76, %v5181
    %v5183 = vpop.f32.mrf.mxu0
    %v5184 = vpop.f32.mrf.mxu0
    %v5185 = vadd.f32 %v76, %v5184
    %v5186 = vpop.f32.mrf.mxu0
    %5187 = vmatprep.mubr.bf16.mxu0 0
    %5188 = vmatmul.mubr.bf16.gmra.mxu0 %v5097
    %v5189 = vpop.f32.mrf.mxu0
    %v5190 = vadd.f32 %v76, %v5189
    %v5191 = vpop.f32.mrf.mxu0
    %v5192 = vpop.f32.mrf.mxu0
    %v5193 = vadd.f32 %v76, %v5192
    %v5194 = vpop.f32.mrf.mxu0
    %5195 = vdwg.mxu0
    %v5196 = vmax.f32 %v5134, 0.0
    %v5197 = vmax.f32 %v5137, 0.0
    %v5198 = vmax.f32 %v5142, 0.0
    %v5199 = vmax.f32 %v5145, 0.0
    %v5200 = vmax.f32 %v5150, 0.0
    %v5201 = vmax.f32 %v5153, 0.0
    %v5202 = vmax.f32 %v5158, 0.0
    %v5203 = vmax.f32 %v5161, 0.0
    %v5204 = vmax.f32 %v5166, 0.0
    %v5205 = vmax.f32 %v5169, 0.0
    %v5206 = vmax.f32 %v5174, 0.0
    %v5207 = vmax.f32 %v5177, 0.0
    %v5208 = vmax.f32 %v5182, 0.0
    %v5209 = vmax.f32 %v5185, 0.0
    %v5210 = vmax.f32 %v5190, 0.0
    %v5211 = vmax.f32 %v5193, 0.0
    %v5212 = vpack.c.bf16 %v5197, %v5196
    %v5213 = vpack.c.bf16 %v5199, %v5198
    %v5214 = vpack.c.bf16 %v5201, %v5200
    %v5215 = vpack.c.bf16 %v5203, %v5202
    %v5216 = vpack.c.bf16 %v5205, %v5204
    %v5217 = vpack.c.bf16 %v5207, %v5206
    %v5218 = vpack.c.bf16 %v5209, %v5208
    %v5219 = vpack.c.bf16 %v5211, %v5210
    %v5221 = vsel %vm284, %v5212, 0
    %v5224 = vsel %vm284, %v5213, 0
    %v5227 = vsel %vm284, %v5214, 0
    %v5230 = vsel %vm284, %v5215, 0
    %v5233 = vsel %vm284, %v5216, 0
    %v5236 = vsel %vm284, %v5217, 0
    %v5239 = vsel %vm284, %v5218, 0
    %v5242 = vsel %vm284, %v5219, 0
    %5244 = vmatprep.subr.bf16.mxu0 0
    %5245 = vmatpush1.bf16.msra.mxu0 0
    %5246 = vmatprep.subr.bf16.mxu0 0
    %5247 = vmatpush1.bf16.msra.mxu0 0
    %5248 = vmatprep.subr.bf16.mxu0 0
    %5249 = vmatpush1.bf16.msra.mxu0 0
    %5250 = vmatprep.subr.bf16.mxu0 0
    %5251 = vmatpush1.bf16.msra.mxu0 0
    %5252 = vmatprep.subr.bf16.mxu0 0
    %5253 = vmatpush1.bf16.msra.mxu0 %v279
    %5254 = vmatprep.subr.bf16.mxu0 0
    %5255 = vmatpush1.bf16.msra.mxu0 %v278
    %5256 = vmatprep.subr.bf16.mxu0 0
    %5257 = vmatpush1.bf16.msra.mxu0 %v277
    %5258 = vmatprep.subr.bf16.mxu0 0
    %5259 = vmatpush1.bf16.msra.mxu0 %v276
    %5260 = vmatprep.subr.bf16.mxu0 0
    %5261 = vmatpush2.bf16.msra.mxu0 0
    %5262 = vmatprep.subr.bf16.mxu0 0
    %5263 = vmatpush2.bf16.msra.mxu0 0
    %5264 = vmatprep.subr.bf16.mxu0 0
    %5265 = vmatpush2.bf16.msra.mxu0 0
    %5266 = vmatprep.subr.bf16.mxu0 0
    %5267 = vmatpush2.bf16.msra.mxu0 0
    %5268 = vmatprep.subr.bf16.mxu0 0
    %5269 = vmatpush2.bf16.msra.mxu0 0
    %5270 = vmatprep.subr.bf16.mxu0 0
    %5271 = vmatpush2.bf16.msra.mxu0 0
    %5272 = vmatprep.subr.bf16.mxu0 0
    %5273 = vmatpush2.bf16.msra.mxu0 0
    %5274 = vmatprep.subr.bf16.mxu0 0
    %5275 = vmatpush2.bf16.msra.mxu0 0
    %5276 = vmatprep.mubr.bf16.mxu0 0
    %5277 = vmatmul.mubr.bf16.gmra.mxu0 %v5221
    %v5278 = vpop.f32.mrf.mxu0
    %v5279 = vadd.f32 %v258, %v5278
    %v5280 = vpop.f32.mrf.mxu0
    %v5281 = vpop.f32.mrf.mxu0
    %v5282 = vadd.f32 %v258, %v5281
    %v5283 = vpop.f32.mrf.mxu0
    %5284 = vmatprep.mubr.bf16.mxu0 0
    %5285 = vmatmul.mubr.bf16.gmra.mxu0 %v5224
    %v5286 = vpop.f32.mrf.mxu0
    %v5287 = vadd.f32 %v258, %v5286
    %v5288 = vpop.f32.mrf.mxu0
    %v5289 = vpop.f32.mrf.mxu0
    %v5290 = vadd.f32 %v258, %v5289
    %v5291 = vpop.f32.mrf.mxu0
    %5292 = vmatprep.mubr.bf16.mxu0 0
    %5293 = vmatmul.mubr.bf16.gmra.mxu0 %v5227
    %v5294 = vpop.f32.mrf.mxu0
    %v5295 = vadd.f32 %v258, %v5294
    %v5296 = vpop.f32.mrf.mxu0
    %v5297 = vpop.f32.mrf.mxu0
    %v5298 = vadd.f32 %v258, %v5297
    %v5299 = vpop.f32.mrf.mxu0
    %5300 = vmatprep.mubr.bf16.mxu0 0
    %5301 = vmatmul.mubr.bf16.gmra.mxu0 %v5230
    %v5302 = vpop.f32.mrf.mxu0
    %v5303 = vadd.f32 %v258, %v5302
    %v5304 = vpop.f32.mrf.mxu0
    %v5305 = vpop.f32.mrf.mxu0
    %v5306 = vadd.f32 %v258, %v5305
    %v5307 = vpop.f32.mrf.mxu0
    %5308 = vmatprep.mubr.bf16.mxu0 0
    %5309 = vmatmul.mubr.bf16.gmra.mxu0 %v5233
    %v5310 = vpop.f32.mrf.mxu0
    %v5311 = vadd.f32 %v258, %v5310
    %v5312 = vpop.f32.mrf.mxu0
    %v5313 = vpop.f32.mrf.mxu0
    %v5314 = vadd.f32 %v258, %v5313
    %v5315 = vpop.f32.mrf.mxu0
    %5316 = vmatprep.mubr.bf16.mxu0 0
    %5317 = vmatmul.mubr.bf16.gmra.mxu0 %v5236
    %v5318 = vpop.f32.mrf.mxu0
    %v5319 = vadd.f32 %v258, %v5318
    %v5320 = vpop.f32.mrf.mxu0
    %v5321 = vpop.f32.mrf.mxu0
    %v5322 = vadd.f32 %v258, %v5321
    %v5323 = vpop.f32.mrf.mxu0
    %5324 = vmatprep.mubr.bf16.mxu0 0
    %5325 = vmatmul.mubr.bf16.gmra.mxu0 %v5239
    %v5326 = vpop.f32.mrf.mxu0
    %v5327 = vadd.f32 %v258, %v5326
    %v5328 = vpop.f32.mrf.mxu0
    %v5329 = vpop.f32.mrf.mxu0
    %v5330 = vadd.f32 %v258, %v5329
    %v5331 = vpop.f32.mrf.mxu0
    %5332 = vmatprep.mubr.bf16.mxu0 0
    %5333 = vmatmul.mubr.bf16.gmra.mxu0 %v5242
    %v5334 = vpop.f32.mrf.mxu0
    %v5335 = vadd.f32 %v258, %v5334
    %v5336 = vpop.f32.mrf.mxu0
    %v5337 = vpop.f32.mrf.mxu0
    %v5338 = vadd.f32 %v258, %v5337
    %v5339 = vpop.f32.mrf.mxu0
    %5340 = vdwg.mxu0
    %v5341 = vmax.f32 %v5279, 0.0
    %v5342 = vmax.f32 %v5282, 0.0
    %v5343 = vmax.f32 %v5287, 0.0
    %v5344 = vmax.f32 %v5290, 0.0
    %v5345 = vmax.f32 %v5295, 0.0
    %v5346 = vmax.f32 %v5298, 0.0
    %v5347 = vmax.f32 %v5303, 0.0
    %v5348 = vmax.f32 %v5306, 0.0
    %v5349 = vmax.f32 %v5311, 0.0
    %v5350 = vmax.f32 %v5314, 0.0
    %v5351 = vmax.f32 %v5319, 0.0
    %v5352 = vmax.f32 %v5322, 0.0
    %v5353 = vmax.f32 %v5327, 0.0
    %v5354 = vmax.f32 %v5330, 0.0
    %v5355 = vmax.f32 %v5335, 0.0
    %v5356 = vmax.f32 %v5338, 0.0
    %v5357 = vpack.c.bf16 %v5342, %v5341
    %v5358 = vpack.c.bf16 %v5344, %v5343
    %v5359 = vpack.c.bf16 %v5346, %v5345
    %v5360 = vpack.c.bf16 %v5348, %v5347
    %v5361 = vpack.c.bf16 %v5350, %v5349
    %v5362 = vpack.c.bf16 %v5352, %v5351
    %v5363 = vpack.c.bf16 %v5354, %v5353
    %v5364 = vpack.c.bf16 %v5356, %v5355
    %v5366 = vsel %vm284, %v5357, 0
    %v5369 = vsel %vm284, %v5358, 0
    %v5372 = vsel %vm284, %v5359, 0
    %v5375 = vsel %vm284, %v5360, 0
    %v5378 = vsel %vm284, %v5361, 0
    %v5381 = vsel %vm284, %v5362, 0
    %v5384 = vsel %vm284, %v5363, 0
    %v5387 = vsel %vm284, %v5364, 0
    %5389 = vmatprep.subr.bf16.mxu0 0
    %5390 = vmatpush1.bf16.xpose.msra.mxu0 %v5387
    %5391 = vmatprep.subr.bf16.mxu0 0
    %5392 = vmatpush1.bf16.xpose.msra.mxu0 %v5384
    %5393 = vmatprep.subr.bf16.mxu0 0
    %5394 = vmatpush1.bf16.xpose.msra.mxu0 %v5381
    %5395 = vmatprep.subr.bf16.mxu0 0
    %5396 = vmatpush1.bf16.xpose.msra.mxu0 %v5378
    %5397 = vmatprep.subr.bf16.mxu0 0
    %5398 = vmatpush1.bf16.xpose.msra.mxu0 %v5375
    %5399 = vmatprep.subr.bf16.mxu0 0
    %5400 = vmatpush1.bf16.xpose.msra.mxu0 %v5372
    %5401 = vmatprep.subr.bf16.mxu0 0
    %5402 = vmatpush1.bf16.xpose.msra.mxu0 %v5369
    %5403 = vmatprep.subr.bf16.mxu0 0
    %5404 = vmatpush1.bf16.xpose.msra.mxu0 %v5366
    %5405 = vmatprep.subr.bf16.mxu0 0
    %5406 = vmatpush2.bf16.xpose.msra.mxu0 0
    %5407 = vmatprep.subr.bf16.mxu0 0
    %5408 = vmatpush2.bf16.xpose.msra.mxu0 0
    %5409 = vmatprep.subr.bf16.mxu0 0
    %5410 = vmatpush2.bf16.xpose.msra.mxu0 0
    %5411 = vmatprep.subr.bf16.mxu0 0
    %5412 = vmatpush2.bf16.xpose.msra.mxu0 0
    %5413 = vmatprep.subr.bf16.mxu0 0
    %5414 = vmatpush2.bf16.xpose.msra.mxu0 0
    %5415 = vmatprep.subr.bf16.mxu0 0
    %5416 = vmatpush2.bf16.xpose.msra.mxu0 0
    %5417 = vmatprep.subr.bf16.mxu0 0
    %5418 = vmatpush2.bf16.xpose.msra.mxu0 0
    %5419 = vmatprep.subr.bf16.mxu0 0
    %5420 = vmatpush2.bf16.xpose.msra.mxu0 0
    %5421 = vmatprep.mubr.bf16.mxu0 0
    %5422 = vmatmul.mubr.bf16.gmra.mxu0 %v436
    %v5423 = vpop.f32.mrf.mxu0
    %v5424 = vadd.f32 %v433, %v5423
    %v5425 = vpop.f32.mrf.mxu0
    %v5426 = vpop.f32.mrf.mxu0
    %v5427 = vpop.f32.mrf.mxu0
    %5428 = vdwg.mxu0
    %5429 = vst [vmem:[#allocation2 + $0x1a] sm:$0x3] %v5424
    %v5430 = vld [vmem:[%s0 + $0x700] sm:$0xff]
    %v5431 = vld [vmem:[%s0 + $0x708] sm:$0xff]
    %v5432 = vld [vmem:[%s0 + $0x710] sm:$0xff]
    %v5433 = vld [vmem:[%s0 + $0x718] sm:$0xff]
    %v5434 = vld [vmem:[%s0 + $0x720] sm:$0xff]
    %v5435 = vld [vmem:[%s0 + $0x728] sm:$0xff]
    %v5436 = vld [vmem:[%s0 + $0x730] sm:$0xff]
    %v5437 = vld [vmem:[%s0 + $0x738] sm:$0xff]
    %v5438 = vld [vmem:[%s0 + $0x740] sm:$0xff]
    %v5439 = vld [vmem:[%s0 + $0x748] sm:$0xff]
    %v5440 = vld [vmem:[%s0 + $0x750] sm:$0xff]
    %v5441 = vld [vmem:[%s0 + $0x758] sm:$0xff]
    %v5442 = vld [vmem:[%s0 + $0x760] sm:$0xff]
    %v5443 = vld [vmem:[%s0 + $0x768] sm:$0xff]
    %v5444 = vld [vmem:[%s0 + $0x770] sm:$0xff]
    %v5445 = vld [vmem:[%s0 + $0x778] sm:$0xff]
    %v5446 = vpack.c.bf16 %v5431, %v5430
    %v5447 = vpack.c.bf16 %v5433, %v5432
    %v5448 = vpack.c.bf16 %v5435, %v5434
    %v5449 = vpack.c.bf16 %v5437, %v5436
    %v5450 = vpack.c.bf16 %v5439, %v5438
    %v5451 = vpack.c.bf16 %v5441, %v5440
    %v5452 = vpack.c.bf16 %v5443, %v5442
    %v5453 = vpack.c.bf16 %v5445, %v5444
    %v5455 = vsel %vm101, %v5446, 0
    %v5458 = vsel %vm101, %v5447, 0
    %v5461 = vsel %vm101, %v5448, 0
    %v5464 = vsel %vm101, %v5449, 0
    %v5467 = vsel %vm101, %v5450, 0
    %v5470 = vsel %vm101, %v5451, 0
    %v5473 = vsel %vm101, %v5452, 0
    %v5476 = vsel %vm101, %v5453, 0
    %5478 = vmatprep.subr.bf16.mxu0 0
    %5479 = vmatpush1.bf16.msra.mxu0 0
    %5480 = vmatprep.subr.bf16.mxu0 0
    %5481 = vmatpush1.bf16.msra.mxu0 0
    %5482 = vmatprep.subr.bf16.mxu0 0
    %5483 = vmatpush1.bf16.msra.mxu0 0
    %5484 = vmatprep.subr.bf16.mxu0 0
    %5485 = vmatpush1.bf16.msra.mxu0 0
    %5486 = vmatprep.subr.bf16.mxu0 0
    %5487 = vmatpush1.bf16.msra.mxu0 %v131
    %5488 = vmatprep.subr.bf16.mxu0 0
    %5489 = vmatpush1.bf16.msra.mxu0 %v96
    %5490 = vmatprep.subr.bf16.mxu0 0
    %5491 = vmatpush1.bf16.msra.mxu0 %v95
    %5492 = vmatprep.subr.bf16.mxu0 0
    %5493 = vmatpush1.bf16.msra.mxu0 %v94
    %5494 = vmatprep.subr.bf16.mxu0 0
    %5495 = vmatpush2.bf16.msra.mxu0 0
    %5496 = vmatprep.subr.bf16.mxu0 0
    %5497 = vmatpush2.bf16.msra.mxu0 0
    %5498 = vmatprep.subr.bf16.mxu0 0
    %5499 = vmatpush2.bf16.msra.mxu0 0
    %5500 = vmatprep.subr.bf16.mxu0 0
    %5501 = vmatpush2.bf16.msra.mxu0 0
    %5502 = vmatprep.subr.bf16.mxu0 0
    %5503 = vmatpush2.bf16.msra.mxu0 0
    %5504 = vmatprep.subr.bf16.mxu0 0
    %5505 = vmatpush2.bf16.msra.mxu0 0
    %5506 = vmatprep.subr.bf16.mxu0 0
    %5507 = vmatpush2.bf16.msra.mxu0 0
    %5508 = vmatprep.subr.bf16.mxu0 0
    %5509 = vmatpush2.bf16.msra.mxu0 0
    %5510 = vmatprep.mubr.bf16.mxu0 0
    %5511 = vmatmul.mubr.bf16.gmra.mxu0 %v5455
    %v5512 = vpop.f32.mrf.mxu0
    %v5513 = vadd.f32 %v76, %v5512
    %v5514 = vpop.f32.mrf.mxu0
    %v5515 = vpop.f32.mrf.mxu0
    %v5516 = vadd.f32 %v76, %v5515
    %v5517 = vpop.f32.mrf.mxu0
    %5518 = vmatprep.mubr.bf16.mxu0 0
    %5519 = vmatmul.mubr.bf16.gmra.mxu0 %v5458
    %v5520 = vpop.f32.mrf.mxu0
    %v5521 = vadd.f32 %v76, %v5520
    %v5522 = vpop.f32.mrf.mxu0
    %v5523 = vpop.f32.mrf.mxu0
    %v5524 = vadd.f32 %v76, %v5523
    %v5525 = vpop.f32.mrf.mxu0
    %5526 = vmatprep.mubr.bf16.mxu0 0
    %5527 = vmatmul.mubr.bf16.gmra.mxu0 %v5461
    %v5528 = vpop.f32.mrf.mxu0
    %v5529 = vadd.f32 %v76, %v5528
    %v5530 = vpop.f32.mrf.mxu0
    %v5531 = vpop.f32.mrf.mxu0
    %v5532 = vadd.f32 %v76, %v5531
    %v5533 = vpop.f32.mrf.mxu0
    %5534 = vmatprep.mubr.bf16.mxu0 0
    %5535 = vmatmul.mubr.bf16.gmra.mxu0 %v5464
    %v5536 = vpop.f32.mrf.mxu0
    %v5537 = vadd.f32 %v76, %v5536
    %v5538 = vpop.f32.mrf.mxu0
    %v5539 = vpop.f32.mrf.mxu0
    %v5540 = vadd.f32 %v76, %v5539
    %v5541 = vpop.f32.mrf.mxu0
    %5542 = vmatprep.mubr.bf16.mxu0 0
    %5543 = vmatmul.mubr.bf16.gmra.mxu0 %v5467
    %v5544 = vpop.f32.mrf.mxu0
    %v5545 = vadd.f32 %v76, %v5544
    %v5546 = vpop.f32.mrf.mxu0
    %v5547 = vpop.f32.mrf.mxu0
    %v5548 = vadd.f32 %v76, %v5547
    %v5549 = vpop.f32.mrf.mxu0
    %5550 = vmatprep.mubr.bf16.mxu0 0
    %5551 = vmatmul.mubr.bf16.gmra.mxu0 %v5470
    %v5552 = vpop.f32.mrf.mxu0
    %v5553 = vadd.f32 %v76, %v5552
    %v5554 = vpop.f32.mrf.mxu0
    %v5555 = vpop.f32.mrf.mxu0
    %v5556 = vadd.f32 %v76, %v5555
    %v5557 = vpop.f32.mrf.mxu0
    %5558 = vmatprep.mubr.bf16.mxu0 0
    %5559 = vmatmul.mubr.bf16.gmra.mxu0 %v5473
    %v5560 = vpop.f32.mrf.mxu0
    %v5561 = vadd.f32 %v76, %v5560
    %v5562 = vpop.f32.mrf.mxu0
    %v5563 = vpop.f32.mrf.mxu0
    %v5564 = vadd.f32 %v76, %v5563
    %v5565 = vpop.f32.mrf.mxu0
    %5566 = vmatprep.mubr.bf16.mxu0 0
    %5567 = vmatmul.mubr.bf16.gmra.mxu0 %v5476
    %v5568 = vpop.f32.mrf.mxu0
    %v5569 = vadd.f32 %v76, %v5568
    %v5570 = vpop.f32.mrf.mxu0
    %v5571 = vpop.f32.mrf.mxu0
    %v5572 = vadd.f32 %v76, %v5571
    %v5573 = vpop.f32.mrf.mxu0
    %5574 = vdwg.mxu0
    %v5575 = vmax.f32 %v5513, 0.0
    %v5576 = vmax.f32 %v5516, 0.0
    %v5577 = vmax.f32 %v5521, 0.0
    %v5578 = vmax.f32 %v5524, 0.0
    %v5579 = vmax.f32 %v5529, 0.0
    %v5580 = vmax.f32 %v5532, 0.0
    %v5581 = vmax.f32 %v5537, 0.0
    %v5582 = vmax.f32 %v5540, 0.0
    %v5583 = vmax.f32 %v5545, 0.0
    %v5584 = vmax.f32 %v5548, 0.0
    %v5585 = vmax.f32 %v5553, 0.0
    %v5586 = vmax.f32 %v5556, 0.0
    %v5587 = vmax.f32 %v5561, 0.0
    %v5588 = vmax.f32 %v5564, 0.0
    %v5589 = vmax.f32 %v5569, 0.0
    %v5590 = vmax.f32 %v5572, 0.0
    %v5591 = vpack.c.bf16 %v5576, %v5575
    %v5592 = vpack.c.bf16 %v5578, %v5577
    %v5593 = vpack.c.bf16 %v5580, %v5579
    %v5594 = vpack.c.bf16 %v5582, %v5581
    %v5595 = vpack.c.bf16 %v5584, %v5583
    %v5596 = vpack.c.bf16 %v5586, %v5585
    %v5597 = vpack.c.bf16 %v5588, %v5587
    %v5598 = vpack.c.bf16 %v5590, %v5589
    %v5600 = vsel %vm284, %v5591, 0
    %v5603 = vsel %vm284, %v5592, 0
    %v5606 = vsel %vm284, %v5593, 0
    %v5609 = vsel %vm284, %v5594, 0
    %v5612 = vsel %vm284, %v5595, 0
    %v5615 = vsel %vm284, %v5596, 0
    %v5618 = vsel %vm284, %v5597, 0
    %v5621 = vsel %vm284, %v5598, 0
    %5623 = vmatprep.subr.bf16.mxu0 0
    %5624 = vmatpush1.bf16.msra.mxu0 0
    %5625 = vmatprep.subr.bf16.mxu0 0
    %5626 = vmatpush1.bf16.msra.mxu0 0
    %5627 = vmatprep.subr.bf16.mxu0 0
    %5628 = vmatpush1.bf16.msra.mxu0 0
    %5629 = vmatprep.subr.bf16.mxu0 0
    %5630 = vmatpush1.bf16.msra.mxu0 0
    %5631 = vmatprep.subr.bf16.mxu0 0
    %5632 = vmatpush1.bf16.msra.mxu0 %v279
    %5633 = vmatprep.subr.bf16.mxu0 0
    %5634 = vmatpush1.bf16.msra.mxu0 %v278
    %5635 = vmatprep.subr.bf16.mxu0 0
    %5636 = vmatpush1.bf16.msra.mxu0 %v277
    %5637 = vmatprep.subr.bf16.mxu0 0
    %5638 = vmatpush1.bf16.msra.mxu0 %v276
    %5639 = vmatprep.subr.bf16.mxu0 0
    %5640 = vmatpush2.bf16.msra.mxu0 0
    %5641 = vmatprep.subr.bf16.mxu0 0
    %5642 = vmatpush2.bf16.msra.mxu0 0
    %5643 = vmatprep.subr.bf16.mxu0 0
    %5644 = vmatpush2.bf16.msra.mxu0 0
    %5645 = vmatprep.subr.bf16.mxu0 0
    %5646 = vmatpush2.bf16.msra.mxu0 0
    %5647 = vmatprep.subr.bf16.mxu0 0
    %5648 = vmatpush2.bf16.msra.mxu0 0
    %5649 = vmatprep.subr.bf16.mxu0 0
    %5650 = vmatpush2.bf16.msra.mxu0 0
    %5651 = vmatprep.subr.bf16.mxu0 0
    %5652 = vmatpush2.bf16.msra.mxu0 0
    %5653 = vmatprep.subr.bf16.mxu0 0
    %5654 = vmatpush2.bf16.msra.mxu0 0
    %5655 = vmatprep.mubr.bf16.mxu0 0
    %5656 = vmatmul.mubr.bf16.gmra.mxu0 %v5600
    %v5657 = vpop.f32.mrf.mxu0
    %v5658 = vadd.f32 %v258, %v5657
    %v5659 = vpop.f32.mrf.mxu0
    %v5660 = vpop.f32.mrf.mxu0
    %v5661 = vadd.f32 %v258, %v5660
    %v5662 = vpop.f32.mrf.mxu0
    %5663 = vmatprep.mubr.bf16.mxu0 0
    %5664 = vmatmul.mubr.bf16.gmra.mxu0 %v5603
    %v5665 = vpop.f32.mrf.mxu0
    %v5666 = vadd.f32 %v258, %v5665
    %v5667 = vpop.f32.mrf.mxu0
    %v5668 = vpop.f32.mrf.mxu0
    %v5669 = vadd.f32 %v258, %v5668
    %v5670 = vpop.f32.mrf.mxu0
    %5671 = vmatprep.mubr.bf16.mxu0 0
    %5672 = vmatmul.mubr.bf16.gmra.mxu0 %v5606
    %v5673 = vpop.f32.mrf.mxu0
    %v5674 = vadd.f32 %v258, %v5673
    %v5675 = vpop.f32.mrf.mxu0
    %v5676 = vpop.f32.mrf.mxu0
    %v5677 = vadd.f32 %v258, %v5676
    %v5678 = vpop.f32.mrf.mxu0
    %5679 = vmatprep.mubr.bf16.mxu0 0
    %5680 = vmatmul.mubr.bf16.gmra.mxu0 %v5609
    %v5681 = vpop.f32.mrf.mxu0
    %v5682 = vadd.f32 %v258, %v5681
    %v5683 = vpop.f32.mrf.mxu0
    %v5684 = vpop.f32.mrf.mxu0
    %v5685 = vadd.f32 %v258, %v5684
    %v5686 = vpop.f32.mrf.mxu0
    %5687 = vmatprep.mubr.bf16.mxu0 0
    %5688 = vmatmul.mubr.bf16.gmra.mxu0 %v5612
    %v5689 = vpop.f32.mrf.mxu0
    %v5690 = vadd.f32 %v258, %v5689
    %v5691 = vpop.f32.mrf.mxu0
    %v5692 = vpop.f32.mrf.mxu0
    %v5693 = vadd.f32 %v258, %v5692
    %v5694 = vpop.f32.mrf.mxu0
    %5695 = vmatprep.mubr.bf16.mxu0 0
    %5696 = vmatmul.mubr.bf16.gmra.mxu0 %v5615
    %v5697 = vpop.f32.mrf.mxu0
    %v5698 = vadd.f32 %v258, %v5697
    %v5699 = vpop.f32.mrf.mxu0
    %v5700 = vpop.f32.mrf.mxu0
    %v5701 = vadd.f32 %v258, %v5700
    %v5702 = vpop.f32.mrf.mxu0
    %5703 = vmatprep.mubr.bf16.mxu0 0
    %5704 = vmatmul.mubr.bf16.gmra.mxu0 %v5618
    %v5705 = vpop.f32.mrf.mxu0
    %v5706 = vadd.f32 %v258, %v5705
    %v5707 = vpop.f32.mrf.mxu0
    %v5708 = vpop.f32.mrf.mxu0
    %v5709 = vadd.f32 %v258, %v5708
    %v5710 = vpop.f32.mrf.mxu0
    %5711 = vmatprep.mubr.bf16.mxu0 0
    %5712 = vmatmul.mubr.bf16.gmra.mxu0 %v5621
    %v5713 = vpop.f32.mrf.mxu0
    %v5714 = vadd.f32 %v258, %v5713
    %v5715 = vpop.f32.mrf.mxu0
    %v5716 = vpop.f32.mrf.mxu0
    %v5717 = vadd.f32 %v258, %v5716
    %v5718 = vpop.f32.mrf.mxu0
    %5719 = vdwg.mxu0
    %v5720 = vmax.f32 %v5658, 0.0
    %v5721 = vmax.f32 %v5661, 0.0
    %v5722 = vmax.f32 %v5666, 0.0
    %v5723 = vmax.f32 %v5669, 0.0
    %v5724 = vmax.f32 %v5674, 0.0
    %v5725 = vmax.f32 %v5677, 0.0
    %v5726 = vmax.f32 %v5682, 0.0
    %v5727 = vmax.f32 %v5685, 0.0
    %v5728 = vmax.f32 %v5690, 0.0
    %v5729 = vmax.f32 %v5693, 0.0
    %v5730 = vmax.f32 %v5698, 0.0
    %v5731 = vmax.f32 %v5701, 0.0
    %v5732 = vmax.f32 %v5706, 0.0
    %v5733 = vmax.f32 %v5709, 0.0
    %v5734 = vmax.f32 %v5714, 0.0
    %v5735 = vmax.f32 %v5717, 0.0
    %v5736 = vpack.c.bf16 %v5721, %v5720
    %v5737 = vpack.c.bf16 %v5723, %v5722
    %v5738 = vpack.c.bf16 %v5725, %v5724
    %v5739 = vpack.c.bf16 %v5727, %v5726
    %v5740 = vpack.c.bf16 %v5729, %v5728
    %v5741 = vpack.c.bf16 %v5731, %v5730
    %v5742 = vpack.c.bf16 %v5733, %v5732
    %v5743 = vpack.c.bf16 %v5735, %v5734
    %v5745 = vsel %vm284, %v5736, 0
    %v5748 = vsel %vm284, %v5737, 0
    %v5751 = vsel %vm284, %v5738, 0
    %v5754 = vsel %vm284, %v5739, 0
    %v5757 = vsel %vm284, %v5740, 0
    %v5760 = vsel %vm284, %v5741, 0
    %v5763 = vsel %vm284, %v5742, 0
    %v5766 = vsel %vm284, %v5743, 0
    %5768 = vmatprep.subr.bf16.mxu0 0
    %5769 = vmatpush1.bf16.xpose.msra.mxu0 %v5766
    %5770 = vmatprep.subr.bf16.mxu0 0
    %5771 = vmatpush1.bf16.xpose.msra.mxu0 %v5763
    %5772 = vmatprep.subr.bf16.mxu0 0
    %5773 = vmatpush1.bf16.xpose.msra.mxu0 %v5760
    %5774 = vmatprep.subr.bf16.mxu0 0
    %5775 = vmatpush1.bf16.xpose.msra.mxu0 %v5757
    %5776 = vmatprep.subr.bf16.mxu0 0
    %5777 = vmatpush1.bf16.xpose.msra.mxu0 %v5754
    %5778 = vmatprep.subr.bf16.mxu0 0
    %5779 = vmatpush1.bf16.xpose.msra.mxu0 %v5751
    %5780 = vmatprep.subr.bf16.mxu0 0
    %5781 = vmatpush1.bf16.xpose.msra.mxu0 %v5748
    %5782 = vmatprep.subr.bf16.mxu0 0
    %5783 = vmatpush1.bf16.xpose.msra.mxu0 %v5745
    %5784 = vmatprep.subr.bf16.mxu0 0
    %5785 = vmatpush2.bf16.xpose.msra.mxu0 0
    %5786 = vmatprep.subr.bf16.mxu0 0
    %5787 = vmatpush2.bf16.xpose.msra.mxu0 0
    %5788 = vmatprep.subr.bf16.mxu0 0
    %5789 = vmatpush2.bf16.xpose.msra.mxu0 0
    %5790 = vmatprep.subr.bf16.mxu0 0
    %5791 = vmatpush2.bf16.xpose.msra.mxu0 0
    %5792 = vmatprep.subr.bf16.mxu0 0
    %5793 = vmatpush2.bf16.xpose.msra.mxu0 0
    %5794 = vmatprep.subr.bf16.mxu0 0
    %5795 = vmatpush2.bf16.xpose.msra.mxu0 0
    %5796 = vmatprep.subr.bf16.mxu0 0
    %5797 = vmatpush2.bf16.xpose.msra.mxu0 0
    %5798 = vmatprep.subr.bf16.mxu0 0
    %5799 = vmatpush2.bf16.xpose.msra.mxu0 0
    %5800 = vmatprep.mubr.bf16.mxu0 0
    %5801 = vmatmul.mubr.bf16.gmra.mxu0 %v436
    %v5802 = vpop.f32.mrf.mxu0
    %v5803 = vadd.f32 %v433, %v5802
    %v5804 = vpop.f32.mrf.mxu0
    %v5805 = vpop.f32.mrf.mxu0
    %v5806 = vpop.f32.mrf.mxu0
    %5807 = vdwg.mxu0
    %5808 = vst [vmem:[#allocation2 + $0x1c] sm:$0x3] %v5803
    %v5809 = vld [vmem:[%s0 + $0x780] sm:$0xff]
    %v5810 = vld [vmem:[%s0 + $0x788] sm:$0xff]
    %v5811 = vld [vmem:[%s0 + $0x790] sm:$0xff]
    %v5812 = vld [vmem:[%s0 + $0x798] sm:$0xff]
    %v5813 = vld [vmem:[%s0 + $0x7a0] sm:$0xff]
    %v5814 = vld [vmem:[%s0 + $0x7a8] sm:$0xff]
    %v5815 = vld [vmem:[%s0 + $0x7b0] sm:$0xff]
    %v5816 = vld [vmem:[%s0 + $0x7b8] sm:$0xff]
    %v5817 = vld [vmem:[%s0 + $0x7c0] sm:$0xff]
    %v5818 = vld [vmem:[%s0 + $0x7c8] sm:$0xff]
    %v5819 = vld [vmem:[%s0 + $0x7d0] sm:$0xff]
    %v5820 = vld [vmem:[%s0 + $0x7d8] sm:$0xff]
    %v5821 = vld [vmem:[%s0 + $0x7e0] sm:$0xff]
    %v5822 = vld [vmem:[%s0 + $0x7e8] sm:$0xff]
    %v5823 = vld [vmem:[%s0 + $0x7f0] sm:$0xff]
    %v5824 = vld [vmem:[%s0 + $0x7f8] sm:$0xff]
    %v5825 = vpack.c.bf16 %v5810, %v5809
    %v5826 = vpack.c.bf16 %v5812, %v5811
    %v5827 = vpack.c.bf16 %v5814, %v5813
    %v5828 = vpack.c.bf16 %v5816, %v5815
    %v5829 = vpack.c.bf16 %v5818, %v5817
    %v5830 = vpack.c.bf16 %v5820, %v5819
    %v5831 = vpack.c.bf16 %v5822, %v5821
    %v5832 = vpack.c.bf16 %v5824, %v5823
    %v5834 = vsel %vm101, %v5825, 0
    %v5837 = vsel %vm101, %v5826, 0
    %v5840 = vsel %vm101, %v5827, 0
    %v5843 = vsel %vm101, %v5828, 0
    %v5846 = vsel %vm101, %v5829, 0
    %v5849 = vsel %vm101, %v5830, 0
    %v5852 = vsel %vm101, %v5831, 0
    %v5855 = vsel %vm101, %v5832, 0
    %5857 = vmatprep.subr.bf16.mxu0 0
    %5858 = vmatpush1.bf16.msra.mxu0 0
    %5859 = vmatprep.subr.bf16.mxu0 0
    %5860 = vmatpush1.bf16.msra.mxu0 0
    %5861 = vmatprep.subr.bf16.mxu0 0
    %5862 = vmatpush1.bf16.msra.mxu0 0
    %5863 = vmatprep.subr.bf16.mxu0 0
    %5864 = vmatpush1.bf16.msra.mxu0 0
    %5865 = vmatprep.subr.bf16.mxu0 0
    %5866 = vmatpush1.bf16.msra.mxu0 %v131
    %5867 = vmatprep.subr.bf16.mxu0 0
    %5868 = vmatpush1.bf16.msra.mxu0 %v96
    %5869 = vmatprep.subr.bf16.mxu0 0
    %5870 = vmatpush1.bf16.msra.mxu0 %v95
    %5871 = vmatprep.subr.bf16.mxu0 0
    %5872 = vmatpush1.bf16.msra.mxu0 %v94
    %5873 = vmatprep.subr.bf16.mxu0 0
    %5874 = vmatpush2.bf16.msra.mxu0 0
    %5875 = vmatprep.subr.bf16.mxu0 0
    %5876 = vmatpush2.bf16.msra.mxu0 0
    %5877 = vmatprep.subr.bf16.mxu0 0
    %5878 = vmatpush2.bf16.msra.mxu0 0
    %5879 = vmatprep.subr.bf16.mxu0 0
    %5880 = vmatpush2.bf16.msra.mxu0 0
    %5881 = vmatprep.subr.bf16.mxu0 0
    %5882 = vmatpush2.bf16.msra.mxu0 0
    %5883 = vmatprep.subr.bf16.mxu0 0
    %5884 = vmatpush2.bf16.msra.mxu0 0
    %5885 = vmatprep.subr.bf16.mxu0 0
    %5886 = vmatpush2.bf16.msra.mxu0 0
    %5887 = vmatprep.subr.bf16.mxu0 0
    %5888 = vmatpush2.bf16.msra.mxu0 0
    %5889 = vmatprep.mubr.bf16.mxu0 0
    %5890 = vmatmul.mubr.bf16.gmra.mxu0 %v5834
    %v5891 = vpop.f32.mrf.mxu0
    %v5892 = vadd.f32 %v76, %v5891
    %v5893 = vpop.f32.mrf.mxu0
    %v5894 = vpop.f32.mrf.mxu0
    %v5895 = vadd.f32 %v76, %v5894
    %v5896 = vpop.f32.mrf.mxu0
    %5897 = vmatprep.mubr.bf16.mxu0 0
    %5898 = vmatmul.mubr.bf16.gmra.mxu0 %v5837
    %v5899 = vpop.f32.mrf.mxu0
    %v5900 = vadd.f32 %v76, %v5899
    %v5901 = vpop.f32.mrf.mxu0
    %v5902 = vpop.f32.mrf.mxu0
    %v5903 = vadd.f32 %v76, %v5902
    %v5904 = vpop.f32.mrf.mxu0
    %5905 = vmatprep.mubr.bf16.mxu0 0
    %5906 = vmatmul.mubr.bf16.gmra.mxu0 %v5840
    %v5907 = vpop.f32.mrf.mxu0
    %v5908 = vadd.f32 %v76, %v5907
    %v5909 = vpop.f32.mrf.mxu0
    %v5910 = vpop.f32.mrf.mxu0
    %v5911 = vadd.f32 %v76, %v5910
    %v5912 = vpop.f32.mrf.mxu0
    %5913 = vmatprep.mubr.bf16.mxu0 0
    %5914 = vmatmul.mubr.bf16.gmra.mxu0 %v5843
    %v5915 = vpop.f32.mrf.mxu0
    %v5916 = vadd.f32 %v76, %v5915
    %v5917 = vpop.f32.mrf.mxu0
    %v5918 = vpop.f32.mrf.mxu0
    %v5919 = vadd.f32 %v76, %v5918
    %v5920 = vpop.f32.mrf.mxu0
    %5921 = vmatprep.mubr.bf16.mxu0 0
    %5922 = vmatmul.mubr.bf16.gmra.mxu0 %v5846
    %v5923 = vpop.f32.mrf.mxu0
    %v5924 = vadd.f32 %v76, %v5923
    %v5925 = vpop.f32.mrf.mxu0
    %v5926 = vpop.f32.mrf.mxu0
    %v5927 = vadd.f32 %v76, %v5926
    %v5928 = vpop.f32.mrf.mxu0
    %5929 = vmatprep.mubr.bf16.mxu0 0
    %5930 = vmatmul.mubr.bf16.gmra.mxu0 %v5849
    %v5931 = vpop.f32.mrf.mxu0
    %v5932 = vadd.f32 %v76, %v5931
    %v5933 = vpop.f32.mrf.mxu0
    %v5934 = vpop.f32.mrf.mxu0
    %v5935 = vadd.f32 %v76, %v5934
    %v5936 = vpop.f32.mrf.mxu0
    %5937 = vmatprep.mubr.bf16.mxu0 0
    %5938 = vmatmul.mubr.bf16.gmra.mxu0 %v5852
    %v5939 = vpop.f32.mrf.mxu0
    %v5940 = vadd.f32 %v76, %v5939
    %v5941 = vpop.f32.mrf.mxu0
    %v5942 = vpop.f32.mrf.mxu0
    %v5943 = vadd.f32 %v76, %v5942
    %v5944 = vpop.f32.mrf.mxu0
    %5945 = vmatprep.mubr.bf16.mxu0 0
    %5946 = vmatmul.mubr.bf16.gmra.mxu0 %v5855
    %v5947 = vpop.f32.mrf.mxu0
    %v5948 = vadd.f32 %v76, %v5947
    %v5949 = vpop.f32.mrf.mxu0
    %v5950 = vpop.f32.mrf.mxu0
    %v5951 = vadd.f32 %v76, %v5950
    %v5952 = vpop.f32.mrf.mxu0
    %5953 = vdwg.mxu0
    %v5954 = vmax.f32 %v5892, 0.0
    %v5955 = vmax.f32 %v5895, 0.0
    %v5956 = vmax.f32 %v5900, 0.0
    %v5957 = vmax.f32 %v5903, 0.0
    %v5958 = vmax.f32 %v5908, 0.0
    %v5959 = vmax.f32 %v5911, 0.0
    %v5960 = vmax.f32 %v5916, 0.0
    %v5961 = vmax.f32 %v5919, 0.0
    %v5962 = vmax.f32 %v5924, 0.0
    %v5963 = vmax.f32 %v5927, 0.0
    %v5964 = vmax.f32 %v5932, 0.0
    %v5965 = vmax.f32 %v5935, 0.0
    %v5966 = vmax.f32 %v5940, 0.0
    %v5967 = vmax.f32 %v5943, 0.0
    %v5968 = vmax.f32 %v5948, 0.0
    %v5969 = vmax.f32 %v5951, 0.0
    %v5970 = vpack.c.bf16 %v5955, %v5954
    %v5971 = vpack.c.bf16 %v5957, %v5956
    %v5972 = vpack.c.bf16 %v5959, %v5958
    %v5973 = vpack.c.bf16 %v5961, %v5960
    %v5974 = vpack.c.bf16 %v5963, %v5962
    %v5975 = vpack.c.bf16 %v5965, %v5964
    %v5976 = vpack.c.bf16 %v5967, %v5966
    %v5977 = vpack.c.bf16 %v5969, %v5968
    %v5979 = vsel %vm284, %v5970, 0
    %v5982 = vsel %vm284, %v5971, 0
    %v5985 = vsel %vm284, %v5972, 0
    %v5988 = vsel %vm284, %v5973, 0
    %v5991 = vsel %vm284, %v5974, 0
    %v5994 = vsel %vm284, %v5975, 0
    %v5997 = vsel %vm284, %v5976, 0
    %v6000 = vsel %vm284, %v5977, 0
    %6002 = vmatprep.subr.bf16.mxu0 0
    %6003 = vmatpush1.bf16.msra.mxu0 0
    %6004 = vmatprep.subr.bf16.mxu0 0
    %6005 = vmatpush1.bf16.msra.mxu0 0
    %6006 = vmatprep.subr.bf16.mxu0 0
    %6007 = vmatpush1.bf16.msra.mxu0 0
    %6008 = vmatprep.subr.bf16.mxu0 0
    %6009 = vmatpush1.bf16.msra.mxu0 0
    %6010 = vmatprep.subr.bf16.mxu0 0
    %6011 = vmatpush1.bf16.msra.mxu0 %v279
    %6012 = vmatprep.subr.bf16.mxu0 0
    %6013 = vmatpush1.bf16.msra.mxu0 %v278
    %6014 = vmatprep.subr.bf16.mxu0 0
    %6015 = vmatpush1.bf16.msra.mxu0 %v277
    %6016 = vmatprep.subr.bf16.mxu0 0
    %6017 = vmatpush1.bf16.msra.mxu0 %v276
    %6018 = vmatprep.subr.bf16.mxu0 0
    %6019 = vmatpush2.bf16.msra.mxu0 0
    %6020 = vmatprep.subr.bf16.mxu0 0
    %6021 = vmatpush2.bf16.msra.mxu0 0
    %6022 = vmatprep.subr.bf16.mxu0 0
    %6023 = vmatpush2.bf16.msra.mxu0 0
    %6024 = vmatprep.subr.bf16.mxu0 0
    %6025 = vmatpush2.bf16.msra.mxu0 0
    %6026 = vmatprep.subr.bf16.mxu0 0
    %6027 = vmatpush2.bf16.msra.mxu0 0
    %6028 = vmatprep.subr.bf16.mxu0 0
    %6029 = vmatpush2.bf16.msra.mxu0 0
    %6030 = vmatprep.subr.bf16.mxu0 0
    %6031 = vmatpush2.bf16.msra.mxu0 0
    %6032 = vmatprep.subr.bf16.mxu0 0
    %6033 = vmatpush2.bf16.msra.mxu0 0
    %6034 = vmatprep.mubr.bf16.mxu0 0
    %6035 = vmatmul.mubr.bf16.gmra.mxu0 %v5979
    %v6036 = vpop.f32.mrf.mxu0
    %v6037 = vadd.f32 %v258, %v6036
    %v6038 = vpop.f32.mrf.mxu0
    %v6039 = vpop.f32.mrf.mxu0
    %v6040 = vadd.f32 %v258, %v6039
    %v6041 = vpop.f32.mrf.mxu0
    %6042 = vmatprep.mubr.bf16.mxu0 0
    %6043 = vmatmul.mubr.bf16.gmra.mxu0 %v5982
    %v6044 = vpop.f32.mrf.mxu0
    %v6045 = vadd.f32 %v258, %v6044
    %v6046 = vpop.f32.mrf.mxu0
    %v6047 = vpop.f32.mrf.mxu0
    %v6048 = vadd.f32 %v258, %v6047
    %v6049 = vpop.f32.mrf.mxu0
    %6050 = vmatprep.mubr.bf16.mxu0 0
    %6051 = vmatmul.mubr.bf16.gmra.mxu0 %v5985
    %v6052 = vpop.f32.mrf.mxu0
    %v6053 = vadd.f32 %v258, %v6052
    %v6054 = vpop.f32.mrf.mxu0
    %v6055 = vpop.f32.mrf.mxu0
    %v6056 = vadd.f32 %v258, %v6055
    %v6057 = vpop.f32.mrf.mxu0
    %6058 = vmatprep.mubr.bf16.mxu0 0
    %6059 = vmatmul.mubr.bf16.gmra.mxu0 %v5988
    %v6060 = vpop.f32.mrf.mxu0
    %v6061 = vadd.f32 %v258, %v6060
    %v6062 = vpop.f32.mrf.mxu0
    %v6063 = vpop.f32.mrf.mxu0
    %v6064 = vadd.f32 %v258, %v6063
    %v6065 = vpop.f32.mrf.mxu0
    %6066 = vmatprep.mubr.bf16.mxu0 0
    %6067 = vmatmul.mubr.bf16.gmra.mxu0 %v5991
    %v6068 = vpop.f32.mrf.mxu0
    %v6069 = vadd.f32 %v258, %v6068
    %v6070 = vpop.f32.mrf.mxu0
    %v6071 = vpop.f32.mrf.mxu0
    %v6072 = vadd.f32 %v258, %v6071
    %v6073 = vpop.f32.mrf.mxu0
    %6074 = vmatprep.mubr.bf16.mxu0 0
    %6075 = vmatmul.mubr.bf16.gmra.mxu0 %v5994
    %v6076 = vpop.f32.mrf.mxu0
    %v6077 = vadd.f32 %v258, %v6076
    %v6078 = vpop.f32.mrf.mxu0
    %v6079 = vpop.f32.mrf.mxu0
    %v6080 = vadd.f32 %v258, %v6079
    %v6081 = vpop.f32.mrf.mxu0
    %6082 = vmatprep.mubr.bf16.mxu0 0
    %6083 = vmatmul.mubr.bf16.gmra.mxu0 %v5997
    %v6084 = vpop.f32.mrf.mxu0
    %v6085 = vadd.f32 %v258, %v6084
    %v6086 = vpop.f32.mrf.mxu0
    %v6087 = vpop.f32.mrf.mxu0
    %v6088 = vadd.f32 %v258, %v6087
    %v6089 = vpop.f32.mrf.mxu0
    %6090 = vmatprep.mubr.bf16.mxu0 0
    %6091 = vmatmul.mubr.bf16.gmra.mxu0 %v6000
    %v6092 = vpop.f32.mrf.mxu0
    %v6093 = vadd.f32 %v258, %v6092
    %v6094 = vpop.f32.mrf.mxu0
    %v6095 = vpop.f32.mrf.mxu0
    %v6096 = vadd.f32 %v258, %v6095
    %v6097 = vpop.f32.mrf.mxu0
    %6098 = vdwg.mxu0
    %v6099 = vmax.f32 %v6037, 0.0
    %v6100 = vmax.f32 %v6040, 0.0
    %v6101 = vmax.f32 %v6045, 0.0
    %v6102 = vmax.f32 %v6048, 0.0
    %v6103 = vmax.f32 %v6053, 0.0
    %v6104 = vmax.f32 %v6056, 0.0
    %v6105 = vmax.f32 %v6061, 0.0
    %v6106 = vmax.f32 %v6064, 0.0
    %v6107 = vmax.f32 %v6069, 0.0
    %v6108 = vmax.f32 %v6072, 0.0
    %v6109 = vmax.f32 %v6077, 0.0
    %v6110 = vmax.f32 %v6080, 0.0
    %v6111 = vmax.f32 %v6085, 0.0
    %v6112 = vmax.f32 %v6088, 0.0
    %v6113 = vmax.f32 %v6093, 0.0
    %v6114 = vmax.f32 %v6096, 0.0
    %v6115 = vpack.c.bf16 %v6100, %v6099
    %v6116 = vpack.c.bf16 %v6102, %v6101
    %v6117 = vpack.c.bf16 %v6104, %v6103
    %v6118 = vpack.c.bf16 %v6106, %v6105
    %v6119 = vpack.c.bf16 %v6108, %v6107
    %v6120 = vpack.c.bf16 %v6110, %v6109
    %v6121 = vpack.c.bf16 %v6112, %v6111
    %v6122 = vpack.c.bf16 %v6114, %v6113
    %v6124 = vsel %vm284, %v6115, 0
    %v6127 = vsel %vm284, %v6116, 0
    %v6130 = vsel %vm284, %v6117, 0
    %v6133 = vsel %vm284, %v6118, 0
    %v6136 = vsel %vm284, %v6119, 0
    %v6139 = vsel %vm284, %v6120, 0
    %v6142 = vsel %vm284, %v6121, 0
    %v6145 = vsel %vm284, %v6122, 0
    %6147 = vmatprep.subr.bf16.mxu0 0
    %6148 = vmatpush1.bf16.xpose.msra.mxu0 %v6145
    %6149 = vmatprep.subr.bf16.mxu0 0
    %6150 = vmatpush1.bf16.xpose.msra.mxu0 %v6142
    %6151 = vmatprep.subr.bf16.mxu0 0
    %6152 = vmatpush1.bf16.xpose.msra.mxu0 %v6139
    %6153 = vmatprep.subr.bf16.mxu0 0
    %6154 = vmatpush1.bf16.xpose.msra.mxu0 %v6136
    %6155 = vmatprep.subr.bf16.mxu0 0
    %6156 = vmatpush1.bf16.xpose.msra.mxu0 %v6133
    %6157 = vmatprep.subr.bf16.mxu0 0
    %6158 = vmatpush1.bf16.xpose.msra.mxu0 %v6130
    %6159 = vmatprep.subr.bf16.mxu0 0
    %6160 = vmatpush1.bf16.xpose.msra.mxu0 %v6127
    %6161 = vmatprep.subr.bf16.mxu0 0
    %6162 = vmatpush1.bf16.xpose.msra.mxu0 %v6124
    %6163 = vmatprep.subr.bf16.mxu0 0
    %6164 = vmatpush2.bf16.xpose.msra.mxu0 0
    %6165 = vmatprep.subr.bf16.mxu0 0
    %6166 = vmatpush2.bf16.xpose.msra.mxu0 0
    %6167 = vmatprep.subr.bf16.mxu0 0
    %6168 = vmatpush2.bf16.xpose.msra.mxu0 0
    %6169 = vmatprep.subr.bf16.mxu0 0
    %6170 = vmatpush2.bf16.xpose.msra.mxu0 0
    %6171 = vmatprep.subr.bf16.mxu0 0
    %6172 = vmatpush2.bf16.xpose.msra.mxu0 0
    %6173 = vmatprep.subr.bf16.mxu0 0
    %6174 = vmatpush2.bf16.xpose.msra.mxu0 0
    %6175 = vmatprep.subr.bf16.mxu0 0
    %6176 = vmatpush2.bf16.xpose.msra.mxu0 0
    %6177 = vmatprep.subr.bf16.mxu0 0
    %6178 = vmatpush2.bf16.xpose.msra.mxu0 0
    %6179 = vmatprep.mubr.bf16.mxu0 0
    %6180 = vmatmul.mubr.bf16.gmra.mxu0 %v436
    %v6181 = vpop.f32.mrf.mxu0
    %v6182 = vadd.f32 %v433, %v6181
    %v6183 = vpop.f32.mrf.mxu0
    %v6184 = vpop.f32.mrf.mxu0
    %v6185 = vpop.f32.mrf.mxu0
    %6186 = vdwg.mxu0
    %6187 = vst [vmem:[#allocation2 + $0x1e] sm:$0x3] %v6182
    // Predicated region
    $region30: #{tpu_custom_call.1} parent=1 // pred_check
      _
    $region31: #{tpu_custom_call.1} parent=1 // pred_check_branch
      %6189 = sbr.rel (0) target = $region33
    $region32: #{tpu_custom_call.1} parent=1 // pred_region
      %s6191 = ssub.s32 512, 512
      %6192 = vsyncadd [#allocation3], %s6191
      %s6194 = sshll.u32 [#allocation2], 4
      %s6195 = int_to_ptr.vmem [resolvable:$true] %s6194
      %6197 = dma.vmem_to_hbm [thread:$0]  %s6195, 512, %s7, [#allocation3]
    $region33: #{tpu_custom_call.1} parent=1 // pred_fallthru
      _
    // Predicated region
    $region34: #{tpu_custom_call.1} parent=1 // pred_check
      _
    $region35: #{tpu_custom_call.1} parent=1 // pred_check_branch
      %6199 = sbr.rel (0) target = $region37
    $region36: #{tpu_custom_call.1} parent=1 // pred_region
      %6200 = dma.done [#allocation3], 512
    $region37: #{tpu_custom_call.1} parent=1 // pred_fallthru
      _
    %6201 = vsyncpa [#allocation3], 1

</llo_original>
